<compile_context>
chip_gen: v5e
topology: v5e:2x2
jax: 0.10.0
libtpu: 0.0.40
codegen_flags: <defaults>
</compile_context>

<pallas_src>
import jax
import jax.numpy as jnp
from jax.experimental import pallas as pl
from jax.experimental.pallas import tpu as pltpu

# ---------------- small shapes consistent with the module -------------------
B = 2            # outer batch
L = 20           # wordpiece sequence length
H = 32           # config.hidden_size
T = 8            # max_token_len (word tokens)
S = 4            # seq_num (argument sequences per example)
R = 8            # rel_label (= per-direction LSTM hidden = num CRF tags)
A = 5            # arg_seq feature dim (pos_result == False)
D = H + A        # LSTM input feature dim (bert_noCLS: hidden_size + 5)
G = 4 * R        # per-direction LSTM gate dim
R2 = 2 * R       # fused [fwd | bwd] hidden width
G2 = 2 * G       # fused gate width: per-gate [fwd|bwd] blocks, gate order [i,f,o,g]
BS = B * S       # folded inner batch (sublane dim inside the kernel)
VOCAB = 64


# ---------------- Pallas kernel: fused 2-layer bi-LSTM + FNN + softmax ------
def _bilstm_fnn_kernel(x_ref, mc_ref,
                       wih0_ref, whh0_ref, b0_ref,
                       wih1_ref, whh1_ref, b1_ref,
                       wfnn_ref, bfnn_ref,
                       out_ref, pre_scr):
    # Column-selection masks (hoisted): lanes [0:R) of every per-gate block are fwd.
    colG = jax.lax.broadcasted_iota(jnp.int32, (1, G2), 1)
    is_fwd_G = (colG % R2) < R                      # (1, 2G) bool
    colR = jax.lax.broadcasted_iota(jnp.int32, (1, R2), 1)
    is_fwd_R = colR < R                             # (1, 2R) bool

    def rows(k):
        return pl.ds(k * BS, BS)

    def run_layer(whh):
        # Fused fwd/bwd serial recurrence. Step k: fwd at time k (pre/mask row k),
        # bwd at time T-1-k (pre/mask row T-1-k). whh is block-structured so both
        # directions share one (BS,2R)x(2R,2G) dot per step.
        h = jnp.zeros((BS, R2), jnp.float32)
        c = jnp.zeros((BS, R2), jnp.float32)
        outs = []
        for k in range(T):                          # static -> fully unrolled
            kb = T - 1 - k
            pre = jnp.where(is_fwd_G, pre_scr[rows(k), :], pre_scr[rows(kb), :])
            gates = pre + jnp.dot(h.astype(jnp.bfloat16), whh,
                                  preferred_element_type=jnp.float32)
            sig = jax.nn.sigmoid(gates[:, :3 * R2])          # [i|f|o] contiguous
            i_g = sig[:, 0:R2]
            f_g = sig[:, R2:2 * R2]
            o_g = sig[:, 2 * R2:3 * R2]
            g_g = jnp.tanh(gates[:, 3 * R2:])                # g gate only
            c_new = f_g * c + i_g * g_g
            h_new = o_g * jnp.tanh(c_new)
            m = jnp.where(is_fwd_R, mc_ref[rows(k), :], mc_ref[rows(kb), :])
            out = m * h_new                                  # padded steps -> 0
            h = out + (1.0 - m) * h                          # state frozen when padded
            c = m * c_new + (1.0 - m) * c
            outs.append(out)                                 # stays in registers
        return outs

    # ---- layer 0 : one hoisted input->gate matmul over ALL timesteps -----------
    pre_scr[...] = (jnp.dot(x_ref[...], wih0_ref[...],
                            preferred_element_type=jnp.float32) + b0_ref[...])
    outs0 = run_layer(whh0_ref[...])

    # ---- layer 1 : input row t is [fwd0(t) | bwd0(t)], assembled in registers ---
    # TODO(synk): inter-layer LSTM dropout (p=0.2) and pre-FNN dropout (p=0.1) are
    # inference no-ops.
    l1_in = jnp.concatenate(
        [jnp.where(is_fwd_R, outs0[t], outs0[T - 1 - t]) for t in range(T)], axis=0)
    pre_scr[...] = (jnp.dot(l1_in.astype(jnp.bfloat16), wih1_ref[...],
                            preferred_element_type=jnp.float32) + b1_ref[...])
    outs1 = run_layer(whh1_ref[...])

    # ---- FNN(2R -> R) + softmax per timestep; pack lane-dense (BS, T*2R) -------
    wfnn = wfnn_ref[...]
    bfnn = bfnn_ref[...]
    pieces = []
    for t in range(T):
        h1_t = jnp.where(is_fwd_R, outs1[t], outs1[T - 1 - t])          # (BS, 2R)
        logit = jnp.dot(h1_t.astype(jnp.bfloat16), wfnn,
                        preferred_element_type=jnp.float32) + bfnn       # (BS, R)
        z = logit - jnp.max(logit, axis=-1, keepdims=True)
        e = jnp.exp(z)
        prob = e * pl.reciprocal(jnp.sum(e, axis=-1, keepdims=True), approx=True)
        pieces += [logit, prob]
    out_ref[...] = jnp.concatenate(pieces, axis=-1)                      # (8, 128)


def bilstm_fnn(final_input, crf_mask, fused):
    # final_input: (B, S, T, D); crf_mask: (B, S, T) in {0,1}
    # Fold B into the inner-batch axis and go time-major: (T*BS, ...) rows.
    xt = jnp.transpose(final_input, (2, 0, 1, 3)).reshape(T * BS, D).astype(jnp.bfloat16)
    mt = jnp.transpose(crf_mask.astype(jnp.float32), (2, 0, 1)).reshape(T * BS, 1)

    args = [xt, mt,
            fused["wih0"], fused["whh0"], fused["b0"],
            fused["wih1"], fused["whh1"], fused["b1"],
            fused["wfnn"], fused["bfnn"]]

    packed = pl.pallas_call(
        _bilstm_fnn_kernel,
        out_shape=jax.ShapeDtypeStruct((BS, T * R2), jnp.float32),   # (8, 128) lane-dense
        scratch_shapes=[pltpu.VMEM((T * BS, G2), jnp.float32)],      # pre-gates (reused by both layers)
    )(*args)

    lp = packed.reshape(B, S, T, 2, R)        # cols per t: [logits(R) | probs(R)]
    return lp[..., 0, :], lp[..., 1, :]       # logits, probs : (B, S, T, R)


# ---------------- weight re-packing into the fused kernel layout ------------
def _reorder_ifog(w):
    # torch gate order [i, f, g, o] -> fused order [i, f, o, g]
    return jnp.concatenate([w[..., 0 * R:1 * R], w[..., 1 * R:2 * R],
                            w[..., 3 * R:4 * R], w[..., 2 * R:3 * R]], axis=-1)


def _interleave_dirs(wf, wb):
    # per-gate [fwd(R) | bwd(R)] column blocks -> (*, 2G)
    blocks = []
    for gi in range(4):
        blocks += [wf[..., gi * R:(gi + 1) * R], wb[..., gi * R:(gi + 1) * R]]
    return jnp.concatenate(blocks, axis=-1)


def _fuse_ih(wf, wb):
    # dense: both directions read the SAME x row; direction routing is done in the
    # kernel by reading the bwd pre-gate columns from row T-1-k (no zero padding).
    return _interleave_dirs(_reorder_ifog(wf), _reorder_ifog(wb))


def _fuse_hh(wf, wb):
    # block-structured over [h_f | h_b]: fwd gate columns only see h_f rows.
    z = jnp.zeros_like(wf)
    top = _interleave_dirs(_reorder_ifog(wf), z)
    bot = _interleave_dirs(z, _reorder_ifog(wb))
    return jnp.concatenate([top, bot], axis=0)               # (2R, 2G)


def fuse_params(p):
    bf16 = lambda w: w.astype(jnp.bfloat16)
    return {
        "wih0": bf16(_fuse_ih(p["wih0f"], p["wih0b"])),      # (D, 2G)  bf16
        "whh0": bf16(_fuse_hh(p["whh0f"], p["whh0b"])),      # (2R, 2G) bf16
        "b0": _interleave_dirs(_reorder_ifog(p["b0f"]), _reorder_ifog(p["b0b"])),  # (1, 2G) f32
        "wih1": bf16(_fuse_ih(p["wih1f"], p["wih1b"])),      # (2R, 2G) bf16
        "whh1": bf16(_fuse_hh(p["whh1f"], p["whh1b"])),      # (2R, 2G) bf16
        "b1": _interleave_dirs(_reorder_ifog(p["b1f"]), _reorder_ifog(p["b1b"])),  # (1, 2G) f32
        "wfnn": bf16(p["wfnn"]),                             # (2R, R)  bf16
        "bfnn": p["bfnn"],                                   # (1, R)   f32
    }


# ---------------- glue: toy encoder + bert_noCLS.get_input ------------------
def toy_bert_encoder(input_id, input_mask, params):
    # TODO(synk): the pretrained BERT (`self.model`) is an external module; it is
    # substituted with a deterministic embedding + dense + tanh encoder in plain
    # XLA (a 40x32 matmul is below the cost of a Pallas custom-call boundary).
    emb = params["emb"][input_id]                                        # (B, L, H)
    h = jnp.tanh(emb @ params["enc_w"] + params["enc_b"])
    return h * input_mask[..., None].astype(jnp.float32)                 # * input_mask


def get_input(input_id, input_mask, token_spans, arg_seq, params):
    # bert_noCLS.get_input: span max-pool per token, broadcast over seq_num,
    # concat the 5 arg_seq features (pos_result == False) -> (B, S, T, H+5).
    bert_output = toy_bert_encoder(input_id, input_mask, params)
    pos = jnp.arange(L)[None, :]
    span_mask = (pos >= token_spans[:, :1]) & (pos <= token_spans[:, 1:2])   # (T, L)
    neg = jnp.finfo(jnp.float32).min                                         # finite sentinel
    masked = jnp.where(span_mask[None, :, :, None], bert_output[:, None, :, :], neg)
    token_input = jnp.max(masked, axis=2)                                    # (B, T, H)
    token_input = jnp.where(jnp.any(span_mask, axis=1)[None, :, None], token_input, 0.0)
    new_temp = jnp.broadcast_to(token_input[:, None, :, :], (B, S, T, H))
    return jnp.concatenate([new_temp, arg_seq.astype(jnp.float32)], axis=-1)  # (B,S,T,D)


# ---------------- glue: CRF Viterbi decode (torchcrf semantics) -------------
def crf_decode(emissions, mask, start_trans, end_trans, trans):
    # TODO(synk): CRF decode has data-dependent backtracking; implemented in plain
    # JAX (vmapped over the batch on device).
    Sn, Tn, _ = emissions.shape
    maskf = mask.astype(jnp.float32)
    score = start_trans[None, :] + emissions[:, 0, :]                    # (S, R)
    history = []
    for t in range(1, Tn):
        cand = score[:, :, None] + trans[None, :, :]                     # (S, Rprev, Rnext)
        best_prev = jnp.argmax(cand, axis=1)                             # (S, R)
        best_score = jnp.max(cand, axis=1) + emissions[:, t, :]
        mt = maskf[:, t][:, None]
        score = jnp.where(mt > 0, best_score, score)
        history.append(best_prev)
    score = score + end_trans[None, :]
    last_tag = jnp.argmax(score, axis=-1).astype(jnp.int32)              # (S,)
    lengths = mask.astype(jnp.int32).sum(axis=1)                         # (S,)
    last_idx = jnp.maximum(lengths - 1, 0)                               # guard empty seq
    tags = jnp.zeros((Sn, Tn), jnp.int32)
    tags = tags.at[jnp.arange(Sn), last_idx].set(last_tag)
    cur = last_tag
    for t in range(Tn - 2, -1, -1):
        prev_tag = jnp.take_along_axis(history[t], cur[:, None], axis=1)[:, 0].astype(jnp.int32)
        within = t < last_idx
        tags = tags.at[:, t].set(jnp.where(within, prev_tag, tags[:, t]))
        cur = jnp.where(within, prev_tag, cur)
    return tags, lengths


# ---------------- full forward (rel_tags=None branch) -----------------------
def forward_device(input_id, input_mask, token_spans, arg_seq, crf_mask, params, fused):
    final_input = get_input(input_id, input_mask, token_spans, arg_seq, params)
    logits, probs = bilstm_fnn(final_input, crf_mask, fused)             # (B,S,T,R) each
    tags, lengths = jax.vmap(crf_decode, in_axes=(0, 0, None, None, None))(
        logits, crf_mask.astype(bool),
        params["crf_start"], params["crf_end"], params["crf_trans"])
    return probs, tags, lengths


_forward_device = jax.jit(forward_device)


def forward(input_id, input_mask, token_spans, arg_seq, crf_mask, seq_len, params, fused):
    # TODO(synk): the rel_tags != None CRF log-likelihood loss branch is not implemented.
    probs, tags, lengths = _forward_device(input_id, input_mask, token_spans,
                                           arg_seq, crf_mask, params, fused)
    tags_np, lengths_np = jax.device_get((tags, lengths))                # one host sync
    result, out_logits = [], []
    for i in range(B):
        n = int(seq_len[i])
        decoded = [tags_np[i, s, :int(lengths_np[i, s])].tolist() for s in range(S)][:n]
        result.append(decoded)
        out_logits.append(probs[i, :n])                                  # softmax, sliced to seq_len
    return result, out_logits


# ---------------- deterministic parameter init -------------------------------
def init_params(key):
    keys = jax.random.split(key, 20)
    klim = 1.0 / jnp.sqrt(jnp.float32(R))

    def u(k, shape):
        return jax.random.uniform(k, shape, jnp.float32, -klim, klim)

    p = {}
    p["emb"] = jax.random.normal(keys[0], (VOCAB, H), jnp.float32) * 0.1
    p["enc_w"] = jax.random.normal(keys[1], (H, H), jnp.float32) / jnp.sqrt(jnp.float32(H))
    p["enc_b"] = jnp.zeros((H,), jnp.float32)
    # LSTM weights stored pre-transposed as (in_features, 4R), torch gate order
    # [i, f, g, o]; bias = b_ih + b_hh folded into one (1, 4R) row.
    dims = {"0f": D, "0b": D, "1f": 2 * R, "1b": 2 * R}
    i = 2
    for name, din in dims.items():
        p["wih" + name] = u(keys[i], (din, G)); i += 1
        p["whh" + name] = u(keys[i], (R, G)); i += 1
        p["b" + name] = u(keys[i], (1, G)); i += 1
    p["wfnn"] = u(keys[i], (2 * R, R)); i += 1            # Linear(2R, R), transposed
    p["bfnn"] = u(keys[i], (1, R)); i += 1
    p["crf_start"] = jax.random.uniform(keys[i], (R,), jnp.float32, -0.1, 0.1); i += 1
    p["crf_end"] = jax.random.uniform(keys[i], (R,), jnp.float32, -0.1, 0.1); i += 1
    p["crf_trans"] = jax.random.uniform(keys[i], (R, R), jnp.float32, -0.1, 0.1); i += 1
    return p


if __name__ == "__main__":
    key = jax.random.PRNGKey(0)
    kp, k1, k2 = jax.random.split(key, 3)
    params = init_params(kp)
    fused = fuse_params(params)

    input_id = jax.random.randint(k1, (B, L), 0, VOCAB, dtype=jnp.int32)
    wp_valid = jnp.array([18, 15], dtype=jnp.int32)
    input_mask = (jnp.arange(L)[None, :] < wp_valid[:, None]).astype(jnp.float32)
    # token_map: token j covers wordpieces [1+2j, 1+2j (+1 if j odd)]
    starts = 1 + 2 * jnp.arange(T)
    ends = starts + (jnp.arange(T) % 2)
    token_spans = jnp.stack([starts, ends], axis=-1).astype(jnp.int32)   # (T, 2)
    arg_seq = jax.random.normal(k2, (B, S, T, A), jnp.float32)
    # crf_mask: left-contiguous validity per (example, arg-seq)
    lens = jnp.array([[8, 6, 5, 3], [7, 7, 4, 2]], dtype=jnp.int32)      # (B, S)
    crf_mask = (jnp.arange(T)[None, None, :] < lens[:, :, None]).astype(jnp.int32)
    seq_len = [4, 3]

    result, out_logits = forward(input_id, input_mask, token_spans, arg_seq,
                                 crf_mask, seq_len, params, fused)
    for x in out_logits:
        jax.block_until_ready(x)
    print("KERNEL_OK")
</pallas_src>

<mosaic_0001>
module attributes {stable_mosaic.version = 11 : i64} {
  func.func @_bilstm_fnn_kernel(%arg0: memref<64x37xbf16, #tpu.memory_space<vmem>>, %arg1: memref<64x1xf32, #tpu.memory_space<vmem>>, %arg2: memref<37x64xbf16, #tpu.memory_space<vmem>>, %arg3: memref<16x64xbf16, #tpu.memory_space<vmem>>, %arg4: memref<1x64xf32, #tpu.memory_space<vmem>>, %arg5: memref<16x64xbf16, #tpu.memory_space<vmem>>, %arg6: memref<16x64xbf16, #tpu.memory_space<vmem>>, %arg7: memref<1x64xf32, #tpu.memory_space<vmem>>, %arg8: memref<16x8xbf16, #tpu.memory_space<vmem>>, %arg9: memref<1x8xf32, #tpu.memory_space<vmem>>, %arg10: memref<8x128xf32, #tpu.memory_space<vmem>>, %arg11: memref<64x64xf32, #tpu.memory_space<vmem>>) attributes {dimension_semantics = [], scalar_prefetch = 0 : i64, scratch_operands = 1 : i64, tpu.core_type = #tpu.core_type<tc>} {
    %0 = tpu.iota {dimensions = array<i32: 1>} : vector<1x64xi32>
    %c16_i32 = arith.constant 16 : i32
    %c0_i32 = arith.constant 0 : i32
    %1 = arith.cmpi eq, %c16_i32, %c0_i32 : i32
    %c1_i32 = arith.constant 1 : i32
    %2 = arith.select %1, %c1_i32, %c16_i32 : i32
    %3 = vector.broadcast %2 : i32 to vector<1x64xi32>
    %4 = arith.remsi %0, %3 : vector<1x64xi32>
    %c0_i32_0 = arith.constant 0 : i32
    %5 = vector.broadcast %c0_i32_0 : i32 to vector<1x64xi32>
    %6 = arith.cmpi ne, %4, %5 : vector<1x64xi32>
    %c0_i32_1 = arith.constant 0 : i32
    %7 = vector.broadcast %c0_i32_1 : i32 to vector<1x64xi32>
    %8 = arith.cmpi slt, %4, %7 : vector<1x64xi32>
    %c0_i32_2 = arith.constant 0 : i32
    %9 = arith.cmpi slt, %2, %c0_i32_2 : i32
    %10 = vector.broadcast %9 : i1 to vector<1x64xi1>
    %11 = vector.broadcast %10 : vector<1x64xi1> to vector<1x64xi1>
    %12 = arith.xori %8, %11 : vector<1x64xi1>
    %13 = arith.andi %12, %6 : vector<1x64xi1>
    %14 = vector.broadcast %2 : i32 to vector<1x64xi32>
    %15 = arith.addi %4, %14 : vector<1x64xi32>
    %16 = arith.select %13, %15, %4 : vector<1x64xi1>, vector<1x64xi32>
    %c8_i32 = arith.constant 8 : i32
    %17 = vector.broadcast %c8_i32 : i32 to vector<1x64xi32>
    %18 = arith.cmpi slt, %16, %17 : vector<1x64xi32>
    %19 = tpu.iota {dimensions = array<i32: 1>} : vector<1x16xi32>
    %c8_i32_3 = arith.constant 8 : i32
    %20 = vector.broadcast %c8_i32_3 : i32 to vector<1x16xi32>
    %21 = arith.cmpi slt, %19, %20 : vector<1x16xi32>
    %c0 = arith.constant 0 : index
    %c0_4 = arith.constant 0 : index
    %22 = vector.load %arg0[%c0, %c0_4] : memref<64x37xbf16, #tpu.memory_space<vmem>>, vector<64x37xbf16>
    %c0_5 = arith.constant 0 : index
    %c0_6 = arith.constant 0 : index
    %23 = vector.load %arg2[%c0_5, %c0_6] : memref<37x64xbf16, #tpu.memory_space<vmem>>, vector<37x64xbf16>
    %cst = arith.constant dense<0.000000e+00> : vector<64x64xf32>
    %24 = tpu.matmul %22, %23, %cst {dimension_numbers = #tpu.dot_dimension_numbers<[1], [0], [0], [1], [0, 0, 1, 1], [], []>} : vector<64x37xbf16>, vector<37x64xbf16>, vector<64x64xf32> -> vector<64x64xf32>
    %c0_7 = arith.constant 0 : index
    %c0_8 = arith.constant 0 : index
    %25 = vector.load %arg4[%c0_7, %c0_8] : memref<1x64xf32, #tpu.memory_space<vmem>>, vector<1x64xf32>
    %26 = vector.broadcast %25 : vector<1x64xf32> to vector<64x64xf32>
    %27 = arith.addf %24, %26 : vector<64x64xf32>
    %c0_9 = arith.constant 0 : index
    %c0_10 = arith.constant 0 : index
    %28 = vector.load %arg11[%c0_9, %c0_10] : memref<64x64xf32, #tpu.memory_space<vmem>>, vector<64x64xf32>
    tpu.vector_store %arg11[%c0_9, %c0_10], %27 {strides = array<i32>} : memref<64x64xf32, #tpu.memory_space<vmem>>, vector<64x64xf32>,
    %c0_11 = arith.constant 0 : index
    %c0_12 = arith.constant 0 : index
    %29 = vector.load %arg3[%c0_11, %c0_12] : memref<16x64xbf16, #tpu.memory_space<vmem>>, vector<16x64xbf16>
    %cst_13 = arith.constant 0.000000e+00 : f32
    %30 = vector.broadcast %cst_13 : f32 to vector<8x16xf32>
    %cst_14 = arith.constant 0.000000e+00 : f32
    %31 = vector.broadcast %cst_14 : f32 to vector<8x16xf32>
    %c0_15 = arith.constant 0 : index
    %c0_16 = arith.constant 0 : index
    %32 = vector.load %arg11[%c0_15, %c0_16] : memref<64x64xf32, #tpu.memory_space<vmem>>, vector<8x64xf32>
    %c56 = arith.constant 56 : index
    %c0_17 = arith.constant 0 : index
    %33 = vector.load %arg11[%c56, %c0_17] : memref<64x64xf32, #tpu.memory_space<vmem>>, vector<8x64xf32>
    %34 = vector.shape_cast %18 : vector<1x64xi1> to vector<1x64xi1>
    %35 = vector.broadcast %34 : vector<1x64xi1> to vector<8x64xi1>
    %36 = arith.select %35, %32, %33 : vector<8x64xi1>, vector<8x64xf32>
    %37 = arith.truncf %30 : vector<8x16xf32> to vector<8x16xbf16>
    %cst_18 = arith.constant dense<0.000000e+00> : vector<8x64xf32>
    %38 = tpu.matmul %37, %29, %cst_18 {dimension_numbers = #tpu.dot_dimension_numbers<[1], [0], [0], [1], [0, 0, 1, 1], [], []>} : vector<8x16xbf16>, vector<16x64xbf16>, vector<8x64xf32> -> vector<8x64xf32>
    %39 = arith.addf %36, %38 : vector<8x64xf32>
    %40 = vector.extract_strided_slice %39 {offsets = [0, 0], sizes = [8, 48], strides = [1, 1]} : vector<8x64xf32> to vector<8x48xf32>
    %41 = arith.negf %40 : vector<8x48xf32>
    %42 = math.exp %41 : vector<8x48xf32>
    %cst_19 = arith.constant 1.000000e+00 : f32
    %43 = vector.broadcast %cst_19 : f32 to vector<8x48xf32>
    %44 = arith.addf %43, %42 : vector<8x48xf32>
    %45 = arith.divf %43, %44 : vector<8x48xf32>
    %46 = vector.extract_strided_slice %45 {offsets = [0, 0], sizes = [8, 16], strides = [1, 1]} : vector<8x48xf32> to vector<8x16xf32>
    %47 = vector.extract_strided_slice %45 {offsets = [0, 16], sizes = [8, 16], strides = [1, 1]} : vector<8x48xf32> to vector<8x16xf32>
    %48 = vector.extract_strided_slice %45 {offsets = [0, 32], sizes = [8, 16], strides = [1, 1]} : vector<8x48xf32> to vector<8x16xf32>
    %49 = vector.extract_strided_slice %39 {offsets = [0, 48], sizes = [8, 16], strides = [1, 1]} : vector<8x64xf32> to vector<8x16xf32>
    %50 = math.tanh %49 : vector<8x16xf32>
    %51 = arith.mulf %47, %31 : vector<8x16xf32>
    %52 = arith.mulf %46, %50 : vector<8x16xf32>
    %53 = arith.addf %51, %52 : vector<8x16xf32>
    %54 = math.tanh %53 : vector<8x16xf32>
    %55 = arith.mulf %48, %54 : vector<8x16xf32>
    %c0_20 = arith.constant 0 : index
    %c0_21 = arith.constant 0 : index
    %56 = vector.load %arg1[%c0_20, %c0_21] : memref<64x1xf32, #tpu.memory_space<vmem>>, vector<8x1xf32>
    %c56_22 = arith.constant 56 : index
    %c0_23 = arith.constant 0 : index
    %57 = vector.load %arg1[%c56_22, %c0_23] : memref<64x1xf32, #tpu.memory_space<vmem>>, vector<8x1xf32>
    %58 = vector.shape_cast %21 : vector<1x16xi1> to vector<1x16xi1>
    %59 = vector.broadcast %58 : vector<1x16xi1> to vector<8x16xi1>
    %60 = vector.shape_cast %56 : vector<8x1xf32> to vector<8x1xf32>
    %61 = vector.broadcast %60 : vector<8x1xf32> to vector<8x16xf32>
    %62 = vector.shape_cast %57 : vector<8x1xf32> to vector<8x1xf32>
    %63 = vector.broadcast %62 : vector<8x1xf32> to vector<8x16xf32>
    %64 = arith.select %59, %61, %63 : vector<8x16xi1>, vector<8x16xf32>
    %65 = arith.mulf %64, %55 : vector<8x16xf32>
    %cst_24 = arith.constant 1.000000e+00 : f32
    %66 = vector.broadcast %cst_24 : f32 to vector<8x16xf32>
    %67 = arith.subf %66, %64 : vector<8x16xf32>
    %68 = arith.mulf %67, %30 : vector<8x16xf32>
    %69 = arith.addf %65, %68 : vector<8x16xf32>
    %70 = arith.mulf %64, %53 : vector<8x16xf32>
    %cst_25 = arith.constant 1.000000e+00 : f32
    %71 = vector.broadcast %cst_25 : f32 to vector<8x16xf32>
    %72 = arith.subf %71, %64 : vector<8x16xf32>
    %73 = arith.mulf %72, %31 : vector<8x16xf32>
    %74 = arith.addf %70, %73 : vector<8x16xf32>
    %c8 = arith.constant 8 : index
    %c0_26 = arith.constant 0 : index
    %75 = vector.load %arg11[%c8, %c0_26] : memref<64x64xf32, #tpu.memory_space<vmem>>, vector<8x64xf32>
    %c48 = arith.constant 48 : index
    %c0_27 = arith.constant 0 : index
    %76 = vector.load %arg11[%c48, %c0_27] : memref<64x64xf32, #tpu.memory_space<vmem>>, vector<8x64xf32>
    %77 = vector.shape_cast %18 : vector<1x64xi1> to vector<1x64xi1>
    %78 = vector.broadcast %77 : vector<1x64xi1> to vector<8x64xi1>
    %79 = arith.select %78, %75, %76 : vector<8x64xi1>, vector<8x64xf32>
    %80 = arith.truncf %69 : vector<8x16xf32> to vector<8x16xbf16>
    %cst_28 = arith.constant dense<0.000000e+00> : vector<8x64xf32>
    %81 = tpu.matmul %80, %29, %cst_28 {dimension_numbers = #tpu.dot_dimension_numbers<[1], [0], [0], [1], [0, 0, 1, 1], [], []>} : vector<8x16xbf16>, vector<16x64xbf16>, vector<8x64xf32> -> vector<8x64xf32>
    %82 = arith.addf %79, %81 : vector<8x64xf32>
    %83 = vector.extract_strided_slice %82 {offsets = [0, 0], sizes = [8, 48], strides = [1, 1]} : vector<8x64xf32> to vector<8x48xf32>
    %84 = arith.negf %83 : vector<8x48xf32>
    %85 = math.exp %84 : vector<8x48xf32>
    %cst_29 = arith.constant 1.000000e+00 : f32
    %86 = vector.broadcast %cst_29 : f32 to vector<8x48xf32>
    %87 = arith.addf %86, %85 : vector<8x48xf32>
    %88 = arith.divf %86, %87 : vector<8x48xf32>
    %89 = vector.extract_strided_slice %88 {offsets = [0, 0], sizes = [8, 16], strides = [1, 1]} : vector<8x48xf32> to vector<8x16xf32>
    %90 = vector.extract_strided_slice %88 {offsets = [0, 16], sizes = [8, 16], strides = [1, 1]} : vector<8x48xf32> to vector<8x16xf32>
    %91 = vector.extract_strided_slice %88 {offsets = [0, 32], sizes = [8, 16], strides = [1, 1]} : vector<8x48xf32> to vector<8x16xf32>
    %92 = vector.extract_strided_slice %82 {offsets = [0, 48], sizes = [8, 16], strides = [1, 1]} : vector<8x64xf32> to vector<8x16xf32>
    %93 = math.tanh %92 : vector<8x16xf32>
    %94 = arith.mulf %90, %74 : vector<8x16xf32>
    %95 = arith.mulf %89, %93 : vector<8x16xf32>
    %96 = arith.addf %94, %95 : vector<8x16xf32>
    %97 = math.tanh %96 : vector<8x16xf32>
    %98 = arith.mulf %91, %97 : vector<8x16xf32>
    %c8_30 = arith.constant 8 : index
    %c0_31 = arith.constant 0 : index
    %99 = vector.load %arg1[%c8_30, %c0_31] : memref<64x1xf32, #tpu.memory_space<vmem>>, vector<8x1xf32>
    %c48_32 = arith.constant 48 : index
    %c0_33 = arith.constant 0 : index
    %100 = vector.load %arg1[%c48_32, %c0_33] : memref<64x1xf32, #tpu.memory_space<vmem>>, vector<8x1xf32>
    %101 = vector.shape_cast %21 : vector<1x16xi1> to vector<1x16xi1>
    %102 = vector.broadcast %101 : vector<1x16xi1> to vector<8x16xi1>
    %103 = vector.shape_cast %99 : vector<8x1xf32> to vector<8x1xf32>
    %104 = vector.broadcast %103 : vector<8x1xf32> to vector<8x16xf32>
    %105 = vector.shape_cast %100 : vector<8x1xf32> to vector<8x1xf32>
    %106 = vector.broadcast %105 : vector<8x1xf32> to vector<8x16xf32>
    %107 = arith.select %102, %104, %106 : vector<8x16xi1>, vector<8x16xf32>
    %108 = arith.mulf %107, %98 : vector<8x16xf32>
    %cst_34 = arith.constant 1.000000e+00 : f32
    %109 = vector.broadcast %cst_34 : f32 to vector<8x16xf32>
    %110 = arith.subf %109, %107 : vector<8x16xf32>
    %111 = arith.mulf %110, %69 : vector<8x16xf32>
    %112 = arith.addf %108, %111 : vector<8x16xf32>
    %113 = arith.mulf %107, %96 : vector<8x16xf32>
    %cst_35 = arith.constant 1.000000e+00 : f32
    %114 = vector.broadcast %cst_35 : f32 to vector<8x16xf32>
    %115 = arith.subf %114, %107 : vector<8x16xf32>
    %116 = arith.mulf %115, %74 : vector<8x16xf32>
    %117 = arith.addf %113, %116 : vector<8x16xf32>
    %c16 = arith.constant 16 : index
    %c0_36 = arith.constant 0 : index
    %118 = vector.load %arg11[%c16, %c0_36] : memref<64x64xf32, #tpu.memory_space<vmem>>, vector<8x64xf32>
    %c40 = arith.constant 40 : index
    %c0_37 = arith.constant 0 : index
    %119 = vector.load %arg11[%c40, %c0_37] : memref<64x64xf32, #tpu.memory_space<vmem>>, vector<8x64xf32>
    %120 = vector.shape_cast %18 : vector<1x64xi1> to vector<1x64xi1>
    %121 = vector.broadcast %120 : vector<1x64xi1> to vector<8x64xi1>
    %122 = arith.select %121, %118, %119 : vector<8x64xi1>, vector<8x64xf32>
    %123 = arith.truncf %112 : vector<8x16xf32> to vector<8x16xbf16>
    %cst_38 = arith.constant dense<0.000000e+00> : vector<8x64xf32>
    %124 = tpu.matmul %123, %29, %cst_38 {dimension_numbers = #tpu.dot_dimension_numbers<[1], [0], [0], [1], [0, 0, 1, 1], [], []>} : vector<8x16xbf16>, vector<16x64xbf16>, vector<8x64xf32> -> vector<8x64xf32>
    %125 = arith.addf %122, %124 : vector<8x64xf32>
    %126 = vector.extract_strided_slice %125 {offsets = [0, 0], sizes = [8, 48], strides = [1, 1]} : vector<8x64xf32> to vector<8x48xf32>
    %127 = arith.negf %126 : vector<8x48xf32>
    %128 = math.exp %127 : vector<8x48xf32>
    %cst_39 = arith.constant 1.000000e+00 : f32
    %129 = vector.broadcast %cst_39 : f32 to vector<8x48xf32>
    %130 = arith.addf %129, %128 : vector<8x48xf32>
    %131 = arith.divf %129, %130 : vector<8x48xf32>
    %132 = vector.extract_strided_slice %131 {offsets = [0, 0], sizes = [8, 16], strides = [1, 1]} : vector<8x48xf32> to vector<8x16xf32>
    %133 = vector.extract_strided_slice %131 {offsets = [0, 16], sizes = [8, 16], strides = [1, 1]} : vector<8x48xf32> to vector<8x16xf32>
    %134 = vector.extract_strided_slice %131 {offsets = [0, 32], sizes = [8, 16], strides = [1, 1]} : vector<8x48xf32> to vector<8x16xf32>
    %135 = vector.extract_strided_slice %125 {offsets = [0, 48], sizes = [8, 16], strides = [1, 1]} : vector<8x64xf32> to vector<8x16xf32>
    %136 = math.tanh %135 : vector<8x16xf32>
    %137 = arith.mulf %133, %117 : vector<8x16xf32>
    %138 = arith.mulf %132, %136 : vector<8x16xf32>
    %139 = arith.addf %137, %138 : vector<8x16xf32>
    %140 = math.tanh %139 : vector<8x16xf32>
    %141 = arith.mulf %134, %140 : vector<8x16xf32>
    %c16_40 = arith.constant 16 : index
    %c0_41 = arith.constant 0 : index
    %142 = vector.load %arg1[%c16_40, %c0_41] : memref<64x1xf32, #tpu.memory_space<vmem>>, vector<8x1xf32>
    %c40_42 = arith.constant 40 : index
    %c0_43 = arith.constant 0 : index
    %143 = vector.load %arg1[%c40_42, %c0_43] : memref<64x1xf32, #tpu.memory_space<vmem>>, vector<8x1xf32>
    %144 = vector.shape_cast %21 : vector<1x16xi1> to vector<1x16xi1>
    %145 = vector.broadcast %144 : vector<1x16xi1> to vector<8x16xi1>
    %146 = vector.shape_cast %142 : vector<8x1xf32> to vector<8x1xf32>
    %147 = vector.broadcast %146 : vector<8x1xf32> to vector<8x16xf32>
    %148 = vector.shape_cast %143 : vector<8x1xf32> to vector<8x1xf32>
    %149 = vector.broadcast %148 : vector<8x1xf32> to vector<8x16xf32>
    %150 = arith.select %145, %147, %149 : vector<8x16xi1>, vector<8x16xf32>
    %151 = arith.mulf %150, %141 : vector<8x16xf32>
    %cst_44 = arith.constant 1.000000e+00 : f32
    %152 = vector.broadcast %cst_44 : f32 to vector<8x16xf32>
    %153 = arith.subf %152, %150 : vector<8x16xf32>
    %154 = arith.mulf %153, %112 : vector<8x16xf32>
    %155 = arith.addf %151, %154 : vector<8x16xf32>
    %156 = arith.mulf %150, %139 : vector<8x16xf32>
    %cst_45 = arith.constant 1.000000e+00 : f32
    %157 = vector.broadcast %cst_45 : f32 to vector<8x16xf32>
    %158 = arith.subf %157, %150 : vector<8x16xf32>
    %159 = arith.mulf %158, %117 : vector<8x16xf32>
    %160 = arith.addf %156, %159 : vector<8x16xf32>
    %c24 = arith.constant 24 : index
    %c0_46 = arith.constant 0 : index
    %161 = vector.load %arg11[%c24, %c0_46] : memref<64x64xf32, #tpu.memory_space<vmem>>, vector<8x64xf32>
    %c32 = arith.constant 32 : index
    %c0_47 = arith.constant 0 : index
    %162 = vector.load %arg11[%c32, %c0_47] : memref<64x64xf32, #tpu.memory_space<vmem>>, vector<8x64xf32>
    %163 = vector.shape_cast %18 : vector<1x64xi1> to vector<1x64xi1>
    %164 = vector.broadcast %163 : vector<1x64xi1> to vector<8x64xi1>
    %165 = arith.select %164, %161, %162 : vector<8x64xi1>, vector<8x64xf32>
    %166 = arith.truncf %155 : vector<8x16xf32> to vector<8x16xbf16>
    %cst_48 = arith.constant dense<0.000000e+00> : vector<8x64xf32>
    %167 = tpu.matmul %166, %29, %cst_48 {dimension_numbers = #tpu.dot_dimension_numbers<[1], [0], [0], [1], [0, 0, 1, 1], [], []>} : vector<8x16xbf16>, vector<16x64xbf16>, vector<8x64xf32> -> vector<8x64xf32>
    %168 = arith.addf %165, %167 : vector<8x64xf32>
    %169 = vector.extract_strided_slice %168 {offsets = [0, 0], sizes = [8, 48], strides = [1, 1]} : vector<8x64xf32> to vector<8x48xf32>
    %170 = arith.negf %169 : vector<8x48xf32>
    %171 = math.exp %170 : vector<8x48xf32>
    %cst_49 = arith.constant 1.000000e+00 : f32
    %172 = vector.broadcast %cst_49 : f32 to vector<8x48xf32>
    %173 = arith.addf %172, %171 : vector<8x48xf32>
    %174 = arith.divf %172, %173 : vector<8x48xf32>
    %175 = vector.extract_strided_slice %174 {offsets = [0, 0], sizes = [8, 16], strides = [1, 1]} : vector<8x48xf32> to vector<8x16xf32>
    %176 = vector.extract_strided_slice %174 {offsets = [0, 16], sizes = [8, 16], strides = [1, 1]} : vector<8x48xf32> to vector<8x16xf32>
    %177 = vector.extract_strided_slice %174 {offsets = [0, 32], sizes = [8, 16], strides = [1, 1]} : vector<8x48xf32> to vector<8x16xf32>
    %178 = vector.extract_strided_slice %168 {offsets = [0, 48], sizes = [8, 16], strides = [1, 1]} : vector<8x64xf32> to vector<8x16xf32>
    %179 = math.tanh %178 : vector<8x16xf32>
    %180 = arith.mulf %176, %160 : vector<8x16xf32>
    %181 = arith.mulf %175, %179 : vector<8x16xf32>
    %182 = arith.addf %180, %181 : vector<8x16xf32>
    %183 = math.tanh %182 : vector<8x16xf32>
    %184 = arith.mulf %177, %183 : vector<8x16xf32>
    %c24_50 = arith.constant 24 : index
    %c0_51 = arith.constant 0 : index
    %185 = vector.load %arg1[%c24_50, %c0_51] : memref<64x1xf32, #tpu.memory_space<vmem>>, vector<8x1xf32>
    %c32_52 = arith.constant 32 : index
    %c0_53 = arith.constant 0 : index
    %186 = vector.load %arg1[%c32_52, %c0_53] : memref<64x1xf32, #tpu.memory_space<vmem>>, vector<8x1xf32>
    %187 = vector.shape_cast %21 : vector<1x16xi1> to vector<1x16xi1>
    %188 = vector.broadcast %187 : vector<1x16xi1> to vector<8x16xi1>
    %189 = vector.shape_cast %185 : vector<8x1xf32> to vector<8x1xf32>
    %190 = vector.broadcast %189 : vector<8x1xf32> to vector<8x16xf32>
    %191 = vector.shape_cast %186 : vector<8x1xf32> to vector<8x1xf32>
    %192 = vector.broadcast %191 : vector<8x1xf32> to vector<8x16xf32>
    %193 = arith.select %188, %190, %192 : vector<8x16xi1>, vector<8x16xf32>
    %194 = arith.mulf %193, %184 : vector<8x16xf32>
    %cst_54 = arith.constant 1.000000e+00 : f32
    %195 = vector.broadcast %cst_54 : f32 to vector<8x16xf32>
    %196 = arith.subf %195, %193 : vector<8x16xf32>
    %197 = arith.mulf %196, %155 : vector<8x16xf32>
    %198 = arith.addf %194, %197 : vector<8x16xf32>
    %199 = arith.mulf %193, %182 : vector<8x16xf32>
    %cst_55 = arith.constant 1.000000e+00 : f32
    %200 = vector.broadcast %cst_55 : f32 to vector<8x16xf32>
    %201 = arith.subf %200, %193 : vector<8x16xf32>
    %202 = arith.mulf %201, %160 : vector<8x16xf32>
    %203 = arith.addf %199, %202 : vector<8x16xf32>
    %c32_56 = arith.constant 32 : index
    %c0_57 = arith.constant 0 : index
    %204 = vector.load %arg11[%c32_56, %c0_57] : memref<64x64xf32, #tpu.memory_space<vmem>>, vector<8x64xf32>
    %c24_58 = arith.constant 24 : index
    %c0_59 = arith.constant 0 : index
    %205 = vector.load %arg11[%c24_58, %c0_59] : memref<64x64xf32, #tpu.memory_space<vmem>>, vector<8x64xf32>
    %206 = vector.shape_cast %18 : vector<1x64xi1> to vector<1x64xi1>
    %207 = vector.broadcast %206 : vector<1x64xi1> to vector<8x64xi1>
    %208 = arith.select %207, %204, %205 : vector<8x64xi1>, vector<8x64xf32>
    %209 = arith.truncf %198 : vector<8x16xf32> to vector<8x16xbf16>
    %cst_60 = arith.constant dense<0.000000e+00> : vector<8x64xf32>
    %210 = tpu.matmul %209, %29, %cst_60 {dimension_numbers = #tpu.dot_dimension_numbers<[1], [0], [0], [1], [0, 0, 1, 1], [], []>} : vector<8x16xbf16>, vector<16x64xbf16>, vector<8x64xf32> -> vector<8x64xf32>
    %211 = arith.addf %208, %210 : vector<8x64xf32>
    %212 = vector.extract_strided_slice %211 {offsets = [0, 0], sizes = [8, 48], strides = [1, 1]} : vector<8x64xf32> to vector<8x48xf32>
    %213 = arith.negf %212 : vector<8x48xf32>
    %214 = math.exp %213 : vector<8x48xf32>
    %cst_61 = arith.constant 1.000000e+00 : f32
    %215 = vector.broadcast %cst_61 : f32 to vector<8x48xf32>
    %216 = arith.addf %215, %214 : vector<8x48xf32>
    %217 = arith.divf %215, %216 : vector<8x48xf32>
    %218 = vector.extract_strided_slice %217 {offsets = [0, 0], sizes = [8, 16], strides = [1, 1]} : vector<8x48xf32> to vector<8x16xf32>
    %219 = vector.extract_strided_slice %217 {offsets = [0, 16], sizes = [8, 16], strides = [1, 1]} : vector<8x48xf32> to vector<8x16xf32>
    %220 = vector.extract_strided_slice %217 {offsets = [0, 32], sizes = [8, 16], strides = [1, 1]} : vector<8x48xf32> to vector<8x16xf32>
    %221 = vector.extract_strided_slice %211 {offsets = [0, 48], sizes = [8, 16], strides = [1, 1]} : vector<8x64xf32> to vector<8x16xf32>
    %222 = math.tanh %221 : vector<8x16xf32>
    %223 = arith.mulf %219, %203 : vector<8x16xf32>
    %224 = arith.mulf %218, %222 : vector<8x16xf32>
    %225 = arith.addf %223, %224 : vector<8x16xf32>
    %226 = math.tanh %225 : vector<8x16xf32>
    %227 = arith.mulf %220, %226 : vector<8x16xf32>
    %c32_62 = arith.constant 32 : index
    %c0_63 = arith.constant 0 : index
    %228 = vector.load %arg1[%c32_62, %c0_63] : memref<64x1xf32, #tpu.memory_space<vmem>>, vector<8x1xf32>
    %c24_64 = arith.constant 24 : index
    %c0_65 = arith.constant 0 : index
    %229 = vector.load %arg1[%c24_64, %c0_65] : memref<64x1xf32, #tpu.memory_space<vmem>>, vector<8x1xf32>
    %230 = vector.shape_cast %21 : vector<1x16xi1> to vector<1x16xi1>
    %231 = vector.broadcast %230 : vector<1x16xi1> to vector<8x16xi1>
    %232 = vector.shape_cast %228 : vector<8x1xf32> to vector<8x1xf32>
    %233 = vector.broadcast %232 : vector<8x1xf32> to vector<8x16xf32>
    %234 = vector.shape_cast %229 : vector<8x1xf32> to vector<8x1xf32>
    %235 = vector.broadcast %234 : vector<8x1xf32> to vector<8x16xf32>
    %236 = arith.select %231, %233, %235 : vector<8x16xi1>, vector<8x16xf32>
    %237 = arith.mulf %236, %227 : vector<8x16xf32>
    %cst_66 = arith.constant 1.000000e+00 : f32
    %238 = vector.broadcast %cst_66 : f32 to vector<8x16xf32>
    %239 = arith.subf %238, %236 : vector<8x16xf32>
    %240 = arith.mulf %239, %198 : vector<8x16xf32>
    %241 = arith.addf %237, %240 : vector<8x16xf32>
    %242 = arith.mulf %236, %225 : vector<8x16xf32>
    %cst_67 = arith.constant 1.000000e+00 : f32
    %243 = vector.broadcast %cst_67 : f32 to vector<8x16xf32>
    %244 = arith.subf %243, %236 : vector<8x16xf32>
    %245 = arith.mulf %244, %203 : vector<8x16xf32>
    %246 = arith.addf %242, %245 : vector<8x16xf32>
    %c40_68 = arith.constant 40 : index
    %c0_69 = arith.constant 0 : index
    %247 = vector.load %arg11[%c40_68, %c0_69] : memref<64x64xf32, #tpu.memory_space<vmem>>, vector<8x64xf32>
    %c16_70 = arith.constant 16 : index
    %c0_71 = arith.constant 0 : index
    %248 = vector.load %arg11[%c16_70, %c0_71] : memref<64x64xf32, #tpu.memory_space<vmem>>, vector<8x64xf32>
    %249 = vector.shape_cast %18 : vector<1x64xi1> to vector<1x64xi1>
    %250 = vector.broadcast %249 : vector<1x64xi1> to vector<8x64xi1>
    %251 = arith.select %250, %247, %248 : vector<8x64xi1>, vector<8x64xf32>
    %252 = arith.truncf %241 : vector<8x16xf32> to vector<8x16xbf16>
    %cst_72 = arith.constant dense<0.000000e+00> : vector<8x64xf32>
    %253 = tpu.matmul %252, %29, %cst_72 {dimension_numbers = #tpu.dot_dimension_numbers<[1], [0], [0], [1], [0, 0, 1, 1], [], []>} : vector<8x16xbf16>, vector<16x64xbf16>, vector<8x64xf32> -> vector<8x64xf32>
    %254 = arith.addf %251, %253 : vector<8x64xf32>
    %255 = vector.extract_strided_slice %254 {offsets = [0, 0], sizes = [8, 48], strides = [1, 1]} : vector<8x64xf32> to vector<8x48xf32>
    %256 = arith.negf %255 : vector<8x48xf32>
    %257 = math.exp %256 : vector<8x48xf32>
    %cst_73 = arith.constant 1.000000e+00 : f32
    %258 = vector.broadcast %cst_73 : f32 to vector<8x48xf32>
    %259 = arith.addf %258, %257 : vector<8x48xf32>
    %260 = arith.divf %258, %259 : vector<8x48xf32>
    %261 = vector.extract_strided_slice %260 {offsets = [0, 0], sizes = [8, 16], strides = [1, 1]} : vector<8x48xf32> to vector<8x16xf32>
    %262 = vector.extract_strided_slice %260 {offsets = [0, 16], sizes = [8, 16], strides = [1, 1]} : vector<8x48xf32> to vector<8x16xf32>
    %263 = vector.extract_strided_slice %260 {offsets = [0, 32], sizes = [8, 16], strides = [1, 1]} : vector<8x48xf32> to vector<8x16xf32>
    %264 = vector.extract_strided_slice %254 {offsets = [0, 48], sizes = [8, 16], strides = [1, 1]} : vector<8x64xf32> to vector<8x16xf32>
    %265 = math.tanh %264 : vector<8x16xf32>
    %266 = arith.mulf %262, %246 : vector<8x16xf32>
    %267 = arith.mulf %261, %265 : vector<8x16xf32>
    %268 = arith.addf %266, %267 : vector<8x16xf32>
    %269 = math.tanh %268 : vector<8x16xf32>
    %270 = arith.mulf %263, %269 : vector<8x16xf32>
    %c40_74 = arith.constant 40 : index
    %c0_75 = arith.constant 0 : index
    %271 = vector.load %arg1[%c40_74, %c0_75] : memref<64x1xf32, #tpu.memory_space<vmem>>, vector<8x1xf32>
    %c16_76 = arith.constant 16 : index
    %c0_77 = arith.constant 0 : index
    %272 = vector.load %arg1[%c16_76, %c0_77] : memref<64x1xf32, #tpu.memory_space<vmem>>, vector<8x1xf32>
    %273 = vector.shape_cast %21 : vector<1x16xi1> to vector<1x16xi1>
    %274 = vector.broadcast %273 : vector<1x16xi1> to vector<8x16xi1>
    %275 = vector.shape_cast %271 : vector<8x1xf32> to vector<8x1xf32>
    %276 = vector.broadcast %275 : vector<8x1xf32> to vector<8x16xf32>
    %277 = vector.shape_cast %272 : vector<8x1xf32> to vector<8x1xf32>
    %278 = vector.broadcast %277 : vector<8x1xf32> to vector<8x16xf32>
    %279 = arith.select %274, %276, %278 : vector<8x16xi1>, vector<8x16xf32>
    %280 = arith.mulf %279, %270 : vector<8x16xf32>
    %cst_78 = arith.constant 1.000000e+00 : f32
    %281 = vector.broadcast %cst_78 : f32 to vector<8x16xf32>
    %282 = arith.subf %281, %279 : vector<8x16xf32>
    %283 = arith.mulf %282, %241 : vector<8x16xf32>
    %284 = arith.addf %280, %283 : vector<8x16xf32>
    %285 = arith.mulf %279, %268 : vector<8x16xf32>
    %cst_79 = arith.constant 1.000000e+00 : f32
    %286 = vector.broadcast %cst_79 : f32 to vector<8x16xf32>
    %287 = arith.subf %286, %279 : vector<8x16xf32>
    %288 = arith.mulf %287, %246 : vector<8x16xf32>
    %289 = arith.addf %285, %288 : vector<8x16xf32>
    %c48_80 = arith.constant 48 : index
    %c0_81 = arith.constant 0 : index
    %290 = vector.load %arg11[%c48_80, %c0_81] : memref<64x64xf32, #tpu.memory_space<vmem>>, vector<8x64xf32>
    %c8_82 = arith.constant 8 : index
    %c0_83 = arith.constant 0 : index
    %291 = vector.load %arg11[%c8_82, %c0_83] : memref<64x64xf32, #tpu.memory_space<vmem>>, vector<8x64xf32>
    %292 = vector.shape_cast %18 : vector<1x64xi1> to vector<1x64xi1>
    %293 = vector.broadcast %292 : vector<1x64xi1> to vector<8x64xi1>
    %294 = arith.select %293, %290, %291 : vector<8x64xi1>, vector<8x64xf32>
    %295 = arith.truncf %284 : vector<8x16xf32> to vector<8x16xbf16>
    %cst_84 = arith.constant dense<0.000000e+00> : vector<8x64xf32>
    %296 = tpu.matmul %295, %29, %cst_84 {dimension_numbers = #tpu.dot_dimension_numbers<[1], [0], [0], [1], [0, 0, 1, 1], [], []>} : vector<8x16xbf16>, vector<16x64xbf16>, vector<8x64xf32> -> vector<8x64xf32>
    %297 = arith.addf %294, %296 : vector<8x64xf32>
    %298 = vector.extract_strided_slice %297 {offsets = [0, 0], sizes = [8, 48], strides = [1, 1]} : vector<8x64xf32> to vector<8x48xf32>
    %299 = arith.negf %298 : vector<8x48xf32>
    %300 = math.exp %299 : vector<8x48xf32>
    %cst_85 = arith.constant 1.000000e+00 : f32
    %301 = vector.broadcast %cst_85 : f32 to vector<8x48xf32>
    %302 = arith.addf %301, %300 : vector<8x48xf32>
    %303 = arith.divf %301, %302 : vector<8x48xf32>
    %304 = vector.extract_strided_slice %303 {offsets = [0, 0], sizes = [8, 16], strides = [1, 1]} : vector<8x48xf32> to vector<8x16xf32>
    %305 = vector.extract_strided_slice %303 {offsets = [0, 16], sizes = [8, 16], strides = [1, 1]} : vector<8x48xf32> to vector<8x16xf32>
    %306 = vector.extract_strided_slice %303 {offsets = [0, 32], sizes = [8, 16], strides = [1, 1]} : vector<8x48xf32> to vector<8x16xf32>
    %307 = vector.extract_strided_slice %297 {offsets = [0, 48], sizes = [8, 16], strides = [1, 1]} : vector<8x64xf32> to vector<8x16xf32>
    %308 = math.tanh %307 : vector<8x16xf32>
    %309 = arith.mulf %305, %289 : vector<8x16xf32>
    %310 = arith.mulf %304, %308 : vector<8x16xf32>
    %311 = arith.addf %309, %310 : vector<8x16xf32>
    %312 = math.tanh %311 : vector<8x16xf32>
    %313 = arith.mulf %306, %312 : vector<8x16xf32>
    %c48_86 = arith.constant 48 : index
    %c0_87 = arith.constant 0 : index
    %314 = vector.load %arg1[%c48_86, %c0_87] : memref<64x1xf32, #tpu.memory_space<vmem>>, vector<8x1xf32>
    %c8_88 = arith.constant 8 : index
    %c0_89 = arith.constant 0 : index
    %315 = vector.load %arg1[%c8_88, %c0_89] : memref<64x1xf32, #tpu.memory_space<vmem>>, vector<8x1xf32>
    %316 = vector.shape_cast %21 : vector<1x16xi1> to vector<1x16xi1>
    %317 = vector.broadcast %316 : vector<1x16xi1> to vector<8x16xi1>
    %318 = vector.shape_cast %314 : vector<8x1xf32> to vector<8x1xf32>
    %319 = vector.broadcast %318 : vector<8x1xf32> to vector<8x16xf32>
    %320 = vector.shape_cast %315 : vector<8x1xf32> to vector<8x1xf32>
    %321 = vector.broadcast %320 : vector<8x1xf32> to vector<8x16xf32>
    %322 = arith.select %317, %319, %321 : vector<8x16xi1>, vector<8x16xf32>
    %323 = arith.mulf %322, %313 : vector<8x16xf32>
    %cst_90 = arith.constant 1.000000e+00 : f32
    %324 = vector.broadcast %cst_90 : f32 to vector<8x16xf32>
    %325 = arith.subf %324, %322 : vector<8x16xf32>
    %326 = arith.mulf %325, %284 : vector<8x16xf32>
    %327 = arith.addf %323, %326 : vector<8x16xf32>
    %328 = arith.mulf %322, %311 : vector<8x16xf32>
    %cst_91 = arith.constant 1.000000e+00 : f32
    %329 = vector.broadcast %cst_91 : f32 to vector<8x16xf32>
    %330 = arith.subf %329, %322 : vector<8x16xf32>
    %331 = arith.mulf %330, %289 : vector<8x16xf32>
    %332 = arith.addf %328, %331 : vector<8x16xf32>
    %c56_92 = arith.constant 56 : index
    %c0_93 = arith.constant 0 : index
    %333 = vector.load %arg11[%c56_92, %c0_93] : memref<64x64xf32, #tpu.memory_space<vmem>>, vector<8x64xf32>
    %c0_94 = arith.constant 0 : index
    %c0_95 = arith.constant 0 : index
    %334 = vector.load %arg11[%c0_94, %c0_95] : memref<64x64xf32, #tpu.memory_space<vmem>>, vector<8x64xf32>
    %335 = vector.shape_cast %18 : vector<1x64xi1> to vector<1x64xi1>
    %336 = vector.broadcast %335 : vector<1x64xi1> to vector<8x64xi1>
    %337 = arith.select %336, %333, %334 : vector<8x64xi1>, vector<8x64xf32>
    %338 = arith.truncf %327 : vector<8x16xf32> to vector<8x16xbf16>
    %cst_96 = arith.constant dense<0.000000e+00> : vector<8x64xf32>
    %339 = tpu.matmul %338, %29, %cst_96 {dimension_numbers = #tpu.dot_dimension_numbers<[1], [0], [0], [1], [0, 0, 1, 1], [], []>} : vector<8x16xbf16>, vector<16x64xbf16>, vector<8x64xf32> -> vector<8x64xf32>
    %340 = arith.addf %337, %339 : vector<8x64xf32>
    %341 = vector.extract_strided_slice %340 {offsets = [0, 0], sizes = [8, 48], strides = [1, 1]} : vector<8x64xf32> to vector<8x48xf32>
    %342 = arith.negf %341 : vector<8x48xf32>
    %343 = math.exp %342 : vector<8x48xf32>
    %cst_97 = arith.constant 1.000000e+00 : f32
    %344 = vector.broadcast %cst_97 : f32 to vector<8x48xf32>
    %345 = arith.addf %344, %343 : vector<8x48xf32>
    %346 = arith.divf %344, %345 : vector<8x48xf32>
    %347 = vector.extract_strided_slice %346 {offsets = [0, 0], sizes = [8, 16], strides = [1, 1]} : vector<8x48xf32> to vector<8x16xf32>
    %348 = vector.extract_strided_slice %346 {offsets = [0, 16], sizes = [8, 16], strides = [1, 1]} : vector<8x48xf32> to vector<8x16xf32>
    %349 = vector.extract_strided_slice %346 {offsets = [0, 32], sizes = [8, 16], strides = [1, 1]} : vector<8x48xf32> to vector<8x16xf32>
    %350 = vector.extract_strided_slice %340 {offsets = [0, 48], sizes = [8, 16], strides = [1, 1]} : vector<8x64xf32> to vector<8x16xf32>
    %351 = math.tanh %350 : vector<8x16xf32>
    %352 = arith.mulf %348, %332 : vector<8x16xf32>
    %353 = arith.mulf %347, %351 : vector<8x16xf32>
    %354 = arith.addf %352, %353 : vector<8x16xf32>
    %355 = math.tanh %354 : vector<8x16xf32>
    %356 = arith.mulf %349, %355 : vector<8x16xf32>
    %c56_98 = arith.constant 56 : index
    %c0_99 = arith.constant 0 : index
    %357 = vector.load %arg1[%c56_98, %c0_99] : memref<64x1xf32, #tpu.memory_space<vmem>>, vector<8x1xf32>
    %c0_100 = arith.constant 0 : index
    %c0_101 = arith.constant 0 : index
    %358 = vector.load %arg1[%c0_100, %c0_101] : memref<64x1xf32, #tpu.memory_space<vmem>>, vector<8x1xf32>
    %359 = vector.shape_cast %21 : vector<1x16xi1> to vector<1x16xi1>
    %360 = vector.broadcast %359 : vector<1x16xi1> to vector<8x16xi1>
    %361 = vector.shape_cast %357 : vector<8x1xf32> to vector<8x1xf32>
    %362 = vector.broadcast %361 : vector<8x1xf32> to vector<8x16xf32>
    %363 = vector.shape_cast %358 : vector<8x1xf32> to vector<8x1xf32>
    %364 = vector.broadcast %363 : vector<8x1xf32> to vector<8x16xf32>
    %365 = arith.select %360, %362, %364 : vector<8x16xi1>, vector<8x16xf32>
    %366 = arith.mulf %365, %356 : vector<8x16xf32>
    %367 = vector.shape_cast %21 : vector<1x16xi1> to vector<1x16xi1>
    %368 = vector.broadcast %367 : vector<1x16xi1> to vector<8x16xi1>
    %369 = arith.select %368, %65, %366 : vector<8x16xi1>, vector<8x16xf32>
    %370 = vector.shape_cast %21 : vector<1x16xi1> to vector<1x16xi1>
    %371 = vector.broadcast %370 : vector<1x16xi1> to vector<8x16xi1>
    %372 = arith.select %371, %108, %323 : vector<8x16xi1>, vector<8x16xf32>
    %373 = vector.shape_cast %21 : vector<1x16xi1> to vector<1x16xi1>
    %374 = vector.broadcast %373 : vector<1x16xi1> to vector<8x16xi1>
    %375 = arith.select %374, %151, %280 : vector<8x16xi1>, vector<8x16xf32>
    %376 = vector.shape_cast %21 : vector<1x16xi1> to vector<1x16xi1>
    %377 = vector.broadcast %376 : vector<1x16xi1> to vector<8x16xi1>
    %378 = arith.select %377, %194, %237 : vector<8x16xi1>, vector<8x16xf32>
    %379 = vector.shape_cast %21 : vector<1x16xi1> to vector<1x16xi1>
    %380 = vector.broadcast %379 : vector<1x16xi1> to vector<8x16xi1>
    %381 = arith.select %380, %237, %194 : vector<8x16xi1>, vector<8x16xf32>
    %382 = vector.shape_cast %21 : vector<1x16xi1> to vector<1x16xi1>
    %383 = vector.broadcast %382 : vector<1x16xi1> to vector<8x16xi1>
    %384 = arith.select %383, %280, %151 : vector<8x16xi1>, vector<8x16xf32>
    %385 = vector.shape_cast %21 : vector<1x16xi1> to vector<1x16xi1>
    %386 = vector.broadcast %385 : vector<1x16xi1> to vector<8x16xi1>
    %387 = arith.select %386, %323, %108 : vector<8x16xi1>, vector<8x16xf32>
    %388 = vector.shape_cast %21 : vector<1x16xi1> to vector<1x16xi1>
    %389 = vector.broadcast %388 : vector<1x16xi1> to vector<8x16xi1>
    %390 = arith.select %389, %366, %65 : vector<8x16xi1>, vector<8x16xf32>
    %391 = tpu.concatenate %369, %372, %375, %378, %381, %384, %387, %390 in 0 : vector<8x16xf32>, vector<8x16xf32>, vector<8x16xf32>, vector<8x16xf32>, vector<8x16xf32>, vector<8x16xf32>, vector<8x16xf32>, vector<8x16xf32> -> vector<64x16xf32>
    %392 = arith.truncf %391 : vector<64x16xf32> to vector<64x16xbf16>
    %c0_102 = arith.constant 0 : index
    %c0_103 = arith.constant 0 : index
    %393 = vector.load %arg5[%c0_102, %c0_103] : memref<16x64xbf16, #tpu.memory_space<vmem>>, vector<16x64xbf16>
    %cst_104 = arith.constant dense<0.000000e+00> : vector<64x64xf32>
    %394 = tpu.matmul %392, %393, %cst_104 {dimension_numbers = #tpu.dot_dimension_numbers<[1], [0], [0], [1], [0, 0, 1, 1], [], []>} : vector<64x16xbf16>, vector<16x64xbf16>, vector<64x64xf32> -> vector<64x64xf32>
    %c0_105 = arith.constant 0 : index
    %c0_106 = arith.constant 0 : index
    %395 = vector.load %arg7[%c0_105, %c0_106] : memref<1x64xf32, #tpu.memory_space<vmem>>, vector<1x64xf32>
    %396 = vector.broadcast %395 : vector<1x64xf32> to vector<64x64xf32>
    %397 = arith.addf %394, %396 : vector<64x64xf32>
    %c0_107 = arith.constant 0 : index
    %c0_108 = arith.constant 0 : index
    %398 = vector.load %arg11[%c0_107, %c0_108] : memref<64x64xf32, #tpu.memory_space<vmem>>, vector<64x64xf32>
    tpu.vector_store %arg11[%c0_107, %c0_108], %397 {strides = array<i32>} : memref<64x64xf32, #tpu.memory_space<vmem>>, vector<64x64xf32>,
    %c0_109 = arith.constant 0 : index
    %c0_110 = arith.constant 0 : index
    %399 = vector.load %arg6[%c0_109, %c0_110] : memref<16x64xbf16, #tpu.memory_space<vmem>>, vector<16x64xbf16>
    %cst_111 = arith.constant 0.000000e+00 : f32
    %400 = vector.broadcast %cst_111 : f32 to vector<8x16xf32>
    %cst_112 = arith.constant 0.000000e+00 : f32
    %401 = vector.broadcast %cst_112 : f32 to vector<8x16xf32>
    %c0_113 = arith.constant 0 : index
    %c0_114 = arith.constant 0 : index
    %402 = vector.load %arg11[%c0_113, %c0_114] : memref<64x64xf32, #tpu.memory_space<vmem>>, vector<8x64xf32>
    %c56_115 = arith.constant 56 : index
    %c0_116 = arith.constant 0 : index
    %403 = vector.load %arg11[%c56_115, %c0_116] : memref<64x64xf32, #tpu.memory_space<vmem>>, vector<8x64xf32>
    %404 = vector.shape_cast %18 : vector<1x64xi1> to vector<1x64xi1>
    %405 = vector.broadcast %404 : vector<1x64xi1> to vector<8x64xi1>
    %406 = arith.select %405, %402, %403 : vector<8x64xi1>, vector<8x64xf32>
    %407 = arith.truncf %400 : vector<8x16xf32> to vector<8x16xbf16>
    %cst_117 = arith.constant dense<0.000000e+00> : vector<8x64xf32>
    %408 = tpu.matmul %407, %399, %cst_117 {dimension_numbers = #tpu.dot_dimension_numbers<[1], [0], [0], [1], [0, 0, 1, 1], [], []>} : vector<8x16xbf16>, vector<16x64xbf16>, vector<8x64xf32> -> vector<8x64xf32>
    %409 = arith.addf %406, %408 : vector<8x64xf32>
    %410 = vector.extract_strided_slice %409 {offsets = [0, 0], sizes = [8, 48], strides = [1, 1]} : vector<8x64xf32> to vector<8x48xf32>
    %411 = arith.negf %410 : vector<8x48xf32>
    %412 = math.exp %411 : vector<8x48xf32>
    %cst_118 = arith.constant 1.000000e+00 : f32
    %413 = vector.broadcast %cst_118 : f32 to vector<8x48xf32>
    %414 = arith.addf %413, %412 : vector<8x48xf32>
    %415 = arith.divf %413, %414 : vector<8x48xf32>
    %416 = vector.extract_strided_slice %415 {offsets = [0, 0], sizes = [8, 16], strides = [1, 1]} : vector<8x48xf32> to vector<8x16xf32>
    %417 = vector.extract_strided_slice %415 {offsets = [0, 16], sizes = [8, 16], strides = [1, 1]} : vector<8x48xf32> to vector<8x16xf32>
    %418 = vector.extract_strided_slice %415 {offsets = [0, 32], sizes = [8, 16], strides = [1, 1]} : vector<8x48xf32> to vector<8x16xf32>
    %419 = vector.extract_strided_slice %409 {offsets = [0, 48], sizes = [8, 16], strides = [1, 1]} : vector<8x64xf32> to vector<8x16xf32>
    %420 = math.tanh %419 : vector<8x16xf32>
    %421 = arith.mulf %417, %401 : vector<8x16xf32>
    %422 = arith.mulf %416, %420 : vector<8x16xf32>
    %423 = arith.addf %421, %422 : vector<8x16xf32>
    %424 = math.tanh %423 : vector<8x16xf32>
    %425 = arith.mulf %418, %424 : vector<8x16xf32>
    %c0_119 = arith.constant 0 : index
    %c0_120 = arith.constant 0 : index
    %426 = vector.load %arg1[%c0_119, %c0_120] : memref<64x1xf32, #tpu.memory_space<vmem>>, vector<8x1xf32>
    %c56_121 = arith.constant 56 : index
    %c0_122 = arith.constant 0 : index
    %427 = vector.load %arg1[%c56_121, %c0_122] : memref<64x1xf32, #tpu.memory_space<vmem>>, vector<8x1xf32>
    %428 = vector.shape_cast %21 : vector<1x16xi1> to vector<1x16xi1>
    %429 = vector.broadcast %428 : vector<1x16xi1> to vector<8x16xi1>
    %430 = vector.shape_cast %426 : vector<8x1xf32> to vector<8x1xf32>
    %431 = vector.broadcast %430 : vector<8x1xf32> to vector<8x16xf32>
    %432 = vector.shape_cast %427 : vector<8x1xf32> to vector<8x1xf32>
    %433 = vector.broadcast %432 : vector<8x1xf32> to vector<8x16xf32>
    %434 = arith.select %429, %431, %433 : vector<8x16xi1>, vector<8x16xf32>
    %435 = arith.mulf %434, %425 : vector<8x16xf32>
    %cst_123 = arith.constant 1.000000e+00 : f32
    %436 = vector.broadcast %cst_123 : f32 to vector<8x16xf32>
    %437 = arith.subf %436, %434 : vector<8x16xf32>
    %438 = arith.mulf %437, %400 : vector<8x16xf32>
    %439 = arith.addf %435, %438 : vector<8x16xf32>
    %440 = arith.mulf %434, %423 : vector<8x16xf32>
    %cst_124 = arith.constant 1.000000e+00 : f32
    %441 = vector.broadcast %cst_124 : f32 to vector<8x16xf32>
    %442 = arith.subf %441, %434 : vector<8x16xf32>
    %443 = arith.mulf %442, %401 : vector<8x16xf32>
    %444 = arith.addf %440, %443 : vector<8x16xf32>
    %c8_125 = arith.constant 8 : index
    %c0_126 = arith.constant 0 : index
    %445 = vector.load %arg11[%c8_125, %c0_126] : memref<64x64xf32, #tpu.memory_space<vmem>>, vector<8x64xf32>
    %c48_127 = arith.constant 48 : index
    %c0_128 = arith.constant 0 : index
    %446 = vector.load %arg11[%c48_127, %c0_128] : memref<64x64xf32, #tpu.memory_space<vmem>>, vector<8x64xf32>
    %447 = vector.shape_cast %18 : vector<1x64xi1> to vector<1x64xi1>
    %448 = vector.broadcast %447 : vector<1x64xi1> to vector<8x64xi1>
    %449 = arith.select %448, %445, %446 : vector<8x64xi1>, vector<8x64xf32>
    %450 = arith.truncf %439 : vector<8x16xf32> to vector<8x16xbf16>
    %cst_129 = arith.constant dense<0.000000e+00> : vector<8x64xf32>
    %451 = tpu.matmul %450, %399, %cst_129 {dimension_numbers = #tpu.dot_dimension_numbers<[1], [0], [0], [1], [0, 0, 1, 1], [], []>} : vector<8x16xbf16>, vector<16x64xbf16>, vector<8x64xf32> -> vector<8x64xf32>
    %452 = arith.addf %449, %451 : vector<8x64xf32>
    %453 = vector.extract_strided_slice %452 {offsets = [0, 0], sizes = [8, 48], strides = [1, 1]} : vector<8x64xf32> to vector<8x48xf32>
    %454 = arith.negf %453 : vector<8x48xf32>
    %455 = math.exp %454 : vector<8x48xf32>
    %cst_130 = arith.constant 1.000000e+00 : f32
    %456 = vector.broadcast %cst_130 : f32 to vector<8x48xf32>
    %457 = arith.addf %456, %455 : vector<8x48xf32>
    %458 = arith.divf %456, %457 : vector<8x48xf32>
    %459 = vector.extract_strided_slice %458 {offsets = [0, 0], sizes = [8, 16], strides = [1, 1]} : vector<8x48xf32> to vector<8x16xf32>
    %460 = vector.extract_strided_slice %458 {offsets = [0, 16], sizes = [8, 16], strides = [1, 1]} : vector<8x48xf32> to vector<8x16xf32>
    %461 = vector.extract_strided_slice %458 {offsets = [0, 32], sizes = [8, 16], strides = [1, 1]} : vector<8x48xf32> to vector<8x16xf32>
    %462 = vector.extract_strided_slice %452 {offsets = [0, 48], sizes = [8, 16], strides = [1, 1]} : vector<8x64xf32> to vector<8x16xf32>
    %463 = math.tanh %462 : vector<8x16xf32>
    %464 = arith.mulf %460, %444 : vector<8x16xf32>
    %465 = arith.mulf %459, %463 : vector<8x16xf32>
    %466 = arith.addf %464, %465 : vector<8x16xf32>
    %467 = math.tanh %466 : vector<8x16xf32>
    %468 = arith.mulf %461, %467 : vector<8x16xf32>
    %c8_131 = arith.constant 8 : index
    %c0_132 = arith.constant 0 : index
    %469 = vector.load %arg1[%c8_131, %c0_132] : memref<64x1xf32, #tpu.memory_space<vmem>>, vector<8x1xf32>
    %c48_133 = arith.constant 48 : index
    %c0_134 = arith.constant 0 : index
    %470 = vector.load %arg1[%c48_133, %c0_134] : memref<64x1xf32, #tpu.memory_space<vmem>>, vector<8x1xf32>
    %471 = vector.shape_cast %21 : vector<1x16xi1> to vector<1x16xi1>
    %472 = vector.broadcast %471 : vector<1x16xi1> to vector<8x16xi1>
    %473 = vector.shape_cast %469 : vector<8x1xf32> to vector<8x1xf32>
    %474 = vector.broadcast %473 : vector<8x1xf32> to vector<8x16xf32>
    %475 = vector.shape_cast %470 : vector<8x1xf32> to vector<8x1xf32>
    %476 = vector.broadcast %475 : vector<8x1xf32> to vector<8x16xf32>
    %477 = arith.select %472, %474, %476 : vector<8x16xi1>, vector<8x16xf32>
    %478 = arith.mulf %477, %468 : vector<8x16xf32>
    %cst_135 = arith.constant 1.000000e+00 : f32
    %479 = vector.broadcast %cst_135 : f32 to vector<8x16xf32>
    %480 = arith.subf %479, %477 : vector<8x16xf32>
    %481 = arith.mulf %480, %439 : vector<8x16xf32>
    %482 = arith.addf %478, %481 : vector<8x16xf32>
    %483 = arith.mulf %477, %466 : vector<8x16xf32>
    %cst_136 = arith.constant 1.000000e+00 : f32
    %484 = vector.broadcast %cst_136 : f32 to vector<8x16xf32>
    %485 = arith.subf %484, %477 : vector<8x16xf32>
    %486 = arith.mulf %485, %444 : vector<8x16xf32>
    %487 = arith.addf %483, %486 : vector<8x16xf32>
    %c16_137 = arith.constant 16 : index
    %c0_138 = arith.constant 0 : index
    %488 = vector.load %arg11[%c16_137, %c0_138] : memref<64x64xf32, #tpu.memory_space<vmem>>, vector<8x64xf32>
    %c40_139 = arith.constant 40 : index
    %c0_140 = arith.constant 0 : index
    %489 = vector.load %arg11[%c40_139, %c0_140] : memref<64x64xf32, #tpu.memory_space<vmem>>, vector<8x64xf32>
    %490 = vector.shape_cast %18 : vector<1x64xi1> to vector<1x64xi1>
    %491 = vector.broadcast %490 : vector<1x64xi1> to vector<8x64xi1>
    %492 = arith.select %491, %488, %489 : vector<8x64xi1>, vector<8x64xf32>
    %493 = arith.truncf %482 : vector<8x16xf32> to vector<8x16xbf16>
    %cst_141 = arith.constant dense<0.000000e+00> : vector<8x64xf32>
    %494 = tpu.matmul %493, %399, %cst_141 {dimension_numbers = #tpu.dot_dimension_numbers<[1], [0], [0], [1], [0, 0, 1, 1], [], []>} : vector<8x16xbf16>, vector<16x64xbf16>, vector<8x64xf32> -> vector<8x64xf32>
    %495 = arith.addf %492, %494 : vector<8x64xf32>
    %496 = vector.extract_strided_slice %495 {offsets = [0, 0], sizes = [8, 48], strides = [1, 1]} : vector<8x64xf32> to vector<8x48xf32>
    %497 = arith.negf %496 : vector<8x48xf32>
    %498 = math.exp %497 : vector<8x48xf32>
    %cst_142 = arith.constant 1.000000e+00 : f32
    %499 = vector.broadcast %cst_142 : f32 to vector<8x48xf32>
    %500 = arith.addf %499, %498 : vector<8x48xf32>
    %501 = arith.divf %499, %500 : vector<8x48xf32>
    %502 = vector.extract_strided_slice %501 {offsets = [0, 0], sizes = [8, 16], strides = [1, 1]} : vector<8x48xf32> to vector<8x16xf32>
    %503 = vector.extract_strided_slice %501 {offsets = [0, 16], sizes = [8, 16], strides = [1, 1]} : vector<8x48xf32> to vector<8x16xf32>
    %504 = vector.extract_strided_slice %501 {offsets = [0, 32], sizes = [8, 16], strides = [1, 1]} : vector<8x48xf32> to vector<8x16xf32>
    %505 = vector.extract_strided_slice %495 {offsets = [0, 48], sizes = [8, 16], strides = [1, 1]} : vector<8x64xf32> to vector<8x16xf32>
    %506 = math.tanh %505 : vector<8x16xf32>
    %507 = arith.mulf %503, %487 : vector<8x16xf32>
    %508 = arith.mulf %502, %506 : vector<8x16xf32>
    %509 = arith.addf %507, %508 : vector<8x16xf32>
    %510 = math.tanh %509 : vector<8x16xf32>
    %511 = arith.mulf %504, %510 : vector<8x16xf32>
    %c16_143 = arith.constant 16 : index
    %c0_144 = arith.constant 0 : index
    %512 = vector.load %arg1[%c16_143, %c0_144] : memref<64x1xf32, #tpu.memory_space<vmem>>, vector<8x1xf32>
    %c40_145 = arith.constant 40 : index
    %c0_146 = arith.constant 0 : index
    %513 = vector.load %arg1[%c40_145, %c0_146] : memref<64x1xf32, #tpu.memory_space<vmem>>, vector<8x1xf32>
    %514 = vector.shape_cast %21 : vector<1x16xi1> to vector<1x16xi1>
    %515 = vector.broadcast %514 : vector<1x16xi1> to vector<8x16xi1>
    %516 = vector.shape_cast %512 : vector<8x1xf32> to vector<8x1xf32>
    %517 = vector.broadcast %516 : vector<8x1xf32> to vector<8x16xf32>
    %518 = vector.shape_cast %513 : vector<8x1xf32> to vector<8x1xf32>
    %519 = vector.broadcast %518 : vector<8x1xf32> to vector<8x16xf32>
    %520 = arith.select %515, %517, %519 : vector<8x16xi1>, vector<8x16xf32>
    %521 = arith.mulf %520, %511 : vector<8x16xf32>
    %cst_147 = arith.constant 1.000000e+00 : f32
    %522 = vector.broadcast %cst_147 : f32 to vector<8x16xf32>
    %523 = arith.subf %522, %520 : vector<8x16xf32>
    %524 = arith.mulf %523, %482 : vector<8x16xf32>
    %525 = arith.addf %521, %524 : vector<8x16xf32>
    %526 = arith.mulf %520, %509 : vector<8x16xf32>
    %cst_148 = arith.constant 1.000000e+00 : f32
    %527 = vector.broadcast %cst_148 : f32 to vector<8x16xf32>
    %528 = arith.subf %527, %520 : vector<8x16xf32>
    %529 = arith.mulf %528, %487 : vector<8x16xf32>
    %530 = arith.addf %526, %529 : vector<8x16xf32>
    %c24_149 = arith.constant 24 : index
    %c0_150 = arith.constant 0 : index
    %531 = vector.load %arg11[%c24_149, %c0_150] : memref<64x64xf32, #tpu.memory_space<vmem>>, vector<8x64xf32>
    %c32_151 = arith.constant 32 : index
    %c0_152 = arith.constant 0 : index
    %532 = vector.load %arg11[%c32_151, %c0_152] : memref<64x64xf32, #tpu.memory_space<vmem>>, vector<8x64xf32>
    %533 = vector.shape_cast %18 : vector<1x64xi1> to vector<1x64xi1>
    %534 = vector.broadcast %533 : vector<1x64xi1> to vector<8x64xi1>
    %535 = arith.select %534, %531, %532 : vector<8x64xi1>, vector<8x64xf32>
    %536 = arith.truncf %525 : vector<8x16xf32> to vector<8x16xbf16>
    %cst_153 = arith.constant dense<0.000000e+00> : vector<8x64xf32>
    %537 = tpu.matmul %536, %399, %cst_153 {dimension_numbers = #tpu.dot_dimension_numbers<[1], [0], [0], [1], [0, 0, 1, 1], [], []>} : vector<8x16xbf16>, vector<16x64xbf16>, vector<8x64xf32> -> vector<8x64xf32>
    %538 = arith.addf %535, %537 : vector<8x64xf32>
    %539 = vector.extract_strided_slice %538 {offsets = [0, 0], sizes = [8, 48], strides = [1, 1]} : vector<8x64xf32> to vector<8x48xf32>
    %540 = arith.negf %539 : vector<8x48xf32>
    %541 = math.exp %540 : vector<8x48xf32>
    %cst_154 = arith.constant 1.000000e+00 : f32
    %542 = vector.broadcast %cst_154 : f32 to vector<8x48xf32>
    %543 = arith.addf %542, %541 : vector<8x48xf32>
    %544 = arith.divf %542, %543 : vector<8x48xf32>
    %545 = vector.extract_strided_slice %544 {offsets = [0, 0], sizes = [8, 16], strides = [1, 1]} : vector<8x48xf32> to vector<8x16xf32>
    %546 = vector.extract_strided_slice %544 {offsets = [0, 16], sizes = [8, 16], strides = [1, 1]} : vector<8x48xf32> to vector<8x16xf32>
    %547 = vector.extract_strided_slice %544 {offsets = [0, 32], sizes = [8, 16], strides = [1, 1]} : vector<8x48xf32> to vector<8x16xf32>
    %548 = vector.extract_strided_slice %538 {offsets = [0, 48], sizes = [8, 16], strides = [1, 1]} : vector<8x64xf32> to vector<8x16xf32>
    %549 = math.tanh %548 : vector<8x16xf32>
    %550 = arith.mulf %546, %530 : vector<8x16xf32>
    %551 = arith.mulf %545, %549 : vector<8x16xf32>
    %552 = arith.addf %550, %551 : vector<8x16xf32>
    %553 = math.tanh %552 : vector<8x16xf32>
    %554 = arith.mulf %547, %553 : vector<8x16xf32>
    %c24_155 = arith.constant 24 : index
    %c0_156 = arith.constant 0 : index
    %555 = vector.load %arg1[%c24_155, %c0_156] : memref<64x1xf32, #tpu.memory_space<vmem>>, vector<8x1xf32>
    %c32_157 = arith.constant 32 : index
    %c0_158 = arith.constant 0 : index
    %556 = vector.load %arg1[%c32_157, %c0_158] : memref<64x1xf32, #tpu.memory_space<vmem>>, vector<8x1xf32>
    %557 = vector.shape_cast %21 : vector<1x16xi1> to vector<1x16xi1>
    %558 = vector.broadcast %557 : vector<1x16xi1> to vector<8x16xi1>
    %559 = vector.shape_cast %555 : vector<8x1xf32> to vector<8x1xf32>
    %560 = vector.broadcast %559 : vector<8x1xf32> to vector<8x16xf32>
    %561 = vector.shape_cast %556 : vector<8x1xf32> to vector<8x1xf32>
    %562 = vector.broadcast %561 : vector<8x1xf32> to vector<8x16xf32>
    %563 = arith.select %558, %560, %562 : vector<8x16xi1>, vector<8x16xf32>
    %564 = arith.mulf %563, %554 : vector<8x16xf32>
    %cst_159 = arith.constant 1.000000e+00 : f32
    %565 = vector.broadcast %cst_159 : f32 to vector<8x16xf32>
    %566 = arith.subf %565, %563 : vector<8x16xf32>
    %567 = arith.mulf %566, %525 : vector<8x16xf32>
    %568 = arith.addf %564, %567 : vector<8x16xf32>
    %569 = arith.mulf %563, %552 : vector<8x16xf32>
    %cst_160 = arith.constant 1.000000e+00 : f32
    %570 = vector.broadcast %cst_160 : f32 to vector<8x16xf32>
    %571 = arith.subf %570, %563 : vector<8x16xf32>
    %572 = arith.mulf %571, %530 : vector<8x16xf32>
    %573 = arith.addf %569, %572 : vector<8x16xf32>
    %c32_161 = arith.constant 32 : index
    %c0_162 = arith.constant 0 : index
    %574 = vector.load %arg11[%c32_161, %c0_162] : memref<64x64xf32, #tpu.memory_space<vmem>>, vector<8x64xf32>
    %c24_163 = arith.constant 24 : index
    %c0_164 = arith.constant 0 : index
    %575 = vector.load %arg11[%c24_163, %c0_164] : memref<64x64xf32, #tpu.memory_space<vmem>>, vector<8x64xf32>
    %576 = vector.shape_cast %18 : vector<1x64xi1> to vector<1x64xi1>
    %577 = vector.broadcast %576 : vector<1x64xi1> to vector<8x64xi1>
    %578 = arith.select %577, %574, %575 : vector<8x64xi1>, vector<8x64xf32>
    %579 = arith.truncf %568 : vector<8x16xf32> to vector<8x16xbf16>
    %cst_165 = arith.constant dense<0.000000e+00> : vector<8x64xf32>
    %580 = tpu.matmul %579, %399, %cst_165 {dimension_numbers = #tpu.dot_dimension_numbers<[1], [0], [0], [1], [0, 0, 1, 1], [], []>} : vector<8x16xbf16>, vector<16x64xbf16>, vector<8x64xf32> -> vector<8x64xf32>
    %581 = arith.addf %578, %580 : vector<8x64xf32>
    %582 = vector.extract_strided_slice %581 {offsets = [0, 0], sizes = [8, 48], strides = [1, 1]} : vector<8x64xf32> to vector<8x48xf32>
    %583 = arith.negf %582 : vector<8x48xf32>
    %584 = math.exp %583 : vector<8x48xf32>
    %cst_166 = arith.constant 1.000000e+00 : f32
    %585 = vector.broadcast %cst_166 : f32 to vector<8x48xf32>
    %586 = arith.addf %585, %584 : vector<8x48xf32>
    %587 = arith.divf %585, %586 : vector<8x48xf32>
    %588 = vector.extract_strided_slice %587 {offsets = [0, 0], sizes = [8, 16], strides = [1, 1]} : vector<8x48xf32> to vector<8x16xf32>
    %589 = vector.extract_strided_slice %587 {offsets = [0, 16], sizes = [8, 16], strides = [1, 1]} : vector<8x48xf32> to vector<8x16xf32>
    %590 = vector.extract_strided_slice %587 {offsets = [0, 32], sizes = [8, 16], strides = [1, 1]} : vector<8x48xf32> to vector<8x16xf32>
    %591 = vector.extract_strided_slice %581 {offsets = [0, 48], sizes = [8, 16], strides = [1, 1]} : vector<8x64xf32> to vector<8x16xf32>
    %592 = math.tanh %591 : vector<8x16xf32>
    %593 = arith.mulf %589, %573 : vector<8x16xf32>
    %594 = arith.mulf %588, %592 : vector<8x16xf32>
    %595 = arith.addf %593, %594 : vector<8x16xf32>
    %596 = math.tanh %595 : vector<8x16xf32>
    %597 = arith.mulf %590, %596 : vector<8x16xf32>
    %c32_167 = arith.constant 32 : index
    %c0_168 = arith.constant 0 : index
    %598 = vector.load %arg1[%c32_167, %c0_168] : memref<64x1xf32, #tpu.memory_space<vmem>>, vector<8x1xf32>
    %c24_169 = arith.constant 24 : index
    %c0_170 = arith.constant 0 : index
    %599 = vector.load %arg1[%c24_169, %c0_170] : memref<64x1xf32, #tpu.memory_space<vmem>>, vector<8x1xf32>
    %600 = vector.shape_cast %21 : vector<1x16xi1> to vector<1x16xi1>
    %601 = vector.broadcast %600 : vector<1x16xi1> to vector<8x16xi1>
    %602 = vector.shape_cast %598 : vector<8x1xf32> to vector<8x1xf32>
    %603 = vector.broadcast %602 : vector<8x1xf32> to vector<8x16xf32>
    %604 = vector.shape_cast %599 : vector<8x1xf32> to vector<8x1xf32>
    %605 = vector.broadcast %604 : vector<8x1xf32> to vector<8x16xf32>
    %606 = arith.select %601, %603, %605 : vector<8x16xi1>, vector<8x16xf32>
    %607 = arith.mulf %606, %597 : vector<8x16xf32>
    %cst_171 = arith.constant 1.000000e+00 : f32
    %608 = vector.broadcast %cst_171 : f32 to vector<8x16xf32>
    %609 = arith.subf %608, %606 : vector<8x16xf32>
    %610 = arith.mulf %609, %568 : vector<8x16xf32>
    %611 = arith.addf %607, %610 : vector<8x16xf32>
    %612 = arith.mulf %606, %595 : vector<8x16xf32>
    %cst_172 = arith.constant 1.000000e+00 : f32
    %613 = vector.broadcast %cst_172 : f32 to vector<8x16xf32>
    %614 = arith.subf %613, %606 : vector<8x16xf32>
    %615 = arith.mulf %614, %573 : vector<8x16xf32>
    %616 = arith.addf %612, %615 : vector<8x16xf32>
    %c40_173 = arith.constant 40 : index
    %c0_174 = arith.constant 0 : index
    %617 = vector.load %arg11[%c40_173, %c0_174] : memref<64x64xf32, #tpu.memory_space<vmem>>, vector<8x64xf32>
    %c16_175 = arith.constant 16 : index
    %c0_176 = arith.constant 0 : index
    %618 = vector.load %arg11[%c16_175, %c0_176] : memref<64x64xf32, #tpu.memory_space<vmem>>, vector<8x64xf32>
    %619 = vector.shape_cast %18 : vector<1x64xi1> to vector<1x64xi1>
    %620 = vector.broadcast %619 : vector<1x64xi1> to vector<8x64xi1>
    %621 = arith.select %620, %617, %618 : vector<8x64xi1>, vector<8x64xf32>
    %622 = arith.truncf %611 : vector<8x16xf32> to vector<8x16xbf16>
    %cst_177 = arith.constant dense<0.000000e+00> : vector<8x64xf32>
    %623 = tpu.matmul %622, %399, %cst_177 {dimension_numbers = #tpu.dot_dimension_numbers<[1], [0], [0], [1], [0, 0, 1, 1], [], []>} : vector<8x16xbf16>, vector<16x64xbf16>, vector<8x64xf32> -> vector<8x64xf32>
    %624 = arith.addf %621, %623 : vector<8x64xf32>
    %625 = vector.extract_strided_slice %624 {offsets = [0, 0], sizes = [8, 48], strides = [1, 1]} : vector<8x64xf32> to vector<8x48xf32>
    %626 = arith.negf %625 : vector<8x48xf32>
    %627 = math.exp %626 : vector<8x48xf32>
    %cst_178 = arith.constant 1.000000e+00 : f32
    %628 = vector.broadcast %cst_178 : f32 to vector<8x48xf32>
    %629 = arith.addf %628, %627 : vector<8x48xf32>
    %630 = arith.divf %628, %629 : vector<8x48xf32>
    %631 = vector.extract_strided_slice %630 {offsets = [0, 0], sizes = [8, 16], strides = [1, 1]} : vector<8x48xf32> to vector<8x16xf32>
    %632 = vector.extract_strided_slice %630 {offsets = [0, 16], sizes = [8, 16], strides = [1, 1]} : vector<8x48xf32> to vector<8x16xf32>
    %633 = vector.extract_strided_slice %630 {offsets = [0, 32], sizes = [8, 16], strides = [1, 1]} : vector<8x48xf32> to vector<8x16xf32>
    %634 = vector.extract_strided_slice %624 {offsets = [0, 48], sizes = [8, 16], strides = [1, 1]} : vector<8x64xf32> to vector<8x16xf32>
    %635 = math.tanh %634 : vector<8x16xf32>
    %636 = arith.mulf %632, %616 : vector<8x16xf32>
    %637 = arith.mulf %631, %635 : vector<8x16xf32>
    %638 = arith.addf %636, %637 : vector<8x16xf32>
    %639 = math.tanh %638 : vector<8x16xf32>
    %640 = arith.mulf %633, %639 : vector<8x16xf32>
    %c40_179 = arith.constant 40 : index
    %c0_180 = arith.constant 0 : index
    %641 = vector.load %arg1[%c40_179, %c0_180] : memref<64x1xf32, #tpu.memory_space<vmem>>, vector<8x1xf32>
    %c16_181 = arith.constant 16 : index
    %c0_182 = arith.constant 0 : index
    %642 = vector.load %arg1[%c16_181, %c0_182] : memref<64x1xf32, #tpu.memory_space<vmem>>, vector<8x1xf32>
    %643 = vector.shape_cast %21 : vector<1x16xi1> to vector<1x16xi1>
    %644 = vector.broadcast %643 : vector<1x16xi1> to vector<8x16xi1>
    %645 = vector.shape_cast %641 : vector<8x1xf32> to vector<8x1xf32>
    %646 = vector.broadcast %645 : vector<8x1xf32> to vector<8x16xf32>
    %647 = vector.shape_cast %642 : vector<8x1xf32> to vector<8x1xf32>
    %648 = vector.broadcast %647 : vector<8x1xf32> to vector<8x16xf32>
    %649 = arith.select %644, %646, %648 : vector<8x16xi1>, vector<8x16xf32>
    %650 = arith.mulf %649, %640 : vector<8x16xf32>
    %cst_183 = arith.constant 1.000000e+00 : f32
    %651 = vector.broadcast %cst_183 : f32 to vector<8x16xf32>
    %652 = arith.subf %651, %649 : vector<8x16xf32>
    %653 = arith.mulf %652, %611 : vector<8x16xf32>
    %654 = arith.addf %650, %653 : vector<8x16xf32>
    %655 = arith.mulf %649, %638 : vector<8x16xf32>
    %cst_184 = arith.constant 1.000000e+00 : f32
    %656 = vector.broadcast %cst_184 : f32 to vector<8x16xf32>
    %657 = arith.subf %656, %649 : vector<8x16xf32>
    %658 = arith.mulf %657, %616 : vector<8x16xf32>
    %659 = arith.addf %655, %658 : vector<8x16xf32>
    %c48_185 = arith.constant 48 : index
    %c0_186 = arith.constant 0 : index
    %660 = vector.load %arg11[%c48_185, %c0_186] : memref<64x64xf32, #tpu.memory_space<vmem>>, vector<8x64xf32>
    %c8_187 = arith.constant 8 : index
    %c0_188 = arith.constant 0 : index
    %661 = vector.load %arg11[%c8_187, %c0_188] : memref<64x64xf32, #tpu.memory_space<vmem>>, vector<8x64xf32>
    %662 = vector.shape_cast %18 : vector<1x64xi1> to vector<1x64xi1>
    %663 = vector.broadcast %662 : vector<1x64xi1> to vector<8x64xi1>
    %664 = arith.select %663, %660, %661 : vector<8x64xi1>, vector<8x64xf32>
    %665 = arith.truncf %654 : vector<8x16xf32> to vector<8x16xbf16>
    %cst_189 = arith.constant dense<0.000000e+00> : vector<8x64xf32>
    %666 = tpu.matmul %665, %399, %cst_189 {dimension_numbers = #tpu.dot_dimension_numbers<[1], [0], [0], [1], [0, 0, 1, 1], [], []>} : vector<8x16xbf16>, vector<16x64xbf16>, vector<8x64xf32> -> vector<8x64xf32>
    %667 = arith.addf %664, %666 : vector<8x64xf32>
    %668 = vector.extract_strided_slice %667 {offsets = [0, 0], sizes = [8, 48], strides = [1, 1]} : vector<8x64xf32> to vector<8x48xf32>
    %669 = arith.negf %668 : vector<8x48xf32>
    %670 = math.exp %669 : vector<8x48xf32>
    %cst_190 = arith.constant 1.000000e+00 : f32
    %671 = vector.broadcast %cst_190 : f32 to vector<8x48xf32>
    %672 = arith.addf %671, %670 : vector<8x48xf32>
    %673 = arith.divf %671, %672 : vector<8x48xf32>
    %674 = vector.extract_strided_slice %673 {offsets = [0, 0], sizes = [8, 16], strides = [1, 1]} : vector<8x48xf32> to vector<8x16xf32>
    %675 = vector.extract_strided_slice %673 {offsets = [0, 16], sizes = [8, 16], strides = [1, 1]} : vector<8x48xf32> to vector<8x16xf32>
    %676 = vector.extract_strided_slice %673 {offsets = [0, 32], sizes = [8, 16], strides = [1, 1]} : vector<8x48xf32> to vector<8x16xf32>
    %677 = vector.extract_strided_slice %667 {offsets = [0, 48], sizes = [8, 16], strides = [1, 1]} : vector<8x64xf32> to vector<8x16xf32>
    %678 = math.tanh %677 : vector<8x16xf32>
    %679 = arith.mulf %675, %659 : vector<8x16xf32>
    %680 = arith.mulf %674, %678 : vector<8x16xf32>
    %681 = arith.addf %679, %680 : vector<8x16xf32>
    %682 = math.tanh %681 : vector<8x16xf32>
    %683 = arith.mulf %676, %682 : vector<8x16xf32>
    %c48_191 = arith.constant 48 : index
    %c0_192 = arith.constant 0 : index
    %684 = vector.load %arg1[%c48_191, %c0_192] : memref<64x1xf32, #tpu.memory_space<vmem>>, vector<8x1xf32>
    %c8_193 = arith.constant 8 : index
    %c0_194 = arith.constant 0 : index
    %685 = vector.load %arg1[%c8_193, %c0_194] : memref<64x1xf32, #tpu.memory_space<vmem>>, vector<8x1xf32>
    %686 = vector.shape_cast %21 : vector<1x16xi1> to vector<1x16xi1>
    %687 = vector.broadcast %686 : vector<1x16xi1> to vector<8x16xi1>
    %688 = vector.shape_cast %684 : vector<8x1xf32> to vector<8x1xf32>
    %689 = vector.broadcast %688 : vector<8x1xf32> to vector<8x16xf32>
    %690 = vector.shape_cast %685 : vector<8x1xf32> to vector<8x1xf32>
    %691 = vector.broadcast %690 : vector<8x1xf32> to vector<8x16xf32>
    %692 = arith.select %687, %689, %691 : vector<8x16xi1>, vector<8x16xf32>
    %693 = arith.mulf %692, %683 : vector<8x16xf32>
    %cst_195 = arith.constant 1.000000e+00 : f32
    %694 = vector.broadcast %cst_195 : f32 to vector<8x16xf32>
    %695 = arith.subf %694, %692 : vector<8x16xf32>
    %696 = arith.mulf %695, %654 : vector<8x16xf32>
    %697 = arith.addf %693, %696 : vector<8x16xf32>
    %698 = arith.mulf %692, %681 : vector<8x16xf32>
    %cst_196 = arith.constant 1.000000e+00 : f32
    %699 = vector.broadcast %cst_196 : f32 to vector<8x16xf32>
    %700 = arith.subf %699, %692 : vector<8x16xf32>
    %701 = arith.mulf %700, %659 : vector<8x16xf32>
    %702 = arith.addf %698, %701 : vector<8x16xf32>
    %c56_197 = arith.constant 56 : index
    %c0_198 = arith.constant 0 : index
    %703 = vector.load %arg11[%c56_197, %c0_198] : memref<64x64xf32, #tpu.memory_space<vmem>>, vector<8x64xf32>
    %c0_199 = arith.constant 0 : index
    %c0_200 = arith.constant 0 : index
    %704 = vector.load %arg11[%c0_199, %c0_200] : memref<64x64xf32, #tpu.memory_space<vmem>>, vector<8x64xf32>
    %705 = vector.shape_cast %18 : vector<1x64xi1> to vector<1x64xi1>
    %706 = vector.broadcast %705 : vector<1x64xi1> to vector<8x64xi1>
    %707 = arith.select %706, %703, %704 : vector<8x64xi1>, vector<8x64xf32>
    %708 = arith.truncf %697 : vector<8x16xf32> to vector<8x16xbf16>
    %cst_201 = arith.constant dense<0.000000e+00> : vector<8x64xf32>
    %709 = tpu.matmul %708, %399, %cst_201 {dimension_numbers = #tpu.dot_dimension_numbers<[1], [0], [0], [1], [0, 0, 1, 1], [], []>} : vector<8x16xbf16>, vector<16x64xbf16>, vector<8x64xf32> -> vector<8x64xf32>
    %710 = arith.addf %707, %709 : vector<8x64xf32>
    %711 = vector.extract_strided_slice %710 {offsets = [0, 0], sizes = [8, 48], strides = [1, 1]} : vector<8x64xf32> to vector<8x48xf32>
    %712 = arith.negf %711 : vector<8x48xf32>
    %713 = math.exp %712 : vector<8x48xf32>
    %cst_202 = arith.constant 1.000000e+00 : f32
    %714 = vector.broadcast %cst_202 : f32 to vector<8x48xf32>
    %715 = arith.addf %714, %713 : vector<8x48xf32>
    %716 = arith.divf %714, %715 : vector<8x48xf32>
    %717 = vector.extract_strided_slice %716 {offsets = [0, 0], sizes = [8, 16], strides = [1, 1]} : vector<8x48xf32> to vector<8x16xf32>
    %718 = vector.extract_strided_slice %716 {offsets = [0, 16], sizes = [8, 16], strides = [1, 1]} : vector<8x48xf32> to vector<8x16xf32>
    %719 = vector.extract_strided_slice %716 {offsets = [0, 32], sizes = [8, 16], strides = [1, 1]} : vector<8x48xf32> to vector<8x16xf32>
    %720 = vector.extract_strided_slice %710 {offsets = [0, 48], sizes = [8, 16], strides = [1, 1]} : vector<8x64xf32> to vector<8x16xf32>
    %721 = math.tanh %720 : vector<8x16xf32>
    %722 = arith.mulf %718, %702 : vector<8x16xf32>
    %723 = arith.mulf %717, %721 : vector<8x16xf32>
    %724 = arith.addf %722, %723 : vector<8x16xf32>
    %725 = math.tanh %724 : vector<8x16xf32>
    %726 = arith.mulf %719, %725 : vector<8x16xf32>
    %c56_203 = arith.constant 56 : index
    %c0_204 = arith.constant 0 : index
    %727 = vector.load %arg1[%c56_203, %c0_204] : memref<64x1xf32, #tpu.memory_space<vmem>>, vector<8x1xf32>
    %c0_205 = arith.constant 0 : index
    %c0_206 = arith.constant 0 : index
    %728 = vector.load %arg1[%c0_205, %c0_206] : memref<64x1xf32, #tpu.memory_space<vmem>>, vector<8x1xf32>
    %729 = vector.shape_cast %21 : vector<1x16xi1> to vector<1x16xi1>
    %730 = vector.broadcast %729 : vector<1x16xi1> to vector<8x16xi1>
    %731 = vector.shape_cast %727 : vector<8x1xf32> to vector<8x1xf32>
    %732 = vector.broadcast %731 : vector<8x1xf32> to vector<8x16xf32>
    %733 = vector.shape_cast %728 : vector<8x1xf32> to vector<8x1xf32>
    %734 = vector.broadcast %733 : vector<8x1xf32> to vector<8x16xf32>
    %735 = arith.select %730, %732, %734 : vector<8x16xi1>, vector<8x16xf32>
    %736 = arith.mulf %735, %726 : vector<8x16xf32>
    %c0_207 = arith.constant 0 : index
    %c0_208 = arith.constant 0 : index
    %737 = vector.load %arg8[%c0_207, %c0_208] : memref<16x8xbf16, #tpu.memory_space<vmem>>, vector<16x8xbf16>
    %c0_209 = arith.constant 0 : index
    %c0_210 = arith.constant 0 : index
    %738 = vector.load %arg9[%c0_209, %c0_210] : memref<1x8xf32, #tpu.memory_space<vmem>>, vector<1x8xf32>
    %739 = vector.shape_cast %21 : vector<1x16xi1> to vector<1x16xi1>
    %740 = vector.broadcast %739 : vector<1x16xi1> to vector<8x16xi1>
    %741 = arith.select %740, %435, %736 : vector<8x16xi1>, vector<8x16xf32>
    %742 = arith.truncf %741 : vector<8x16xf32> to vector<8x16xbf16>
    %cst_211 = arith.constant dense<0.000000e+00> : vector<8x8xf32>
    %743 = tpu.matmul %742, %737, %cst_211 {dimension_numbers = #tpu.dot_dimension_numbers<[1], [0], [0], [1], [0, 0, 1, 1], [], []>} : vector<8x16xbf16>, vector<16x8xbf16>, vector<8x8xf32> -> vector<8x8xf32>
    %744 = vector.broadcast %738 : vector<1x8xf32> to vector<8x8xf32>
    %745 = arith.addf %743, %744 : vector<8x8xf32>
    %cst_212 = arith.constant dense<0xFF800000> : vector<8xf32>
    %746 = vector.multi_reduction <maximumf>, %745, %cst_212 [1] : vector<8x8xf32> to vector<8xf32>
    %747 = vector.shape_cast %746 : vector<8xf32> to vector<8x1xf32>
    %748 = vector.broadcast %747 : vector<8x1xf32> to vector<8x8xf32>
    %749 = arith.subf %745, %748 : vector<8x8xf32>
    %750 = math.exp %749 : vector<8x8xf32>
    %cst_213 = arith.constant dense<0.000000e+00> : vector<8xf32>
    %751 = vector.multi_reduction <add>, %750, %cst_213 [1] : vector<8x8xf32> to vector<8xf32>
    %752 = vector.shape_cast %751 : vector<8xf32> to vector<8x1xf32>
    %753 = tpu.reciprocal %752 {approx = true} : vector<8x1xf32> -> vector<8x1xf32>
    %754 = vector.broadcast %753 : vector<8x1xf32> to vector<8x8xf32>
    %755 = arith.mulf %750, %754 : vector<8x8xf32>
    %756 = vector.shape_cast %21 : vector<1x16xi1> to vector<1x16xi1>
    %757 = vector.broadcast %756 : vector<1x16xi1> to vector<8x16xi1>
    %758 = arith.select %757, %478, %693 : vector<8x16xi1>, vector<8x16xf32>
    %759 = arith.truncf %758 : vector<8x16xf32> to vector<8x16xbf16>
    %cst_214 = arith.constant dense<0.000000e+00> : vector<8x8xf32>
    %760 = tpu.matmul %759, %737, %cst_214 {dimension_numbers = #tpu.dot_dimension_numbers<[1], [0], [0], [1], [0, 0, 1, 1], [], []>} : vector<8x16xbf16>, vector<16x8xbf16>, vector<8x8xf32> -> vector<8x8xf32>
    %761 = vector.broadcast %738 : vector<1x8xf32> to vector<8x8xf32>
    %762 = arith.addf %760, %761 : vector<8x8xf32>
    %cst_215 = arith.constant dense<0xFF800000> : vector<8xf32>
    %763 = vector.multi_reduction <maximumf>, %762, %cst_215 [1] : vector<8x8xf32> to vector<8xf32>
    %764 = vector.shape_cast %763 : vector<8xf32> to vector<8x1xf32>
    %765 = vector.broadcast %764 : vector<8x1xf32> to vector<8x8xf32>
    %766 = arith.subf %762, %765 : vector<8x8xf32>
    %767 = math.exp %766 : vector<8x8xf32>
    %cst_216 = arith.constant dense<0.000000e+00> : vector<8xf32>
    %768 = vector.multi_reduction <add>, %767, %cst_216 [1] : vector<8x8xf32> to vector<8xf32>
    %769 = vector.shape_cast %768 : vector<8xf32> to vector<8x1xf32>
    %770 = tpu.reciprocal %769 {approx = true} : vector<8x1xf32> -> vector<8x1xf32>
    %771 = vector.broadcast %770 : vector<8x1xf32> to vector<8x8xf32>
    %772 = arith.mulf %767, %771 : vector<8x8xf32>
    %773 = vector.shape_cast %21 : vector<1x16xi1> to vector<1x16xi1>
    %774 = vector.broadcast %773 : vector<1x16xi1> to vector<8x16xi1>
    %775 = arith.select %774, %521, %650 : vector<8x16xi1>, vector<8x16xf32>
    %776 = arith.truncf %775 : vector<8x16xf32> to vector<8x16xbf16>
    %cst_217 = arith.constant dense<0.000000e+00> : vector<8x8xf32>
    %777 = tpu.matmul %776, %737, %cst_217 {dimension_numbers = #tpu.dot_dimension_numbers<[1], [0], [0], [1], [0, 0, 1, 1], [], []>} : vector<8x16xbf16>, vector<16x8xbf16>, vector<8x8xf32> -> vector<8x8xf32>
    %778 = vector.broadcast %738 : vector<1x8xf32> to vector<8x8xf32>
    %779 = arith.addf %777, %778 : vector<8x8xf32>
    %cst_218 = arith.constant dense<0xFF800000> : vector<8xf32>
    %780 = vector.multi_reduction <maximumf>, %779, %cst_218 [1] : vector<8x8xf32> to vector<8xf32>
    %781 = vector.shape_cast %780 : vector<8xf32> to vector<8x1xf32>
    %782 = vector.broadcast %781 : vector<8x1xf32> to vector<8x8xf32>
    %783 = arith.subf %779, %782 : vector<8x8xf32>
    %784 = math.exp %783 : vector<8x8xf32>
    %cst_219 = arith.constant dense<0.000000e+00> : vector<8xf32>
    %785 = vector.multi_reduction <add>, %784, %cst_219 [1] : vector<8x8xf32> to vector<8xf32>
    %786 = vector.shape_cast %785 : vector<8xf32> to vector<8x1xf32>
    %787 = tpu.reciprocal %786 {approx = true} : vector<8x1xf32> -> vector<8x1xf32>
    %788 = vector.broadcast %787 : vector<8x1xf32> to vector<8x8xf32>
    %789 = arith.mulf %784, %788 : vector<8x8xf32>
    %790 = vector.shape_cast %21 : vector<1x16xi1> to vector<1x16xi1>
    %791 = vector.broadcast %790 : vector<1x16xi1> to vector<8x16xi1>
    %792 = arith.select %791, %564, %607 : vector<8x16xi1>, vector<8x16xf32>
    %793 = arith.truncf %792 : vector<8x16xf32> to vector<8x16xbf16>
    %cst_220 = arith.constant dense<0.000000e+00> : vector<8x8xf32>
    %794 = tpu.matmul %793, %737, %cst_220 {dimension_numbers = #tpu.dot_dimension_numbers<[1], [0], [0], [1], [0, 0, 1, 1], [], []>} : vector<8x16xbf16>, vector<16x8xbf16>, vector<8x8xf32> -> vector<8x8xf32>
    %795 = vector.broadcast %738 : vector<1x8xf32> to vector<8x8xf32>
    %796 = arith.addf %794, %795 : vector<8x8xf32>
    %cst_221 = arith.constant dense<0xFF800000> : vector<8xf32>
    %797 = vector.multi_reduction <maximumf>, %796, %cst_221 [1] : vector<8x8xf32> to vector<8xf32>
    %798 = vector.shape_cast %797 : vector<8xf32> to vector<8x1xf32>
    %799 = vector.broadcast %798 : vector<8x1xf32> to vector<8x8xf32>
    %800 = arith.subf %796, %799 : vector<8x8xf32>
    %801 = math.exp %800 : vector<8x8xf32>
    %cst_222 = arith.constant dense<0.000000e+00> : vector<8xf32>
    %802 = vector.multi_reduction <add>, %801, %cst_222 [1] : vector<8x8xf32> to vector<8xf32>
    %803 = vector.shape_cast %802 : vector<8xf32> to vector<8x1xf32>
    %804 = tpu.reciprocal %803 {approx = true} : vector<8x1xf32> -> vector<8x1xf32>
    %805 = vector.broadcast %804 : vector<8x1xf32> to vector<8x8xf32>
    %806 = arith.mulf %801, %805 : vector<8x8xf32>
    %807 = vector.shape_cast %21 : vector<1x16xi1> to vector<1x16xi1>
    %808 = vector.broadcast %807 : vector<1x16xi1> to vector<8x16xi1>
    %809 = arith.select %808, %607, %564 : vector<8x16xi1>, vector<8x16xf32>
    %810 = arith.truncf %809 : vector<8x16xf32> to vector<8x16xbf16>
    %cst_223 = arith.constant dense<0.000000e+00> : vector<8x8xf32>
    %811 = tpu.matmul %810, %737, %cst_223 {dimension_numbers = #tpu.dot_dimension_numbers<[1], [0], [0], [1], [0, 0, 1, 1], [], []>} : vector<8x16xbf16>, vector<16x8xbf16>, vector<8x8xf32> -> vector<8x8xf32>
    %812 = vector.broadcast %738 : vector<1x8xf32> to vector<8x8xf32>
    %813 = arith.addf %811, %812 : vector<8x8xf32>
    %cst_224 = arith.constant dense<0xFF800000> : vector<8xf32>
    %814 = vector.multi_reduction <maximumf>, %813, %cst_224 [1] : vector<8x8xf32> to vector<8xf32>
    %815 = vector.shape_cast %814 : vector<8xf32> to vector<8x1xf32>
    %816 = vector.broadcast %815 : vector<8x1xf32> to vector<8x8xf32>
    %817 = arith.subf %813, %816 : vector<8x8xf32>
    %818 = math.exp %817 : vector<8x8xf32>
    %cst_225 = arith.constant dense<0.000000e+00> : vector<8xf32>
    %819 = vector.multi_reduction <add>, %818, %cst_225 [1] : vector<8x8xf32> to vector<8xf32>
    %820 = vector.shape_cast %819 : vector<8xf32> to vector<8x1xf32>
    %821 = tpu.reciprocal %820 {approx = true} : vector<8x1xf32> -> vector<8x1xf32>
    %822 = vector.broadcast %821 : vector<8x1xf32> to vector<8x8xf32>
    %823 = arith.mulf %818, %822 : vector<8x8xf32>
    %824 = vector.shape_cast %21 : vector<1x16xi1> to vector<1x16xi1>
    %825 = vector.broadcast %824 : vector<1x16xi1> to vector<8x16xi1>
    %826 = arith.select %825, %650, %521 : vector<8x16xi1>, vector<8x16xf32>
    %827 = arith.truncf %826 : vector<8x16xf32> to vector<8x16xbf16>
    %cst_226 = arith.constant dense<0.000000e+00> : vector<8x8xf32>
    %828 = tpu.matmul %827, %737, %cst_226 {dimension_numbers = #tpu.dot_dimension_numbers<[1], [0], [0], [1], [0, 0, 1, 1], [], []>} : vector<8x16xbf16>, vector<16x8xbf16>, vector<8x8xf32> -> vector<8x8xf32>
    %829 = vector.broadcast %738 : vector<1x8xf32> to vector<8x8xf32>
    %830 = arith.addf %828, %829 : vector<8x8xf32>
    %cst_227 = arith.constant dense<0xFF800000> : vector<8xf32>
    %831 = vector.multi_reduction <maximumf>, %830, %cst_227 [1] : vector<8x8xf32> to vector<8xf32>
    %832 = vector.shape_cast %831 : vector<8xf32> to vector<8x1xf32>
    %833 = vector.broadcast %832 : vector<8x1xf32> to vector<8x8xf32>
    %834 = arith.subf %830, %833 : vector<8x8xf32>
    %835 = math.exp %834 : vector<8x8xf32>
    %cst_228 = arith.constant dense<0.000000e+00> : vector<8xf32>
    %836 = vector.multi_reduction <add>, %835, %cst_228 [1] : vector<8x8xf32> to vector<8xf32>
    %837 = vector.shape_cast %836 : vector<8xf32> to vector<8x1xf32>
    %838 = tpu.reciprocal %837 {approx = true} : vector<8x1xf32> -> vector<8x1xf32>
    %839 = vector.broadcast %838 : vector<8x1xf32> to vector<8x8xf32>
    %840 = arith.mulf %835, %839 : vector<8x8xf32>
    %841 = vector.shape_cast %21 : vector<1x16xi1> to vector<1x16xi1>
    %842 = vector.broadcast %841 : vector<1x16xi1> to vector<8x16xi1>
    %843 = arith.select %842, %693, %478 : vector<8x16xi1>, vector<8x16xf32>
    %844 = arith.truncf %843 : vector<8x16xf32> to vector<8x16xbf16>
    %cst_229 = arith.constant dense<0.000000e+00> : vector<8x8xf32>
    %845 = tpu.matmul %844, %737, %cst_229 {dimension_numbers = #tpu.dot_dimension_numbers<[1], [0], [0], [1], [0, 0, 1, 1], [], []>} : vector<8x16xbf16>, vector<16x8xbf16>, vector<8x8xf32> -> vector<8x8xf32>
    %846 = vector.broadcast %738 : vector<1x8xf32> to vector<8x8xf32>
    %847 = arith.addf %845, %846 : vector<8x8xf32>
    %cst_230 = arith.constant dense<0xFF800000> : vector<8xf32>
    %848 = vector.multi_reduction <maximumf>, %847, %cst_230 [1] : vector<8x8xf32> to vector<8xf32>
    %849 = vector.shape_cast %848 : vector<8xf32> to vector<8x1xf32>
    %850 = vector.broadcast %849 : vector<8x1xf32> to vector<8x8xf32>
    %851 = arith.subf %847, %850 : vector<8x8xf32>
    %852 = math.exp %851 : vector<8x8xf32>
    %cst_231 = arith.constant dense<0.000000e+00> : vector<8xf32>
    %853 = vector.multi_reduction <add>, %852, %cst_231 [1] : vector<8x8xf32> to vector<8xf32>
    %854 = vector.shape_cast %853 : vector<8xf32> to vector<8x1xf32>
    %855 = tpu.reciprocal %854 {approx = true} : vector<8x1xf32> -> vector<8x1xf32>
    %856 = vector.broadcast %855 : vector<8x1xf32> to vector<8x8xf32>
    %857 = arith.mulf %852, %856 : vector<8x8xf32>
    %858 = vector.shape_cast %21 : vector<1x16xi1> to vector<1x16xi1>
    %859 = vector.broadcast %858 : vector<1x16xi1> to vector<8x16xi1>
    %860 = arith.select %859, %736, %435 : vector<8x16xi1>, vector<8x16xf32>
    %861 = arith.truncf %860 : vector<8x16xf32> to vector<8x16xbf16>
    %cst_232 = arith.constant dense<0.000000e+00> : vector<8x8xf32>
    %862 = tpu.matmul %861, %737, %cst_232 {dimension_numbers = #tpu.dot_dimension_numbers<[1], [0], [0], [1], [0, 0, 1, 1], [], []>} : vector<8x16xbf16>, vector<16x8xbf16>, vector<8x8xf32> -> vector<8x8xf32>
    %863 = vector.broadcast %738 : vector<1x8xf32> to vector<8x8xf32>
    %864 = arith.addf %862, %863 : vector<8x8xf32>
    %cst_233 = arith.constant dense<0xFF800000> : vector<8xf32>
    %865 = vector.multi_reduction <maximumf>, %864, %cst_233 [1] : vector<8x8xf32> to vector<8xf32>
    %866 = vector.shape_cast %865 : vector<8xf32> to vector<8x1xf32>
    %867 = vector.broadcast %866 : vector<8x1xf32> to vector<8x8xf32>
    %868 = arith.subf %864, %867 : vector<8x8xf32>
    %869 = math.exp %868 : vector<8x8xf32>
    %cst_234 = arith.constant dense<0.000000e+00> : vector<8xf32>
    %870 = vector.multi_reduction <add>, %869, %cst_234 [1] : vector<8x8xf32> to vector<8xf32>
    %871 = vector.shape_cast %870 : vector<8xf32> to vector<8x1xf32>
    %872 = tpu.reciprocal %871 {approx = true} : vector<8x1xf32> -> vector<8x1xf32>
    %873 = vector.broadcast %872 : vector<8x1xf32> to vector<8x8xf32>
    %874 = arith.mulf %869, %873 : vector<8x8xf32>
    %875 = tpu.concatenate %745, %755, %762, %772, %779, %789, %796, %806, %813, %823, %830, %840, %847, %857, %864, %874 in 1 : vector<8x8xf32>, vector<8x8xf32>, vector<8x8xf32>, vector<8x8xf32>, vector<8x8xf32>, vector<8x8xf32>, vector<8x8xf32>, vector<8x8xf32>, vector<8x8xf32>, vector<8x8xf32>, vector<8x8xf32>, vector<8x8xf32>, vector<8x8xf32>, vector<8x8xf32>, vector<8x8xf32>, vector<8x8xf32> -> vector<8x128xf32>
    %c0_235 = arith.constant 0 : index
    %c0_236 = arith.constant 0 : index
    %876 = vector.load %arg10[%c0_235, %c0_236] : memref<8x128xf32, #tpu.memory_space<vmem>>, vector<8x128xf32>
    tpu.vector_store %arg10[%c0_235, %c0_236], %875 {strides = array<i32>} : memref<8x128xf32, #tpu.memory_space<vmem>>, vector<8x128xf32>,
    return
  }
}

</mosaic_0001>

<llo_original>
// kernel: forward_device.1
$region0: #{forward_device.1}
  #allocation0 [shape = 'u32[]', space=smem, size = 0x4, offset = 0x4, fixed_abs, tag = 'smem constant byte address 0x4 - core index']
  #allocation1 [shape = 'u32[72,128]{1,0:T(1,128)}', space=vmem, size = 0x9000, scoped, tag = 'internal scratch']
  #allocation2 [shape = 'f32[64,64]{1,0:T(8,128)}', space=vmem, size = 0x8000, scoped, tag = 'scratch operand']
  %s0 = inlined_call_operand.vmem [shape: bf16[64,37], index: 0, kind: input, shape index: {}]
  %s1 = inlined_call_operand.vmem [shape: f32[64,1], index: 1, kind: input, shape index: {}]
  %s2 = inlined_call_operand.vmem [shape: bf16[37,64], index: 2, kind: input, shape index: {}]
  %s3 = inlined_call_operand.vmem [shape: bf16[16,64], index: 3, kind: input, shape index: {}]
  %s4 = inlined_call_operand.vmem [shape: f32[1,64], index: 4, kind: input, shape index: {}]
  %s5 = inlined_call_operand.vmem [shape: bf16[16,64], index: 5, kind: input, shape index: {}]
  %s6 = inlined_call_operand.vmem [shape: bf16[16,64], index: 6, kind: input, shape index: {}]
  %s7 = inlined_call_operand.vmem [shape: f32[1,64], index: 7, kind: input, shape index: {}]
  %s8 = inlined_call_operand.vmem [shape: bf16[16,8], index: 8, kind: input, shape index: {}]
  %s9 = inlined_call_operand.vmem [shape: f32[1,8], index: 9, kind: input, shape index: {}]
  %s10 = inlined_call_operand.vmem [shape: f32[8,128], index: 10, kind: output, shape index: {}]
  %s11 = sld [smem:[#allocation0]]
  $region50: #{forward_device.1} parent=0
    _
  %s13 = ssub.s32 1, %s11
  %s14 = scalar_select 0, %s13, %s11
  // Predicated region
  $region2: #{forward_device.1} parent=0 // pred_check
    _
  $region3: #{forward_device.1} parent=0 // pred_check_branch
    %16 = sbr.rel (0) target = $region5
  $region4: #{forward_device.1} parent=0 // pred_region
    _
  $region5: #{forward_device.1} parent=0 // pred_fallthru
    _
  // Predicated region
  $region6: #{forward_device.1} parent=0 // pred_check
    _
  $region7: #{forward_device.1} parent=0 // pred_check_branch
    %18 = sbr.rel (0) target = $region9
  $region8: #{forward_device.1} parent=0 // pred_region
    _
  $region9: #{forward_device.1} parent=0 // pred_fallthru
    _
  // Predicated region
  $region10: #{forward_device.1} parent=0 // pred_check
    _
  $region11: #{forward_device.1} parent=0 // pred_check_branch
    %20 = sbr.rel (0) target = $region13
  $region12: #{forward_device.1} parent=0 // pred_region
    _
  $region13: #{forward_device.1} parent=0 // pred_fallthru
    _
  // Predicated region
  $region14: #{forward_device.1} parent=0 // pred_check
    _
  $region15: #{forward_device.1} parent=0 // pred_check_branch
    %22 = sbr.rel (0) target = $region17
  $region16: #{forward_device.1} parent=0 // pred_region
    _
  $region17: #{forward_device.1} parent=0 // pred_fallthru
    _
  // Predicated region
  $region18: #{forward_device.1} parent=0 // pred_check
    _
  $region19: #{forward_device.1} parent=0 // pred_check_branch
    %24 = sbr.rel (0) target = $region21
  $region20: #{forward_device.1} parent=0 // pred_region
    _
  $region21: #{forward_device.1} parent=0 // pred_fallthru
    _
  // Predicated region
  $region22: #{forward_device.1} parent=0 // pred_check
    _
  $region23: #{forward_device.1} parent=0 // pred_check_branch
    %26 = sbr.rel (0) target = $region25
  $region24: #{forward_device.1} parent=0 // pred_region
    _
  $region25: #{forward_device.1} parent=0 // pred_fallthru
    _
  // Predicated region
  $region26: #{forward_device.1} parent=0 // pred_check
    _
  $region27: #{forward_device.1} parent=0 // pred_check_branch
    %28 = sbr.rel (0) target = $region29
  $region28: #{forward_device.1} parent=0 // pred_region
    _
  $region29: #{forward_device.1} parent=0 // pred_fallthru
    _
  // Predicated region
  $region30: #{forward_device.1} parent=0 // pred_check
    _
  $region31: #{forward_device.1} parent=0 // pred_check_branch
    %30 = sbr.rel (0) target = $region33
  $region32: #{forward_device.1} parent=0 // pred_region
    _
  $region33: #{forward_device.1} parent=0 // pred_fallthru
    _
  // Predicated region
  $region34: #{forward_device.1} parent=0 // pred_check
    _
  $region35: #{forward_device.1} parent=0 // pred_check_branch
    %32 = sbr.rel (0) target = $region37
  $region36: #{forward_device.1} parent=0 // pred_region
    _
  $region37: #{forward_device.1} parent=0 // pred_fallthru
    _
  // Predicated region
  $region38: #{forward_device.1} parent=0 // pred_check
    _
  $region39: #{forward_device.1} parent=0 // pred_check_branch
    %34 = sbr.rel (0) target = $region41
  $region40: #{forward_device.1} parent=0 // pred_region
    _
  $region41: #{forward_device.1} parent=0 // pred_fallthru
    _
  %v36 = vlaneseq
  %v37 = vand.u32 %v36, 127
  %vm38 = vcmp.lt.s32.totalorder %v37, 0
  %v39 = vsub.s32 0, %v37
  %v40 = vsel %vm38, %v39, %v37
  %v41 = vshrl.u32 %v40, 4
  %v42 = vand.u32 %v40, 15
  %v43 = vsub.s32 0, %v42
  %v44 = vsel %vm38, %v43, %v42
  %vm45 = vcmp.ne.s32.totalorder %v44, 0
  %vm46 = vcmp.lt.s32.totalorder %v44, 0
  %vm47 = vmand %vm46, %vm45
  %v48 = vadd.s32 %v44, 16
  %v49 = vsel %vm47, %v48, %v44
  %vm50 = vcmp.lt.s32.totalorder %v49, 8
  %vm51 = vcmp.lt.s32.totalorder %v37, 8
  %v52 = vld [vmem:[%s0] sm:$0xf]
  %v53 = vld [vmem:[%s0 + $0x4] sm:$0xf]
  %v54 = vld [vmem:[%s0 + $0x8] sm:$0xf]
  %v55 = vld [vmem:[%s0 + $0xc] sm:$0xf]
  %v56 = vld [vmem:[%s0 + $0x10] sm:$0xf]
  %v57 = vld [vmem:[%s0 + $0x14] sm:$0xf]
  %v58 = vld [vmem:[%s0 + $0x18] sm:$0xf]
  %v59 = vld [vmem:[%s0 + $0x1c] sm:$0xf]
  %v60 = vld [vmem:[%s2] sm:$0xf]
  %v61 = vld [vmem:[%s2 + $0x4] sm:$0xf]
  %v62 = vld [vmem:[%s2 + $0x8] sm:$0xf]
  %v63 = vld [vmem:[%s2 + $0xc] sm:$0xf]
  %v64 = vld [vmem:[%s2 + $0x10] sm:$0x7]
  %v65 = vld [vmem:[%s4] sm:$0x1]
  %v67 = vperm.slane %v65, 0
  %v77 = vunpack.c.l.b16 %v52
  %v78 = vunpack.c.l.b16 %v53
  %v79 = vunpack.c.l.b16 %v54
  %v80 = vunpack.c.l.b16 %v55
  %v81 = vunpack.c.l.b16 %v56
  %v82 = vunpack.c.l.b16 %v57
  %v83 = vunpack.c.l.b16 %v58
  %v84 = vunpack.c.l.b16 %v59
  %v85 = vpack.c.b16 %v78, %v77
  %v86 = vpack.c.b16 %v80, %v79
  %v87 = vpack.c.b16 %v82, %v81
  %v88 = vpack.c.b16 %v84, %v83
  %v94 = vunpack.c.l.b16 %v60
  %v95 = vunpack.c.l.b16 %v61
  %v96 = vunpack.c.l.b16 %v62
  %v97 = vunpack.c.l.b16 %v63
  %v98 = vunpack.c.l.b16 %v64
  %v99 = vpack.c.b16 %v95, %v94
  %v100 = vpack.c.b16 %v97, %v96
  %v101 = vpack.c.b16 %v98, %v98
  %vm104 = vcmask 302080
  %v106 = vsel %vm104, %v85, 0
  %v109 = vsel %vm104, %v86, 0
  %v112 = vsel %vm104, %v87, 0
  %v115 = vsel %vm104, %v88, 0
  %vm117 = vcmask 1041408
  %vm118 = vcmask 1042432
  %v119 = vsel %vm117, 4294967295, 65535
  %v120 = vsel %vm118, %v119, 0
  %v122 = vand.u32 %v101, %v120
  %124 = vmatpush.bf16.msra.mxu0 0
  %125 = vmatpush.bf16.msra.mxu0 0
  %126 = vmatpush.bf16.msra.mxu0 0
  %127 = vmatpush.bf16.msra.mxu0 0
  %128 = vmatpush.bf16.msra.mxu0 0
  %129 = vmatpush.bf16.msra.mxu0 %v122
  %130 = vmatpush.bf16.msra.mxu0 %v100
  %131 = vmatpush.bf16.msra.mxu0 %v99
  %132 = vmatmul.bf16.gmra.mxu0 %v106
  %v133 = vpop.f32.mrf.mxu0
  %v134 = vadd.f32 %v67, %v133
  %v135 = vpop.f32.mrf.mxu0
  %v136 = vadd.f32 %v67, %v135
  %137 = vmatmul.bf16.gmra.mxu0 %v109
  %v138 = vpop.f32.mrf.mxu0
  %v139 = vadd.f32 %v67, %v138
  %v140 = vpop.f32.mrf.mxu0
  %v141 = vadd.f32 %v67, %v140
  %142 = vmatmul.bf16.gmra.mxu0 %v112
  %v143 = vpop.f32.mrf.mxu0
  %v144 = vadd.f32 %v67, %v143
  %v145 = vpop.f32.mrf.mxu0
  %v146 = vadd.f32 %v67, %v145
  %147 = vmatmul.bf16.gmra.mxu0 %v115
  %v148 = vpop.f32.mrf.mxu0
  %v149 = vadd.f32 %v67, %v148
  %v150 = vpop.f32.mrf.mxu0
  %v151 = vadd.f32 %v67, %v150
  %152 = vdwg.mxu0
  %vm153 = vcmask 523264
  %154 = vst.msk [vmem:[#allocation2] sm:$0xff] %vm153, %v134
  %155 = vst.msk [vmem:[#allocation2 + $0x8] sm:$0xff] %vm153, %v136
  %156 = vst.msk [vmem:[#allocation2 + $0x10] sm:$0xff] %vm153, %v139
  %157 = vst.msk [vmem:[#allocation2 + $0x18] sm:$0xff] %vm153, %v141
  %158 = vst.msk [vmem:[#allocation2 + $0x20] sm:$0xff] %vm153, %v144
  %159 = vst.msk [vmem:[#allocation2 + $0x28] sm:$0xff] %vm153, %v146
  %160 = vst.msk [vmem:[#allocation2 + $0x30] sm:$0xff] %vm153, %v149
  %161 = vst.msk [vmem:[#allocation2 + $0x38] sm:$0xff] %vm153, %v151
  %v162 = vld [vmem:[%s3] sm:$0xf]
  %v163 = vld [vmem:[%s3 + $0x4] sm:$0xf]
  %v164 = vld [vmem:[#allocation2] sm:$0xff]
  %v165 = vld [vmem:[#allocation2 + $0x38] sm:$0xff]
  %v166 = vsel %vm50, 1, 0
  %vm167 = vcmp.eq.s32.totalorder %v166, 1
  %v168 = vsel %vm167, %v164, %v165
  %v171 = vunpack.c.l.b16 %v162
  %v172 = vunpack.c.l.b16 %v163
  %v173 = vpack.c.b16 %v172, %v171
  %vm175 = vcmask 130048
  %v177 = vsel %vm175, 0, 0
  %179 = vmatpush.bf16.msra.mxu0 0
  %180 = vmatpush.bf16.msra.mxu0 0
  %181 = vmatpush.bf16.msra.mxu0 0
  %182 = vmatpush.bf16.msra.mxu0 0
  %183 = vmatpush.bf16.msra.mxu0 0
  %184 = vmatpush.bf16.msra.mxu0 0
  %185 = vmatpush.bf16.msra.mxu0 0
  %186 = vmatpush.bf16.msra.mxu0 %v173
  %187 = vmatmul.bf16.gmra.mxu0 %v177
  %v188 = vpop.f32.mrf.mxu0
  %v189 = vadd.f32 0.0, %v188
  %v190 = vpop.f32.mrf.mxu0
  %191 = vdwg.mxu0
  %v192 = vadd.f32 %v168, %v189
  %v193 = vxor.u32 %v192, 2147483648
  %v194 = vmul.f32 %v193, 1.442695
  %v195 = vpow.pop %v194
  %v196 = vadd.f32 %v195, 1.0
  %v197 = vrcp.pop %v196
  %v198 = vmul.f32 %v196, %v197
  %v199 = vsub.f32 1.0, %v198
  %v200 = vmul.f32 %v197, %v199
  %v201 = vadd.f32 %v197, %v200
  %vm202 = vweird.f32 %v196
  %vm203 = vweird.f32 %v197
  %vm204 = vmor %vm202, %vm203
  %v205 = vsel %vm204, %v197, %v201
  %v206 = vand.u32 2147483647, %v196
  %vm207 = vcmp.eq.f32.partialorder %v206, 8.507059e+37
  %v208 = vand.u32 %v196, 2147483648
  %v209 = vor.u32 1.1754944e-38, %v208
  %v210 = vsel %vm207, %v209, %v205
  %v211 = vmul.f32 1.0, %v210
  %v212 = vtanh.pop %v192
  %v213 = vmul.f32 %v211, 0.0
  %215 = vrot.lane.b32.xlu0 %v212, 80
  %v216 = vpop.permute.xlu0 %215
  %v218 = vmul.f32 %v211, %v216
  %220 = vrot.lane.b32.xlu0 %v218, 16
  %v221 = vpop.permute.xlu0 %220
  %v223 = vadd.f32 %v213, %v221
  %v224 = vtanh.pop %v223
  %226 = vrot.lane.b32.xlu0 %v224, 16
  %v227 = vpop.permute.xlu0 %226
  %v229 = vmul.f32 %v211, %v227
  %v230 = vld [vmem:[%s1] sm:$0xff]
  %v231 = vld [vmem:[%s1 + $0x38] sm:$0xff]
  %v232 = vsel %vm51, 1, 0
  %vm233 = vcmp.eq.s32.totalorder %v232, 1
  %235 = vset.pattern.permute.xlu0 0
  %236 = vperm.xlu0 %235, %v230
  %v237 = vpop.permute.xlu0 %236
  %240 = vset.pattern.permute.xlu0 0
  %241 = vperm.xlu0 %240, %v231
  %v242 = vpop.permute.xlu0 %241
  %v244 = vsel %vm233, %v237, %v242
  %246 = vrot.lane.b32.xlu0 %v229, 96
  %v247 = vpop.permute.xlu0 %246
  %v249 = vmul.f32 %v244, %v247
  %v250 = vsub.f32 1.0, %v244
  %v251 = vmul.f32 %v250, 0.0
  %v252 = vadd.f32 %v249, %v251
  %254 = vrot.lane.b32.xlu0 %v223, 112
  %v255 = vpop.permute.xlu0 %254
  %v257 = vmul.f32 %v244, %v255
  %v258 = vadd.f32 %v257, %v251
  %v259 = vld [vmem:[#allocation2 + $0x8] sm:$0xff]
  %v260 = vld [vmem:[#allocation2 + $0x30] sm:$0xff]
  %v261 = vsel %vm167, %v259, %v260
  %v262 = vpack.c.bf16 %v252, %v252
  %v264 = vsel %vm175, %v262, 0
  %266 = vmatpush.bf16.msra.mxu0 0
  %267 = vmatpush.bf16.msra.mxu0 0
  %268 = vmatpush.bf16.msra.mxu0 0
  %269 = vmatpush.bf16.msra.mxu0 0
  %270 = vmatpush.bf16.msra.mxu0 0
  %271 = vmatpush.bf16.msra.mxu0 0
  %272 = vmatpush.bf16.msra.mxu0 0
  %273 = vmatpush.bf16.msra.mxu0 %v173
  %274 = vmatmul.bf16.gmra.mxu0 %v264
  %v275 = vpop.f32.mrf.mxu0
  %v276 = vadd.f32 0.0, %v275
  %v277 = vpop.f32.mrf.mxu0
  %278 = vdwg.mxu0
  %v279 = vadd.f32 %v261, %v276
  %v280 = vxor.u32 %v279, 2147483648
  %v281 = vmul.f32 %v280, 1.442695
  %v282 = vpow.pop %v281
  %v283 = vadd.f32 %v282, 1.0
  %v284 = vrcp.pop %v283
  %v285 = vmul.f32 %v283, %v284
  %v286 = vsub.f32 1.0, %v285
  %v287 = vmul.f32 %v284, %v286
  %v288 = vadd.f32 %v284, %v287
  %vm289 = vweird.f32 %v283
  %vm290 = vweird.f32 %v284
  %vm291 = vmor %vm289, %vm290
  %v292 = vsel %vm291, %v284, %v288
  %v293 = vand.u32 2147483647, %v283
  %vm294 = vcmp.eq.f32.partialorder %v293, 8.507059e+37
  %v295 = vand.u32 %v283, 2147483648
  %v296 = vor.u32 1.1754944e-38, %v295
  %v297 = vsel %vm294, %v296, %v292
  %v298 = vmul.f32 1.0, %v297
  %v299 = vtanh.pop %v279
  %301 = vrot.lane.b32.xlu0 %v258, 16
  %v302 = vpop.permute.xlu0 %301
  %v304 = vmul.f32 %v298, %v302
  %306 = vrot.lane.b32.xlu0 %v299, 80
  %v307 = vpop.permute.xlu0 %306
  %v309 = vmul.f32 %v298, %v307
  %311 = vrot.lane.b32.xlu0 %v309, 16
  %v312 = vpop.permute.xlu0 %311
  %v314 = vadd.f32 %v304, %v312
  %v315 = vtanh.pop %v314
  %317 = vrot.lane.b32.xlu0 %v315, 16
  %v318 = vpop.permute.xlu0 %317
  %v320 = vmul.f32 %v298, %v318
  %v321 = vld [vmem:[%s1 + $0x8] sm:$0xff]
  %v322 = vld [vmem:[%s1 + $0x30] sm:$0xff]
  %324 = vset.pattern.permute.xlu0 0
  %325 = vperm.xlu0 %324, %v321
  %v326 = vpop.permute.xlu0 %325
  %329 = vset.pattern.permute.xlu0 0
  %330 = vperm.xlu0 %329, %v322
  %v331 = vpop.permute.xlu0 %330
  %v333 = vsel %vm233, %v326, %v331
  %335 = vrot.lane.b32.xlu0 %v320, 96
  %v336 = vpop.permute.xlu0 %335
  %v338 = vmul.f32 %v333, %v336
  %v339 = vsub.f32 1.0, %v333
  %v340 = vmul.f32 %v339, %v252
  %v341 = vadd.f32 %v338, %v340
  %343 = vrot.lane.b32.xlu0 %v314, 112
  %v344 = vpop.permute.xlu0 %343
  %v346 = vmul.f32 %v333, %v344
  %v347 = vmul.f32 %v339, %v258
  %v348 = vadd.f32 %v346, %v347
  %v349 = vld [vmem:[#allocation2 + $0x10] sm:$0xff]
  %v350 = vld [vmem:[#allocation2 + $0x28] sm:$0xff]
  %v351 = vsel %vm167, %v349, %v350
  %v352 = vpack.c.bf16 %v341, %v341
  %v354 = vsel %vm175, %v352, 0
  %356 = vmatpush.bf16.msra.mxu0 0
  %357 = vmatpush.bf16.msra.mxu0 0
  %358 = vmatpush.bf16.msra.mxu0 0
  %359 = vmatpush.bf16.msra.mxu0 0
  %360 = vmatpush.bf16.msra.mxu0 0
  %361 = vmatpush.bf16.msra.mxu0 0
  %362 = vmatpush.bf16.msra.mxu0 0
  %363 = vmatpush.bf16.msra.mxu0 %v173
  %364 = vmatmul.bf16.gmra.mxu0 %v354
  %v365 = vpop.f32.mrf.mxu0
  %v366 = vadd.f32 0.0, %v365
  %v367 = vpop.f32.mrf.mxu0
  %368 = vdwg.mxu0
  %v369 = vadd.f32 %v351, %v366
  %v370 = vxor.u32 %v369, 2147483648
  %v371 = vmul.f32 %v370, 1.442695
  %v372 = vpow.pop %v371
  %v373 = vadd.f32 %v372, 1.0
  %v374 = vrcp.pop %v373
  %v375 = vmul.f32 %v373, %v374
  %v376 = vsub.f32 1.0, %v375
  %v377 = vmul.f32 %v374, %v376
  %v378 = vadd.f32 %v374, %v377
  %vm379 = vweird.f32 %v373
  %vm380 = vweird.f32 %v374
  %vm381 = vmor %vm379, %vm380
  %v382 = vsel %vm381, %v374, %v378
  %v383 = vand.u32 2147483647, %v373
  %vm384 = vcmp.eq.f32.partialorder %v383, 8.507059e+37
  %v385 = vand.u32 %v373, 2147483648
  %v386 = vor.u32 1.1754944e-38, %v385
  %v387 = vsel %vm384, %v386, %v382
  %v388 = vmul.f32 1.0, %v387
  %v389 = vtanh.pop %v369
  %391 = vrot.lane.b32.xlu0 %v348, 16
  %v392 = vpop.permute.xlu0 %391
  %v394 = vmul.f32 %v388, %v392
  %396 = vrot.lane.b32.xlu0 %v389, 80
  %v397 = vpop.permute.xlu0 %396
  %v399 = vmul.f32 %v388, %v397
  %401 = vrot.lane.b32.xlu0 %v399, 16
  %v402 = vpop.permute.xlu0 %401
  %v404 = vadd.f32 %v394, %v402
  %v405 = vtanh.pop %v404
  %407 = vrot.lane.b32.xlu0 %v405, 16
  %v408 = vpop.permute.xlu0 %407
  %v410 = vmul.f32 %v388, %v408
  %v411 = vld [vmem:[%s1 + $0x10] sm:$0xff]
  %v412 = vld [vmem:[%s1 + $0x28] sm:$0xff]
  %414 = vset.pattern.permute.xlu0 0
  %415 = vperm.xlu0 %414, %v411
  %v416 = vpop.permute.xlu0 %415
  %419 = vset.pattern.permute.xlu0 0
  %420 = vperm.xlu0 %419, %v412
  %v421 = vpop.permute.xlu0 %420
  %v423 = vsel %vm233, %v416, %v421
  %425 = vrot.lane.b32.xlu0 %v410, 96
  %v426 = vpop.permute.xlu0 %425
  %v428 = vmul.f32 %v423, %v426
  %v429 = vsub.f32 1.0, %v423
  %v430 = vmul.f32 %v429, %v341
  %v431 = vadd.f32 %v428, %v430
  %433 = vrot.lane.b32.xlu0 %v404, 112
  %v434 = vpop.permute.xlu0 %433
  %v436 = vmul.f32 %v423, %v434
  %v437 = vmul.f32 %v429, %v348
  %v438 = vadd.f32 %v436, %v437
  %v439 = vld [vmem:[#allocation2 + $0x18] sm:$0xff]
  %v440 = vld [vmem:[#allocation2 + $0x20] sm:$0xff]
  %v441 = vsel %vm167, %v439, %v440
  %v442 = vpack.c.bf16 %v431, %v431
  %v444 = vsel %vm175, %v442, 0
  %446 = vmatpush.bf16.msra.mxu0 0
  %447 = vmatpush.bf16.msra.mxu0 0
  %448 = vmatpush.bf16.msra.mxu0 0
  %449 = vmatpush.bf16.msra.mxu0 0
  %450 = vmatpush.bf16.msra.mxu0 0
  %451 = vmatpush.bf16.msra.mxu0 0
  %452 = vmatpush.bf16.msra.mxu0 0
  %453 = vmatpush.bf16.msra.mxu0 %v173
  %454 = vmatmul.bf16.gmra.mxu0 %v444
  %v455 = vpop.f32.mrf.mxu0
  %v456 = vadd.f32 0.0, %v455
  %v457 = vpop.f32.mrf.mxu0
  %458 = vdwg.mxu0
  %v459 = vadd.f32 %v441, %v456
  %v460 = vxor.u32 %v459, 2147483648
  %v461 = vmul.f32 %v460, 1.442695
  %v462 = vpow.pop %v461
  %v463 = vadd.f32 %v462, 1.0
  %v464 = vrcp.pop %v463
  %v465 = vmul.f32 %v463, %v464
  %v466 = vsub.f32 1.0, %v465
  %v467 = vmul.f32 %v464, %v466
  %v468 = vadd.f32 %v464, %v467
  %vm469 = vweird.f32 %v463
  %vm470 = vweird.f32 %v464
  %vm471 = vmor %vm469, %vm470
  %v472 = vsel %vm471, %v464, %v468
  %v473 = vand.u32 2147483647, %v463
  %vm474 = vcmp.eq.f32.partialorder %v473, 8.507059e+37
  %v475 = vand.u32 %v463, 2147483648
  %v476 = vor.u32 1.1754944e-38, %v475
  %v477 = vsel %vm474, %v476, %v472
  %v478 = vmul.f32 1.0, %v477
  %v479 = vtanh.pop %v459
  %481 = vrot.lane.b32.xlu0 %v438, 16
  %v482 = vpop.permute.xlu0 %481
  %v484 = vmul.f32 %v478, %v482
  %486 = vrot.lane.b32.xlu0 %v479, 80
  %v487 = vpop.permute.xlu0 %486
  %v489 = vmul.f32 %v478, %v487
  %491 = vrot.lane.b32.xlu0 %v489, 16
  %v492 = vpop.permute.xlu0 %491
  %v494 = vadd.f32 %v484, %v492
  %v495 = vtanh.pop %v494
  %497 = vrot.lane.b32.xlu0 %v495, 16
  %v498 = vpop.permute.xlu0 %497
  %v500 = vmul.f32 %v478, %v498
  %v501 = vld [vmem:[%s1 + $0x18] sm:$0xff]
  %v502 = vld [vmem:[%s1 + $0x20] sm:$0xff]
  %504 = vset.pattern.permute.xlu0 0
  %505 = vperm.xlu0 %504, %v501
  %v506 = vpop.permute.xlu0 %505
  %509 = vset.pattern.permute.xlu0 0
  %510 = vperm.xlu0 %509, %v502
  %v511 = vpop.permute.xlu0 %510
  %v513 = vsel %vm233, %v506, %v511
  %515 = vrot.lane.b32.xlu0 %v500, 96
  %v516 = vpop.permute.xlu0 %515
  %v518 = vmul.f32 %v513, %v516
  %v519 = vsub.f32 1.0, %v513
  %v520 = vmul.f32 %v519, %v431
  %v521 = vadd.f32 %v518, %v520
  %523 = vrot.lane.b32.xlu0 %v494, 112
  %v524 = vpop.permute.xlu0 %523
  %v526 = vmul.f32 %v513, %v524
  %v527 = vmul.f32 %v519, %v438
  %v528 = vadd.f32 %v526, %v527
  %v529 = vsel %vm167, %v440, %v439
  %v530 = vpack.c.bf16 %v521, %v521
  %v532 = vsel %vm175, %v530, 0
  %534 = vmatpush.bf16.msra.mxu0 0
  %535 = vmatpush.bf16.msra.mxu0 0
  %536 = vmatpush.bf16.msra.mxu0 0
  %537 = vmatpush.bf16.msra.mxu0 0
  %538 = vmatpush.bf16.msra.mxu0 0
  %539 = vmatpush.bf16.msra.mxu0 0
  %540 = vmatpush.bf16.msra.mxu0 0
  %541 = vmatpush.bf16.msra.mxu0 %v173
  %542 = vmatmul.bf16.gmra.mxu0 %v532
  %v543 = vpop.f32.mrf.mxu0
  %v544 = vadd.f32 0.0, %v543
  %v545 = vpop.f32.mrf.mxu0
  %546 = vdwg.mxu0
  %v547 = vadd.f32 %v529, %v544
  %v548 = vxor.u32 %v547, 2147483648
  %v549 = vmul.f32 %v548, 1.442695
  %v550 = vpow.pop %v549
  %v551 = vadd.f32 %v550, 1.0
  %v552 = vrcp.pop %v551
  %v553 = vmul.f32 %v551, %v552
  %v554 = vsub.f32 1.0, %v553
  %v555 = vmul.f32 %v552, %v554
  %v556 = vadd.f32 %v552, %v555
  %vm557 = vweird.f32 %v551
  %vm558 = vweird.f32 %v552
  %vm559 = vmor %vm557, %vm558
  %v560 = vsel %vm559, %v552, %v556
  %v561 = vand.u32 2147483647, %v551
  %vm562 = vcmp.eq.f32.partialorder %v561, 8.507059e+37
  %v563 = vand.u32 %v551, 2147483648
  %v564 = vor.u32 1.1754944e-38, %v563
  %v565 = vsel %vm562, %v564, %v560
  %v566 = vmul.f32 1.0, %v565
  %v567 = vtanh.pop %v547
  %569 = vrot.lane.b32.xlu0 %v528, 16
  %v570 = vpop.permute.xlu0 %569
  %v572 = vmul.f32 %v566, %v570
  %574 = vrot.lane.b32.xlu0 %v567, 80
  %v575 = vpop.permute.xlu0 %574
  %v577 = vmul.f32 %v566, %v575
  %579 = vrot.lane.b32.xlu0 %v577, 16
  %v580 = vpop.permute.xlu0 %579
  %v582 = vadd.f32 %v572, %v580
  %v583 = vtanh.pop %v582
  %585 = vrot.lane.b32.xlu0 %v583, 16
  %v586 = vpop.permute.xlu0 %585
  %v588 = vmul.f32 %v566, %v586
  %v589 = vsel %vm233, %v511, %v506
  %591 = vrot.lane.b32.xlu0 %v588, 96
  %v592 = vpop.permute.xlu0 %591
  %v594 = vmul.f32 %v589, %v592
  %v595 = vsub.f32 1.0, %v589
  %v596 = vmul.f32 %v595, %v521
  %v597 = vadd.f32 %v594, %v596
  %599 = vrot.lane.b32.xlu0 %v582, 112
  %v600 = vpop.permute.xlu0 %599
  %v602 = vmul.f32 %v589, %v600
  %v603 = vmul.f32 %v595, %v528
  %v604 = vadd.f32 %v602, %v603
  %v605 = vsel %vm167, %v350, %v349
  %v606 = vpack.c.bf16 %v597, %v597
  %v608 = vsel %vm175, %v606, 0
  %610 = vmatpush.bf16.msra.mxu0 0
  %611 = vmatpush.bf16.msra.mxu0 0
  %612 = vmatpush.bf16.msra.mxu0 0
  %613 = vmatpush.bf16.msra.mxu0 0
  %614 = vmatpush.bf16.msra.mxu0 0
  %615 = vmatpush.bf16.msra.mxu0 0
  %616 = vmatpush.bf16.msra.mxu0 0
  %617 = vmatpush.bf16.msra.mxu0 %v173
  %618 = vmatmul.bf16.gmra.mxu0 %v608
  %v619 = vpop.f32.mrf.mxu0
  %v620 = vadd.f32 0.0, %v619
  %v621 = vpop.f32.mrf.mxu0
  %622 = vdwg.mxu0
  %v623 = vadd.f32 %v605, %v620
  %v624 = vxor.u32 %v623, 2147483648
  %v625 = vmul.f32 %v624, 1.442695
  %v626 = vpow.pop %v625
  %v627 = vadd.f32 %v626, 1.0
  %v628 = vrcp.pop %v627
  %v629 = vmul.f32 %v627, %v628
  %v630 = vsub.f32 1.0, %v629
  %v631 = vmul.f32 %v628, %v630
  %v632 = vadd.f32 %v628, %v631
  %vm633 = vweird.f32 %v627
  %vm634 = vweird.f32 %v628
  %vm635 = vmor %vm633, %vm634
  %v636 = vsel %vm635, %v628, %v632
  %v637 = vand.u32 2147483647, %v627
  %vm638 = vcmp.eq.f32.partialorder %v637, 8.507059e+37
  %v639 = vand.u32 %v627, 2147483648
  %v640 = vor.u32 1.1754944e-38, %v639
  %v641 = vsel %vm638, %v640, %v636
  %v642 = vmul.f32 1.0, %v641
  %v643 = vtanh.pop %v623
  %645 = vrot.lane.b32.xlu0 %v604, 16
  %v646 = vpop.permute.xlu0 %645
  %v648 = vmul.f32 %v642, %v646
  %650 = vrot.lane.b32.xlu0 %v643, 80
  %v651 = vpop.permute.xlu0 %650
  %v653 = vmul.f32 %v642, %v651
  %655 = vrot.lane.b32.xlu0 %v653, 16
  %v656 = vpop.permute.xlu0 %655
  %v658 = vadd.f32 %v648, %v656
  %v659 = vtanh.pop %v658
  %661 = vrot.lane.b32.xlu0 %v659, 16
  %v662 = vpop.permute.xlu0 %661
  %v664 = vmul.f32 %v642, %v662
  %v665 = vsel %vm233, %v421, %v416
  %667 = vrot.lane.b32.xlu0 %v664, 96
  %v668 = vpop.permute.xlu0 %667
  %v670 = vmul.f32 %v665, %v668
  %v671 = vsub.f32 1.0, %v665
  %v672 = vmul.f32 %v671, %v597
  %v673 = vadd.f32 %v670, %v672
  %675 = vrot.lane.b32.xlu0 %v658, 112
  %v676 = vpop.permute.xlu0 %675
  %v678 = vmul.f32 %v665, %v676
  %v679 = vmul.f32 %v671, %v604
  %v680 = vadd.f32 %v678, %v679
  %v681 = vsel %vm167, %v260, %v259
  %v682 = vpack.c.bf16 %v673, %v673
  %v684 = vsel %vm175, %v682, 0
  %686 = vmatpush.bf16.msra.mxu0 0
  %687 = vmatpush.bf16.msra.mxu0 0
  %688 = vmatpush.bf16.msra.mxu0 0
  %689 = vmatpush.bf16.msra.mxu0 0
  %690 = vmatpush.bf16.msra.mxu0 0
  %691 = vmatpush.bf16.msra.mxu0 0
  %692 = vmatpush.bf16.msra.mxu0 0
  %693 = vmatpush.bf16.msra.mxu0 %v173
  %694 = vmatmul.bf16.gmra.mxu0 %v684
  %v695 = vpop.f32.mrf.mxu0
  %v696 = vadd.f32 0.0, %v695
  %v697 = vpop.f32.mrf.mxu0
  %698 = vdwg.mxu0
  %v699 = vadd.f32 %v681, %v696
  %v700 = vxor.u32 %v699, 2147483648
  %v701 = vmul.f32 %v700, 1.442695
  %v702 = vpow.pop %v701
  %v703 = vadd.f32 %v702, 1.0
  %v704 = vrcp.pop %v703
  %v705 = vmul.f32 %v703, %v704
  %v706 = vsub.f32 1.0, %v705
  %v707 = vmul.f32 %v704, %v706
  %v708 = vadd.f32 %v704, %v707
  %vm709 = vweird.f32 %v703
  %vm710 = vweird.f32 %v704
  %vm711 = vmor %vm709, %vm710
  %v712 = vsel %vm711, %v704, %v708
  %v713 = vand.u32 2147483647, %v703
  %vm714 = vcmp.eq.f32.partialorder %v713, 8.507059e+37
  %v715 = vand.u32 %v703, 2147483648
  %v716 = vor.u32 1.1754944e-38, %v715
  %v717 = vsel %vm714, %v716, %v712
  %v718 = vmul.f32 1.0, %v717
  %v719 = vtanh.pop %v699
  %721 = vrot.lane.b32.xlu0 %v680, 16
  %v722 = vpop.permute.xlu0 %721
  %v724 = vmul.f32 %v718, %v722
  %726 = vrot.lane.b32.xlu0 %v719, 80
  %v727 = vpop.permute.xlu0 %726
  %v729 = vmul.f32 %v718, %v727
  %731 = vrot.lane.b32.xlu0 %v729, 16
  %v732 = vpop.permute.xlu0 %731
  %v734 = vadd.f32 %v724, %v732
  %v735 = vtanh.pop %v734
  %737 = vrot.lane.b32.xlu0 %v735, 16
  %v738 = vpop.permute.xlu0 %737
  %v740 = vmul.f32 %v718, %v738
  %v741 = vsel %vm233, %v331, %v326
  %743 = vrot.lane.b32.xlu0 %v740, 96
  %v744 = vpop.permute.xlu0 %743
  %v746 = vmul.f32 %v741, %v744
  %v747 = vsub.f32 1.0, %v741
  %v748 = vmul.f32 %v747, %v673
  %v749 = vadd.f32 %v746, %v748
  %751 = vrot.lane.b32.xlu0 %v734, 112
  %v752 = vpop.permute.xlu0 %751
  %v754 = vmul.f32 %v741, %v752
  %v755 = vmul.f32 %v747, %v680
  %v756 = vadd.f32 %v754, %v755
  %v757 = vsel %vm167, %v165, %v164
  %v758 = vpack.c.bf16 %v749, %v749
  %v760 = vsel %vm175, %v758, 0
  %762 = vmatpush.bf16.msra.mxu0 0
  %763 = vmatpush.bf16.msra.mxu0 0
  %764 = vmatpush.bf16.msra.mxu0 0
  %765 = vmatpush.bf16.msra.mxu0 0
  %766 = vmatpush.bf16.msra.mxu0 0
  %767 = vmatpush.bf16.msra.mxu0 0
  %768 = vmatpush.bf16.msra.mxu0 0
  %769 = vmatpush.bf16.msra.mxu0 %v173
  %770 = vmatmul.bf16.gmra.mxu0 %v760
  %v771 = vpop.f32.mrf.mxu0
  %v772 = vadd.f32 0.0, %v771
  %v773 = vpop.f32.mrf.mxu0
  %774 = vdwg.mxu0
  %v775 = vadd.f32 %v757, %v772
  %v776 = vxor.u32 %v775, 2147483648
  %v777 = vmul.f32 %v776, 1.442695
  %v778 = vpow.pop %v777
  %v779 = vadd.f32 %v778, 1.0
  %v780 = vrcp.pop %v779
  %v781 = vmul.f32 %v779, %v780
  %v782 = vsub.f32 1.0, %v781
  %v783 = vmul.f32 %v780, %v782
  %v784 = vadd.f32 %v780, %v783
  %vm785 = vweird.f32 %v779
  %vm786 = vweird.f32 %v780
  %vm787 = vmor %vm785, %vm786
  %v788 = vsel %vm787, %v780, %v784
  %v789 = vand.u32 2147483647, %v779
  %vm790 = vcmp.eq.f32.partialorder %v789, 8.507059e+37
  %v791 = vand.u32 %v779, 2147483648
  %v792 = vor.u32 1.1754944e-38, %v791
  %v793 = vsel %vm790, %v792, %v788
  %v794 = vmul.f32 1.0, %v793
  %v795 = vtanh.pop %v775
  %797 = vrot.lane.b32.xlu0 %v756, 16
  %v798 = vpop.permute.xlu0 %797
  %v800 = vmul.f32 %v794, %v798
  %802 = vrot.lane.b32.xlu0 %v795, 80
  %v803 = vpop.permute.xlu0 %802
  %v805 = vmul.f32 %v794, %v803
  %807 = vrot.lane.b32.xlu0 %v805, 16
  %v808 = vpop.permute.xlu0 %807
  %v810 = vadd.f32 %v800, %v808
  %v811 = vtanh.pop %v810
  %813 = vrot.lane.b32.xlu0 %v811, 16
  %v814 = vpop.permute.xlu0 %813
  %v816 = vmul.f32 %v794, %v814
  %v817 = vsel %vm233, %v242, %v237
  %819 = vrot.lane.b32.xlu0 %v816, 96
  %v820 = vpop.permute.xlu0 %819
  %v822 = vmul.f32 %v817, %v820
  %v823 = vsel %vm233, %v249, %v822
  %v824 = vsel %vm233, %v338, %v746
  %v825 = vsel %vm233, %v428, %v670
  %v826 = vsel %vm233, %v518, %v594
  %v827 = vsel %vm233, %v594, %v518
  %v828 = vsel %vm233, %v670, %v428
  %v829 = vsel %vm233, %v746, %v338
  %v830 = vsel %vm233, %v822, %v249
  %v831 = vpack.c.bf16 %v824, %v823
  %v832 = vpack.c.bf16 %v826, %v825
  %v833 = vpack.c.bf16 %v828, %v827
  %v834 = vpack.c.bf16 %v830, %v829
  %v835 = vld [vmem:[%s5] sm:$0xf]
  %v836 = vld [vmem:[%s5 + $0x4] sm:$0xf]
  %v837 = vld [vmem:[%s7] sm:$0x1]
  %v839 = vperm.slane %v837, 0
  %v843 = vunpack.c.l.b16 %v835
  %v844 = vunpack.c.l.b16 %v836
  %v845 = vpack.c.b16 %v844, %v843
  %v848 = vsel %vm175, %v831, 0
  %v851 = vsel %vm175, %v832, 0
  %v854 = vsel %vm175, %v833, 0
  %v857 = vsel %vm175, %v834, 0
  %859 = vmatpush.bf16.msra.mxu0 0
  %860 = vmatpush.bf16.msra.mxu0 0
  %861 = vmatpush.bf16.msra.mxu0 0
  %862 = vmatpush.bf16.msra.mxu0 0
  %863 = vmatpush.bf16.msra.mxu0 0
  %864 = vmatpush.bf16.msra.mxu0 0
  %865 = vmatpush.bf16.msra.mxu0 0
  %866 = vmatpush.bf16.msra.mxu0 %v845
  %867 = vmatmul.bf16.gmra.mxu0 %v848
  %v868 = vpop.f32.mrf.mxu0
  %v869 = vadd.f32 %v839, %v868
  %v870 = vpop.f32.mrf.mxu0
  %v871 = vadd.f32 %v839, %v870
  %872 = vmatmul.bf16.gmra.mxu0 %v851
  %v873 = vpop.f32.mrf.mxu0
  %v874 = vadd.f32 %v839, %v873
  %v875 = vpop.f32.mrf.mxu0
  %v876 = vadd.f32 %v839, %v875
  %877 = vmatmul.bf16.gmra.mxu0 %v854
  %v878 = vpop.f32.mrf.mxu0
  %v879 = vadd.f32 %v839, %v878
  %v880 = vpop.f32.mrf.mxu0
  %v881 = vadd.f32 %v839, %v880
  %882 = vmatmul.bf16.gmra.mxu0 %v857
  %v883 = vpop.f32.mrf.mxu0
  %v884 = vadd.f32 %v839, %v883
  %v885 = vpop.f32.mrf.mxu0
  %v886 = vadd.f32 %v839, %v885
  %887 = vdwg.mxu0
  %888 = vst.msk [vmem:[#allocation2] sm:$0xff] %vm153, %v869
  %889 = vst.msk [vmem:[#allocation2 + $0x8] sm:$0xff] %vm153, %v871
  %890 = vst.msk [vmem:[#allocation2 + $0x10] sm:$0xff] %vm153, %v874
  %891 = vst.msk [vmem:[#allocation2 + $0x18] sm:$0xff] %vm153, %v876
  %892 = vst.msk [vmem:[#allocation2 + $0x20] sm:$0xff] %vm153, %v879
  %893 = vst.msk [vmem:[#allocation2 + $0x28] sm:$0xff] %vm153, %v881
  %894 = vst.msk [vmem:[#allocation2 + $0x30] sm:$0xff] %vm153, %v884
  %895 = vst.msk [vmem:[#allocation2 + $0x38] sm:$0xff] %vm153, %v886
  %v896 = vld [vmem:[%s6] sm:$0xf]
  %v897 = vld [vmem:[%s6 + $0x4] sm:$0xf]
  %v898 = vld [vmem:[#allocation2] sm:$0xff]
  %v899 = vld [vmem:[#allocation2 + $0x38] sm:$0xff]
  %v900 = vsel %vm167, %v898, %v899
  %v903 = vunpack.c.l.b16 %v896
  %v904 = vunpack.c.l.b16 %v897
  %v905 = vpack.c.b16 %v904, %v903
  %907 = vmatpush.bf16.msra.mxu0 0
  %908 = vmatpush.bf16.msra.mxu0 0
  %909 = vmatpush.bf16.msra.mxu0 0
  %910 = vmatpush.bf16.msra.mxu0 0
  %911 = vmatpush.bf16.msra.mxu0 0
  %912 = vmatpush.bf16.msra.mxu0 0
  %913 = vmatpush.bf16.msra.mxu0 0
  %914 = vmatpush.bf16.msra.mxu0 %v905
  %915 = vmatmul.bf16.gmra.mxu0 %v177
  %v916 = vpop.f32.mrf.mxu0
  %v917 = vadd.f32 0.0, %v916
  %v918 = vpop.f32.mrf.mxu0
  %919 = vdwg.mxu0
  %v920 = vadd.f32 %v900, %v917
  %v921 = vxor.u32 %v920, 2147483648
  %v922 = vmul.f32 %v921, 1.442695
  %v923 = vpow.pop %v922
  %v924 = vadd.f32 %v923, 1.0
  %v925 = vrcp.pop %v924
  %v926 = vmul.f32 %v924, %v925
  %v927 = vsub.f32 1.0, %v926
  %v928 = vmul.f32 %v925, %v927
  %v929 = vadd.f32 %v925, %v928
  %vm930 = vweird.f32 %v924
  %vm931 = vweird.f32 %v925
  %vm932 = vmor %vm930, %vm931
  %v933 = vsel %vm932, %v925, %v929
  %v934 = vand.u32 2147483647, %v924
  %vm935 = vcmp.eq.f32.partialorder %v934, 8.507059e+37
  %v936 = vand.u32 %v924, 2147483648
  %v937 = vor.u32 1.1754944e-38, %v936
  %v938 = vsel %vm935, %v937, %v933
  %v939 = vmul.f32 1.0, %v938
  %v940 = vtanh.pop %v920
  %v941 = vmul.f32 %v939, 0.0
  %943 = vrot.lane.b32.xlu0 %v940, 80
  %v944 = vpop.permute.xlu0 %943
  %v946 = vmul.f32 %v939, %v944
  %948 = vrot.lane.b32.xlu0 %v946, 16
  %v949 = vpop.permute.xlu0 %948
  %v951 = vadd.f32 %v941, %v949
  %v952 = vtanh.pop %v951
  %954 = vrot.lane.b32.xlu0 %v952, 16
  %v955 = vpop.permute.xlu0 %954
  %v957 = vmul.f32 %v939, %v955
  %v958 = vld [vmem:[%s1] sm:$0xff]
  %v959 = vld [vmem:[%s1 + $0x38] sm:$0xff]
  %961 = vset.pattern.permute.xlu0 0
  %962 = vperm.xlu0 %961, %v958
  %v963 = vpop.permute.xlu0 %962
  %966 = vset.pattern.permute.xlu0 0
  %967 = vperm.xlu0 %966, %v959
  %v968 = vpop.permute.xlu0 %967
  %v970 = vsel %vm233, %v963, %v968
  %972 = vrot.lane.b32.xlu0 %v957, 96
  %v973 = vpop.permute.xlu0 %972
  %v975 = vmul.f32 %v970, %v973
  %v976 = vsub.f32 1.0, %v970
  %v977 = vmul.f32 %v976, 0.0
  %v978 = vadd.f32 %v975, %v977
  %980 = vrot.lane.b32.xlu0 %v951, 112
  %v981 = vpop.permute.xlu0 %980
  %v983 = vmul.f32 %v970, %v981
  %v984 = vadd.f32 %v983, %v977
  %v985 = vld [vmem:[#allocation2 + $0x8] sm:$0xff]
  %v986 = vld [vmem:[#allocation2 + $0x30] sm:$0xff]
  %v987 = vsel %vm167, %v985, %v986
  %v988 = vpack.c.bf16 %v978, %v978
  %v990 = vsel %vm175, %v988, 0
  %992 = vmatpush.bf16.msra.mxu0 0
  %993 = vmatpush.bf16.msra.mxu0 0
  %994 = vmatpush.bf16.msra.mxu0 0
  %995 = vmatpush.bf16.msra.mxu0 0
  %996 = vmatpush.bf16.msra.mxu0 0
  %997 = vmatpush.bf16.msra.mxu0 0
  %998 = vmatpush.bf16.msra.mxu0 0
  %999 = vmatpush.bf16.msra.mxu0 %v905
  %1000 = vmatmul.bf16.gmra.mxu0 %v990
  %v1001 = vpop.f32.mrf.mxu0
  %v1002 = vadd.f32 0.0, %v1001
  %v1003 = vpop.f32.mrf.mxu0
  %1004 = vdwg.mxu0
  %v1005 = vadd.f32 %v987, %v1002
  %v1006 = vxor.u32 %v1005, 2147483648
  %v1007 = vmul.f32 %v1006, 1.442695
  %v1008 = vpow.pop %v1007
  %v1009 = vadd.f32 %v1008, 1.0
  %v1010 = vrcp.pop %v1009
  %v1011 = vmul.f32 %v1009, %v1010
  %v1012 = vsub.f32 1.0, %v1011
  %v1013 = vmul.f32 %v1010, %v1012
  %v1014 = vadd.f32 %v1010, %v1013
  %vm1015 = vweird.f32 %v1009
  %vm1016 = vweird.f32 %v1010
  %vm1017 = vmor %vm1015, %vm1016
  %v1018 = vsel %vm1017, %v1010, %v1014
  %v1019 = vand.u32 2147483647, %v1009
  %vm1020 = vcmp.eq.f32.partialorder %v1019, 8.507059e+37
  %v1021 = vand.u32 %v1009, 2147483648
  %v1022 = vor.u32 1.1754944e-38, %v1021
  %v1023 = vsel %vm1020, %v1022, %v1018
  %v1024 = vmul.f32 1.0, %v1023
  %v1025 = vtanh.pop %v1005
  %1027 = vrot.lane.b32.xlu0 %v984, 16
  %v1028 = vpop.permute.xlu0 %1027
  %v1030 = vmul.f32 %v1024, %v1028
  %1032 = vrot.lane.b32.xlu0 %v1025, 80
  %v1033 = vpop.permute.xlu0 %1032
  %v1035 = vmul.f32 %v1024, %v1033
  %1037 = vrot.lane.b32.xlu0 %v1035, 16
  %v1038 = vpop.permute.xlu0 %1037
  %v1040 = vadd.f32 %v1030, %v1038
  %v1041 = vtanh.pop %v1040
  %1043 = vrot.lane.b32.xlu0 %v1041, 16
  %v1044 = vpop.permute.xlu0 %1043
  %v1046 = vmul.f32 %v1024, %v1044
  %v1047 = vld [vmem:[%s1 + $0x8] sm:$0xff]
  %v1048 = vld [vmem:[%s1 + $0x30] sm:$0xff]
  %1050 = vset.pattern.permute.xlu0 0
  %1051 = vperm.xlu0 %1050, %v1047
  %v1052 = vpop.permute.xlu0 %1051
  %1055 = vset.pattern.permute.xlu0 0
  %1056 = vperm.xlu0 %1055, %v1048
  %v1057 = vpop.permute.xlu0 %1056
  %v1059 = vsel %vm233, %v1052, %v1057
  %1061 = vrot.lane.b32.xlu0 %v1046, 96
  %v1062 = vpop.permute.xlu0 %1061
  %v1064 = vmul.f32 %v1059, %v1062
  %v1065 = vsub.f32 1.0, %v1059
  %v1066 = vmul.f32 %v1065, %v978
  %v1067 = vadd.f32 %v1064, %v1066
  %1069 = vrot.lane.b32.xlu0 %v1040, 112
  %v1070 = vpop.permute.xlu0 %1069
  %v1072 = vmul.f32 %v1059, %v1070
  %v1073 = vmul.f32 %v1065, %v984
  %v1074 = vadd.f32 %v1072, %v1073
  %v1075 = vld [vmem:[#allocation2 + $0x10] sm:$0xff]
  %v1076 = vld [vmem:[#allocation2 + $0x28] sm:$0xff]
  %v1077 = vsel %vm167, %v1075, %v1076
  %v1078 = vpack.c.bf16 %v1067, %v1067
  %v1080 = vsel %vm175, %v1078, 0
  %1082 = vmatpush.bf16.msra.mxu0 0
  %1083 = vmatpush.bf16.msra.mxu0 0
  %1084 = vmatpush.bf16.msra.mxu0 0
  %1085 = vmatpush.bf16.msra.mxu0 0
  %1086 = vmatpush.bf16.msra.mxu0 0
  %1087 = vmatpush.bf16.msra.mxu0 0
  %1088 = vmatpush.bf16.msra.mxu0 0
  %1089 = vmatpush.bf16.msra.mxu0 %v905
  %1090 = vmatmul.bf16.gmra.mxu0 %v1080
  %v1091 = vpop.f32.mrf.mxu0
  %v1092 = vadd.f32 0.0, %v1091
  %v1093 = vpop.f32.mrf.mxu0
  %1094 = vdwg.mxu0
  %v1095 = vadd.f32 %v1077, %v1092
  %v1096 = vxor.u32 %v1095, 2147483648
  %v1097 = vmul.f32 %v1096, 1.442695
  %v1098 = vpow.pop %v1097
  %v1099 = vadd.f32 %v1098, 1.0
  %v1100 = vrcp.pop %v1099
  %v1101 = vmul.f32 %v1099, %v1100
  %v1102 = vsub.f32 1.0, %v1101
  %v1103 = vmul.f32 %v1100, %v1102
  %v1104 = vadd.f32 %v1100, %v1103
  %vm1105 = vweird.f32 %v1099
  %vm1106 = vweird.f32 %v1100
  %vm1107 = vmor %vm1105, %vm1106
  %v1108 = vsel %vm1107, %v1100, %v1104
  %v1109 = vand.u32 2147483647, %v1099
  %vm1110 = vcmp.eq.f32.partialorder %v1109, 8.507059e+37
  %v1111 = vand.u32 %v1099, 2147483648
  %v1112 = vor.u32 1.1754944e-38, %v1111
  %v1113 = vsel %vm1110, %v1112, %v1108
  %v1114 = vmul.f32 1.0, %v1113
  %v1115 = vtanh.pop %v1095
  %1117 = vrot.lane.b32.xlu0 %v1074, 16
  %v1118 = vpop.permute.xlu0 %1117
  %v1120 = vmul.f32 %v1114, %v1118
  %1122 = vrot.lane.b32.xlu0 %v1115, 80
  %v1123 = vpop.permute.xlu0 %1122
  %v1125 = vmul.f32 %v1114, %v1123
  %1127 = vrot.lane.b32.xlu0 %v1125, 16
  %v1128 = vpop.permute.xlu0 %1127
  %v1130 = vadd.f32 %v1120, %v1128
  %v1131 = vtanh.pop %v1130
  %1133 = vrot.lane.b32.xlu0 %v1131, 16
  %v1134 = vpop.permute.xlu0 %1133
  %v1136 = vmul.f32 %v1114, %v1134
  %v1137 = vld [vmem:[%s1 + $0x10] sm:$0xff]
  %v1138 = vld [vmem:[%s1 + $0x28] sm:$0xff]
  %1140 = vset.pattern.permute.xlu0 0
  %1141 = vperm.xlu0 %1140, %v1137
  %v1142 = vpop.permute.xlu0 %1141
  %1145 = vset.pattern.permute.xlu0 0
  %1146 = vperm.xlu0 %1145, %v1138
  %v1147 = vpop.permute.xlu0 %1146
  %v1149 = vsel %vm233, %v1142, %v1147
  %1151 = vrot.lane.b32.xlu0 %v1136, 96
  %v1152 = vpop.permute.xlu0 %1151
  %v1154 = vmul.f32 %v1149, %v1152
  %v1155 = vsub.f32 1.0, %v1149
  %v1156 = vmul.f32 %v1155, %v1067
  %v1157 = vadd.f32 %v1154, %v1156
  %1159 = vrot.lane.b32.xlu0 %v1130, 112
  %v1160 = vpop.permute.xlu0 %1159
  %v1162 = vmul.f32 %v1149, %v1160
  %v1163 = vmul.f32 %v1155, %v1074
  %v1164 = vadd.f32 %v1162, %v1163
  %v1165 = vld [vmem:[#allocation2 + $0x18] sm:$0xff]
  %v1166 = vld [vmem:[#allocation2 + $0x20] sm:$0xff]
  %v1167 = vsel %vm167, %v1165, %v1166
  %v1168 = vpack.c.bf16 %v1157, %v1157
  %v1170 = vsel %vm175, %v1168, 0
  %1172 = vmatpush.bf16.msra.mxu0 0
  %1173 = vmatpush.bf16.msra.mxu0 0
  %1174 = vmatpush.bf16.msra.mxu0 0
  %1175 = vmatpush.bf16.msra.mxu0 0
  %1176 = vmatpush.bf16.msra.mxu0 0
  %1177 = vmatpush.bf16.msra.mxu0 0
  %1178 = vmatpush.bf16.msra.mxu0 0
  %1179 = vmatpush.bf16.msra.mxu0 %v905
  %1180 = vmatmul.bf16.gmra.mxu0 %v1170
  %v1181 = vpop.f32.mrf.mxu0
  %v1182 = vadd.f32 0.0, %v1181
  %v1183 = vpop.f32.mrf.mxu0
  %1184 = vdwg.mxu0
  %v1185 = vadd.f32 %v1167, %v1182
  %v1186 = vxor.u32 %v1185, 2147483648
  %v1187 = vmul.f32 %v1186, 1.442695
  %v1188 = vpow.pop %v1187
  %v1189 = vadd.f32 %v1188, 1.0
  %v1190 = vrcp.pop %v1189
  %v1191 = vmul.f32 %v1189, %v1190
  %v1192 = vsub.f32 1.0, %v1191
  %v1193 = vmul.f32 %v1190, %v1192
  %v1194 = vadd.f32 %v1190, %v1193
  %vm1195 = vweird.f32 %v1189
  %vm1196 = vweird.f32 %v1190
  %vm1197 = vmor %vm1195, %vm1196
  %v1198 = vsel %vm1197, %v1190, %v1194
  %v1199 = vand.u32 2147483647, %v1189
  %vm1200 = vcmp.eq.f32.partialorder %v1199, 8.507059e+37
  %v1201 = vand.u32 %v1189, 2147483648
  %v1202 = vor.u32 1.1754944e-38, %v1201
  %v1203 = vsel %vm1200, %v1202, %v1198
  %v1204 = vmul.f32 1.0, %v1203
  %v1205 = vtanh.pop %v1185
  %1207 = vrot.lane.b32.xlu0 %v1164, 16
  %v1208 = vpop.permute.xlu0 %1207
  %v1210 = vmul.f32 %v1204, %v1208
  %1212 = vrot.lane.b32.xlu0 %v1205, 80
  %v1213 = vpop.permute.xlu0 %1212
  %v1215 = vmul.f32 %v1204, %v1213
  %1217 = vrot.lane.b32.xlu0 %v1215, 16
  %v1218 = vpop.permute.xlu0 %1217
  %v1220 = vadd.f32 %v1210, %v1218
  %v1221 = vtanh.pop %v1220
  %1223 = vrot.lane.b32.xlu0 %v1221, 16
  %v1224 = vpop.permute.xlu0 %1223
  %v1226 = vmul.f32 %v1204, %v1224
  %v1227 = vld [vmem:[%s1 + $0x18] sm:$0xff]
  %v1228 = vld [vmem:[%s1 + $0x20] sm:$0xff]
  %1230 = vset.pattern.permute.xlu0 0
  %1231 = vperm.xlu0 %1230, %v1227
  %v1232 = vpop.permute.xlu0 %1231
  %1235 = vset.pattern.permute.xlu0 0
  %1236 = vperm.xlu0 %1235, %v1228
  %v1237 = vpop.permute.xlu0 %1236
  %v1239 = vsel %vm233, %v1232, %v1237
  %1241 = vrot.lane.b32.xlu0 %v1226, 96
  %v1242 = vpop.permute.xlu0 %1241
  %v1244 = vmul.f32 %v1239, %v1242
  %v1245 = vsub.f32 1.0, %v1239
  %v1246 = vmul.f32 %v1245, %v1157
  %v1247 = vadd.f32 %v1244, %v1246
  %1249 = vrot.lane.b32.xlu0 %v1220, 112
  %v1250 = vpop.permute.xlu0 %1249
  %v1252 = vmul.f32 %v1239, %v1250
  %v1253 = vmul.f32 %v1245, %v1164
  %v1254 = vadd.f32 %v1252, %v1253
  %v1255 = vsel %vm167, %v1166, %v1165
  %v1256 = vpack.c.bf16 %v1247, %v1247
  %v1258 = vsel %vm175, %v1256, 0
  %1260 = vmatpush.bf16.msra.mxu0 0
  %1261 = vmatpush.bf16.msra.mxu0 0
  %1262 = vmatpush.bf16.msra.mxu0 0
  %1263 = vmatpush.bf16.msra.mxu0 0
  %1264 = vmatpush.bf16.msra.mxu0 0
  %1265 = vmatpush.bf16.msra.mxu0 0
  %1266 = vmatpush.bf16.msra.mxu0 0
  %1267 = vmatpush.bf16.msra.mxu0 %v905
  %1268 = vmatmul.bf16.gmra.mxu0 %v1258
  %v1269 = vpop.f32.mrf.mxu0
  %v1270 = vadd.f32 0.0, %v1269
  %v1271 = vpop.f32.mrf.mxu0
  %1272 = vdwg.mxu0
  %v1273 = vadd.f32 %v1255, %v1270
  %v1274 = vxor.u32 %v1273, 2147483648
  %v1275 = vmul.f32 %v1274, 1.442695
  %v1276 = vpow.pop %v1275
  %v1277 = vadd.f32 %v1276, 1.0
  %v1278 = vrcp.pop %v1277
  %v1279 = vmul.f32 %v1277, %v1278
  %v1280 = vsub.f32 1.0, %v1279
  %v1281 = vmul.f32 %v1278, %v1280
  %v1282 = vadd.f32 %v1278, %v1281
  %vm1283 = vweird.f32 %v1277
  %vm1284 = vweird.f32 %v1278
  %vm1285 = vmor %vm1283, %vm1284
  %v1286 = vsel %vm1285, %v1278, %v1282
  %v1287 = vand.u32 2147483647, %v1277
  %vm1288 = vcmp.eq.f32.partialorder %v1287, 8.507059e+37
  %v1289 = vand.u32 %v1277, 2147483648
  %v1290 = vor.u32 1.1754944e-38, %v1289
  %v1291 = vsel %vm1288, %v1290, %v1286
  %v1292 = vmul.f32 1.0, %v1291
  %v1293 = vtanh.pop %v1273
  %1295 = vrot.lane.b32.xlu0 %v1254, 16
  %v1296 = vpop.permute.xlu0 %1295
  %v1298 = vmul.f32 %v1292, %v1296
  %1300 = vrot.lane.b32.xlu0 %v1293, 80
  %v1301 = vpop.permute.xlu0 %1300
  %v1303 = vmul.f32 %v1292, %v1301
  %1305 = vrot.lane.b32.xlu0 %v1303, 16
  %v1306 = vpop.permute.xlu0 %1305
  %v1308 = vadd.f32 %v1298, %v1306
  %v1309 = vtanh.pop %v1308
  %1311 = vrot.lane.b32.xlu0 %v1309, 16
  %v1312 = vpop.permute.xlu0 %1311
  %v1314 = vmul.f32 %v1292, %v1312
  %v1315 = vsel %vm233, %v1237, %v1232
  %1317 = vrot.lane.b32.xlu0 %v1314, 96
  %v1318 = vpop.permute.xlu0 %1317
  %v1320 = vmul.f32 %v1315, %v1318
  %v1321 = vsub.f32 1.0, %v1315
  %v1322 = vmul.f32 %v1321, %v1247
  %v1323 = vadd.f32 %v1320, %v1322
  %1325 = vrot.lane.b32.xlu0 %v1308, 112
  %v1326 = vpop.permute.xlu0 %1325
  %v1328 = vmul.f32 %v1315, %v1326
  %v1329 = vmul.f32 %v1321, %v1254
  %v1330 = vadd.f32 %v1328, %v1329
  %v1331 = vsel %vm167, %v1076, %v1075
  %v1332 = vpack.c.bf16 %v1323, %v1323
  %v1334 = vsel %vm175, %v1332, 0
  %1336 = vmatpush.bf16.msra.mxu0 0
  %1337 = vmatpush.bf16.msra.mxu0 0
  %1338 = vmatpush.bf16.msra.mxu0 0
  %1339 = vmatpush.bf16.msra.mxu0 0
  %1340 = vmatpush.bf16.msra.mxu0 0
  %1341 = vmatpush.bf16.msra.mxu0 0
  %1342 = vmatpush.bf16.msra.mxu0 0
  %1343 = vmatpush.bf16.msra.mxu0 %v905
  %1344 = vmatmul.bf16.gmra.mxu0 %v1334
  %v1345 = vpop.f32.mrf.mxu0
  %v1346 = vadd.f32 0.0, %v1345
  %v1347 = vpop.f32.mrf.mxu0
  %1348 = vdwg.mxu0
  %v1349 = vadd.f32 %v1331, %v1346
  %v1350 = vxor.u32 %v1349, 2147483648
  %v1351 = vmul.f32 %v1350, 1.442695
  %v1352 = vpow.pop %v1351
  %v1353 = vadd.f32 %v1352, 1.0
  %v1354 = vrcp.pop %v1353
  %v1355 = vmul.f32 %v1353, %v1354
  %v1356 = vsub.f32 1.0, %v1355
  %v1357 = vmul.f32 %v1354, %v1356
  %v1358 = vadd.f32 %v1354, %v1357
  %vm1359 = vweird.f32 %v1353
  %vm1360 = vweird.f32 %v1354
  %vm1361 = vmor %vm1359, %vm1360
  %v1362 = vsel %vm1361, %v1354, %v1358
  %v1363 = vand.u32 2147483647, %v1353
  %vm1364 = vcmp.eq.f32.partialorder %v1363, 8.507059e+37
  %v1365 = vand.u32 %v1353, 2147483648
  %v1366 = vor.u32 1.1754944e-38, %v1365
  %v1367 = vsel %vm1364, %v1366, %v1362
  %v1368 = vmul.f32 1.0, %v1367
  %v1369 = vtanh.pop %v1349
  %1371 = vrot.lane.b32.xlu0 %v1330, 16
  %v1372 = vpop.permute.xlu0 %1371
  %v1374 = vmul.f32 %v1368, %v1372
  %1376 = vrot.lane.b32.xlu0 %v1369, 80
  %v1377 = vpop.permute.xlu0 %1376
  %v1379 = vmul.f32 %v1368, %v1377
  %1381 = vrot.lane.b32.xlu0 %v1379, 16
  %v1382 = vpop.permute.xlu0 %1381
  %v1384 = vadd.f32 %v1374, %v1382
  %v1385 = vtanh.pop %v1384
  %1387 = vrot.lane.b32.xlu0 %v1385, 16
  %v1388 = vpop.permute.xlu0 %1387
  %v1390 = vmul.f32 %v1368, %v1388
  %v1391 = vsel %vm233, %v1147, %v1142
  %1393 = vrot.lane.b32.xlu0 %v1390, 96
  %v1394 = vpop.permute.xlu0 %1393
  %v1396 = vmul.f32 %v1391, %v1394
  %v1397 = vsub.f32 1.0, %v1391
  %v1398 = vmul.f32 %v1397, %v1323
  %v1399 = vadd.f32 %v1396, %v1398
  %1401 = vrot.lane.b32.xlu0 %v1384, 112
  %v1402 = vpop.permute.xlu0 %1401
  %v1404 = vmul.f32 %v1391, %v1402
  %v1405 = vmul.f32 %v1397, %v1330
  %v1406 = vadd.f32 %v1404, %v1405
  %v1407 = vsel %vm167, %v986, %v985
  %v1408 = vpack.c.bf16 %v1399, %v1399
  %v1410 = vsel %vm175, %v1408, 0
  %1412 = vmatpush.bf16.msra.mxu0 0
  %1413 = vmatpush.bf16.msra.mxu0 0
  %1414 = vmatpush.bf16.msra.mxu0 0
  %1415 = vmatpush.bf16.msra.mxu0 0
  %1416 = vmatpush.bf16.msra.mxu0 0
  %1417 = vmatpush.bf16.msra.mxu0 0
  %1418 = vmatpush.bf16.msra.mxu0 0
  %1419 = vmatpush.bf16.msra.mxu0 %v905
  %1420 = vmatmul.bf16.gmra.mxu0 %v1410
  %v1421 = vpop.f32.mrf.mxu0
  %v1422 = vadd.f32 0.0, %v1421
  %v1423 = vpop.f32.mrf.mxu0
  %1424 = vdwg.mxu0
  %v1425 = vadd.f32 %v1407, %v1422
  %v1426 = vxor.u32 %v1425, 2147483648
  %v1427 = vmul.f32 %v1426, 1.442695
  %v1428 = vpow.pop %v1427
  %v1429 = vadd.f32 %v1428, 1.0
  %v1430 = vrcp.pop %v1429
  %v1431 = vmul.f32 %v1429, %v1430
  %v1432 = vsub.f32 1.0, %v1431
  %v1433 = vmul.f32 %v1430, %v1432
  %v1434 = vadd.f32 %v1430, %v1433
  %vm1435 = vweird.f32 %v1429
  %vm1436 = vweird.f32 %v1430
  %vm1437 = vmor %vm1435, %vm1436
  %v1438 = vsel %vm1437, %v1430, %v1434
  %v1439 = vand.u32 2147483647, %v1429
  %vm1440 = vcmp.eq.f32.partialorder %v1439, 8.507059e+37
  %v1441 = vand.u32 %v1429, 2147483648
  %v1442 = vor.u32 1.1754944e-38, %v1441
  %v1443 = vsel %vm1440, %v1442, %v1438
  %v1444 = vmul.f32 1.0, %v1443
  %v1445 = vtanh.pop %v1425
  %1447 = vrot.lane.b32.xlu0 %v1406, 16
  %v1448 = vpop.permute.xlu0 %1447
  %v1450 = vmul.f32 %v1444, %v1448
  %1452 = vrot.lane.b32.xlu0 %v1445, 80
  %v1453 = vpop.permute.xlu0 %1452
  %v1455 = vmul.f32 %v1444, %v1453
  %1457 = vrot.lane.b32.xlu0 %v1455, 16
  %v1458 = vpop.permute.xlu0 %1457
  %v1460 = vadd.f32 %v1450, %v1458
  %v1461 = vtanh.pop %v1460
  %1463 = vrot.lane.b32.xlu0 %v1461, 16
  %v1464 = vpop.permute.xlu0 %1463
  %v1466 = vmul.f32 %v1444, %v1464
  %v1467 = vsel %vm233, %v1057, %v1052
  %1469 = vrot.lane.b32.xlu0 %v1466, 96
  %v1470 = vpop.permute.xlu0 %1469
  %v1472 = vmul.f32 %v1467, %v1470
  %v1473 = vsub.f32 1.0, %v1467
  %v1474 = vmul.f32 %v1473, %v1399
  %v1475 = vadd.f32 %v1472, %v1474
  %1477 = vrot.lane.b32.xlu0 %v1460, 112
  %v1478 = vpop.permute.xlu0 %1477
  %v1480 = vmul.f32 %v1467, %v1478
  %v1481 = vmul.f32 %v1473, %v1406
  %v1482 = vadd.f32 %v1480, %v1481
  %v1483 = vsel %vm167, %v899, %v898
  %v1484 = vpack.c.bf16 %v1475, %v1475
  %v1486 = vsel %vm175, %v1484, 0
  %1488 = vmatpush.bf16.msra.mxu0 0
  %1489 = vmatpush.bf16.msra.mxu0 0
  %1490 = vmatpush.bf16.msra.mxu0 0
  %1491 = vmatpush.bf16.msra.mxu0 0
  %1492 = vmatpush.bf16.msra.mxu0 0
  %1493 = vmatpush.bf16.msra.mxu0 0
  %1494 = vmatpush.bf16.msra.mxu0 0
  %1495 = vmatpush.bf16.msra.mxu0 %v905
  %1496 = vmatmul.bf16.gmra.mxu0 %v1486
  %v1497 = vpop.f32.mrf.mxu0
  %v1498 = vadd.f32 0.0, %v1497
  %v1499 = vpop.f32.mrf.mxu0
  %1500 = vdwg.mxu0
  %v1501 = vadd.f32 %v1483, %v1498
  %v1502 = vxor.u32 %v1501, 2147483648
  %v1503 = vmul.f32 %v1502, 1.442695
  %v1504 = vpow.pop %v1503
  %v1505 = vadd.f32 %v1504, 1.0
  %v1506 = vrcp.pop %v1505
  %v1507 = vmul.f32 %v1505, %v1506
  %v1508 = vsub.f32 1.0, %v1507
  %v1509 = vmul.f32 %v1506, %v1508
  %v1510 = vadd.f32 %v1506, %v1509
  %vm1511 = vweird.f32 %v1505
  %vm1512 = vweird.f32 %v1506
  %vm1513 = vmor %vm1511, %vm1512
  %v1514 = vsel %vm1513, %v1506, %v1510
  %v1515 = vand.u32 2147483647, %v1505
  %vm1516 = vcmp.eq.f32.partialorder %v1515, 8.507059e+37
  %v1517 = vand.u32 %v1505, 2147483648
  %v1518 = vor.u32 1.1754944e-38, %v1517
  %v1519 = vsel %vm1516, %v1518, %v1514
  %v1520 = vmul.f32 1.0, %v1519
  %v1521 = vtanh.pop %v1501
  %1523 = vrot.lane.b32.xlu0 %v1482, 16
  %v1524 = vpop.permute.xlu0 %1523
  %v1526 = vmul.f32 %v1520, %v1524
  %1528 = vrot.lane.b32.xlu0 %v1521, 80
  %v1529 = vpop.permute.xlu0 %1528
  %v1531 = vmul.f32 %v1520, %v1529
  %1533 = vrot.lane.b32.xlu0 %v1531, 16
  %v1534 = vpop.permute.xlu0 %1533
  %v1536 = vadd.f32 %v1526, %v1534
  %v1537 = vtanh.pop %v1536
  %1539 = vrot.lane.b32.xlu0 %v1537, 16
  %v1540 = vpop.permute.xlu0 %1539
  %v1542 = vmul.f32 %v1520, %v1540
  %v1543 = vsel %vm233, %v968, %v963
  %1545 = vrot.lane.b32.xlu0 %v1542, 96
  %v1546 = vpop.permute.xlu0 %1545
  %v1548 = vmul.f32 %v1543, %v1546
  %v1549 = vld [vmem:[%s8] sm:$0xf]
  %v1550 = vld [vmem:[%s8 + $0x4] sm:$0xf]
  %v1551 = vld [vmem:[%s9] sm:$0x1]
  %v1552 = vsel %vm233, %v975, %v1548
  %v1553 = vpack.c.bf16 %v1552, %v1552
  %v1555 = vperm.slane %v1551, 0
  %v1559 = vunpack.c.l.b16 %v1549
  %v1560 = vunpack.c.l.b16 %v1550
  %v1561 = vpack.c.b16 %v1560, %v1559
  %v1564 = vsel %vm175, %v1553, 0
  %1566 = vmatpush.bf16.msra.mxu0 0
  %1567 = vmatpush.bf16.msra.mxu0 0
  %1568 = vmatpush.bf16.msra.mxu0 0
  %1569 = vmatpush.bf16.msra.mxu0 0
  %1570 = vmatpush.bf16.msra.mxu0 0
  %1571 = vmatpush.bf16.msra.mxu0 0
  %1572 = vmatpush.bf16.msra.mxu0 0
  %1573 = vmatpush.bf16.msra.mxu0 %v1561
  %1574 = vmatmul.bf16.gmra.mxu0 %v1564
  %v1575 = vpop.f32.mrf.mxu0
  %v1576 = vadd.f32 %v1555, %v1575
  %v1577 = vpop.f32.mrf.mxu0
  %1578 = vdwg.mxu0
  %vm1579 = vcmask 64512
  %v1580 = vsel %vm1579, %v1576, -inf
  %1581 = vmax.xlane.f32.xlu0 %v1580
  %v1582 = vpop.xlane.xlu0 %1581
  %v1583 = vsub.f32 %v1576, %v1582
  %v1584 = vmul.f32 %v1583, 1.442695
  %v1585 = vpow.pop %v1584
  %v1586 = vsel %vm1579, %v1585, 0.0
  %1587 = vadd.xlane.f32.xlu0 %v1586
  %v1588 = vpop.xlane.xlu0 %1587
  %v1589 = vrcp.pop %v1588
  %v1590 = vmul.f32 %v1585, %v1589
  %v1591 = vsel %vm233, %v1064, %v1472
  %v1592 = vpack.c.bf16 %v1591, %v1591
  %v1594 = vsel %vm175, %v1592, 0
  %1596 = vmatpush.bf16.msra.mxu0 0
  %1597 = vmatpush.bf16.msra.mxu0 0
  %1598 = vmatpush.bf16.msra.mxu0 0
  %1599 = vmatpush.bf16.msra.mxu0 0
  %1600 = vmatpush.bf16.msra.mxu0 0
  %1601 = vmatpush.bf16.msra.mxu0 0
  %1602 = vmatpush.bf16.msra.mxu0 0
  %1603 = vmatpush.bf16.msra.mxu0 %v1561
  %1604 = vmatmul.bf16.gmra.mxu0 %v1594
  %v1605 = vpop.f32.mrf.mxu0
  %v1606 = vadd.f32 %v1555, %v1605
  %v1607 = vpop.f32.mrf.mxu0
  %1608 = vdwg.mxu0
  %v1609 = vsel %vm1579, %v1606, -inf
  %1610 = vmax.xlane.f32.xlu0 %v1609
  %v1611 = vpop.xlane.xlu0 %1610
  %v1612 = vsub.f32 %v1606, %v1611
  %v1613 = vmul.f32 %v1612, 1.442695
  %v1614 = vpow.pop %v1613
  %v1615 = vsel %vm1579, %v1614, 0.0
  %1616 = vadd.xlane.f32.xlu0 %v1615
  %v1617 = vpop.xlane.xlu0 %1616
  %v1618 = vrcp.pop %v1617
  %v1619 = vmul.f32 %v1614, %v1618
  %v1620 = vsel %vm233, %v1154, %v1396
  %v1621 = vpack.c.bf16 %v1620, %v1620
  %v1623 = vsel %vm175, %v1621, 0
  %1625 = vmatpush.bf16.msra.mxu0 0
  %1626 = vmatpush.bf16.msra.mxu0 0
  %1627 = vmatpush.bf16.msra.mxu0 0
  %1628 = vmatpush.bf16.msra.mxu0 0
  %1629 = vmatpush.bf16.msra.mxu0 0
  %1630 = vmatpush.bf16.msra.mxu0 0
  %1631 = vmatpush.bf16.msra.mxu0 0
  %1632 = vmatpush.bf16.msra.mxu0 %v1561
  %1633 = vmatmul.bf16.gmra.mxu0 %v1623
  %v1634 = vpop.f32.mrf.mxu0
  %v1635 = vadd.f32 %v1555, %v1634
  %v1636 = vpop.f32.mrf.mxu0
  %1637 = vdwg.mxu0
  %v1638 = vsel %vm1579, %v1635, -inf
  %1639 = vmax.xlane.f32.xlu0 %v1638
  %v1640 = vpop.xlane.xlu0 %1639
  %v1641 = vsub.f32 %v1635, %v1640
  %v1642 = vmul.f32 %v1641, 1.442695
  %v1643 = vpow.pop %v1642
  %v1644 = vsel %vm1579, %v1643, 0.0
  %1645 = vadd.xlane.f32.xlu0 %v1644
  %v1646 = vpop.xlane.xlu0 %1645
  %v1647 = vrcp.pop %v1646
  %v1648 = vmul.f32 %v1643, %v1647
  %v1649 = vsel %vm233, %v1244, %v1320
  %v1650 = vpack.c.bf16 %v1649, %v1649
  %v1652 = vsel %vm175, %v1650, 0
  %1654 = vmatpush.bf16.msra.mxu0 0
  %1655 = vmatpush.bf16.msra.mxu0 0
  %1656 = vmatpush.bf16.msra.mxu0 0
  %1657 = vmatpush.bf16.msra.mxu0 0
  %1658 = vmatpush.bf16.msra.mxu0 0
  %1659 = vmatpush.bf16.msra.mxu0 0
  %1660 = vmatpush.bf16.msra.mxu0 0
  %1661 = vmatpush.bf16.msra.mxu0 %v1561
  %1662 = vmatmul.bf16.gmra.mxu0 %v1652
  %v1663 = vpop.f32.mrf.mxu0
  %v1664 = vadd.f32 %v1555, %v1663
  %v1665 = vpop.f32.mrf.mxu0
  %1666 = vdwg.mxu0
  %v1667 = vsel %vm1579, %v1664, -inf
  %1668 = vmax.xlane.f32.xlu0 %v1667
  %v1669 = vpop.xlane.xlu0 %1668
  %v1670 = vsub.f32 %v1664, %v1669
  %v1671 = vmul.f32 %v1670, 1.442695
  %v1672 = vpow.pop %v1671
  %v1673 = vsel %vm1579, %v1672, 0.0
  %1674 = vadd.xlane.f32.xlu0 %v1673
  %v1675 = vpop.xlane.xlu0 %1674
  %v1676 = vrcp.pop %v1675
  %v1677 = vmul.f32 %v1672, %v1676
  %v1678 = vsel %vm233, %v1320, %v1244
  %v1679 = vpack.c.bf16 %v1678, %v1678
  %v1681 = vsel %vm175, %v1679, 0
  %1683 = vmatpush.bf16.msra.mxu0 0
  %1684 = vmatpush.bf16.msra.mxu0 0
  %1685 = vmatpush.bf16.msra.mxu0 0
  %1686 = vmatpush.bf16.msra.mxu0 0
  %1687 = vmatpush.bf16.msra.mxu0 0
  %1688 = vmatpush.bf16.msra.mxu0 0
  %1689 = vmatpush.bf16.msra.mxu0 0
  %1690 = vmatpush.bf16.msra.mxu0 %v1561
  %1691 = vmatmul.bf16.gmra.mxu0 %v1681
  %v1692 = vpop.f32.mrf.mxu0
  %v1693 = vadd.f32 %v1555, %v1692
  %v1694 = vpop.f32.mrf.mxu0
  %1695 = vdwg.mxu0
  %v1696 = vsel %vm1579, %v1693, -inf
  %1697 = vmax.xlane.f32.xlu0 %v1696
  %v1698 = vpop.xlane.xlu0 %1697
  %v1699 = vsub.f32 %v1693, %v1698
  %v1700 = vmul.f32 %v1699, 1.442695
  %v1701 = vpow.pop %v1700
  %v1702 = vsel %vm1579, %v1701, 0.0
  %1703 = vadd.xlane.f32.xlu0 %v1702
  %v1704 = vpop.xlane.xlu0 %1703
  %v1705 = vrcp.pop %v1704
  %v1706 = vmul.f32 %v1701, %v1705
  %v1707 = vsel %vm233, %v1396, %v1154
  %v1708 = vpack.c.bf16 %v1707, %v1707
  %v1710 = vsel %vm175, %v1708, 0
  %1712 = vmatpush.bf16.msra.mxu0 0
  %1713 = vmatpush.bf16.msra.mxu0 0
  %1714 = vmatpush.bf16.msra.mxu0 0
  %1715 = vmatpush.bf16.msra.mxu0 0
  %1716 = vmatpush.bf16.msra.mxu0 0
  %1717 = vmatpush.bf16.msra.mxu0 0
  %1718 = vmatpush.bf16.msra.mxu0 0
  %1719 = vmatpush.bf16.msra.mxu0 %v1561
  %1720 = vmatmul.bf16.gmra.mxu0 %v1710
  %v1721 = vpop.f32.mrf.mxu0
  %v1722 = vadd.f32 %v1555, %v1721
  %v1723 = vpop.f32.mrf.mxu0
  %1724 = vdwg.mxu0
  %v1725 = vsel %vm1579, %v1722, -inf
  %1726 = vmax.xlane.f32.xlu0 %v1725
  %v1727 = vpop.xlane.xlu0 %1726
  %v1728 = vsub.f32 %v1722, %v1727
  %v1729 = vmul.f32 %v1728, 1.442695
  %v1730 = vpow.pop %v1729
  %v1731 = vsel %vm1579, %v1730, 0.0
  %1732 = vadd.xlane.f32.xlu0 %v1731
  %v1733 = vpop.xlane.xlu0 %1732
  %v1734 = vrcp.pop %v1733
  %v1735 = vmul.f32 %v1730, %v1734
  %v1736 = vsel %vm233, %v1472, %v1064
  %v1737 = vpack.c.bf16 %v1736, %v1736
  %v1739 = vsel %vm175, %v1737, 0
  %1741 = vmatpush.bf16.msra.mxu0 0
  %1742 = vmatpush.bf16.msra.mxu0 0
  %1743 = vmatpush.bf16.msra.mxu0 0
  %1744 = vmatpush.bf16.msra.mxu0 0
  %1745 = vmatpush.bf16.msra.mxu0 0
  %1746 = vmatpush.bf16.msra.mxu0 0
  %1747 = vmatpush.bf16.msra.mxu0 0
  %1748 = vmatpush.bf16.msra.mxu0 %v1561
  %1749 = vmatmul.bf16.gmra.mxu0 %v1739
  %v1750 = vpop.f32.mrf.mxu0
  %v1751 = vadd.f32 %v1555, %v1750
  %v1752 = vpop.f32.mrf.mxu0
  %1753 = vdwg.mxu0
  %v1754 = vsel %vm1579, %v1751, -inf
  %1755 = vmax.xlane.f32.xlu0 %v1754
  %v1756 = vpop.xlane.xlu0 %1755
  %v1757 = vsub.f32 %v1751, %v1756
  %v1758 = vmul.f32 %v1757, 1.442695
  %v1759 = vpow.pop %v1758
  %v1760 = vsel %vm1579, %v1759, 0.0
  %1761 = vadd.xlane.f32.xlu0 %v1760
  %v1762 = vpop.xlane.xlu0 %1761
  %v1763 = vrcp.pop %v1762
  %v1764 = vmul.f32 %v1759, %v1763
  %v1765 = vsel %vm233, %v1548, %v975
  %v1766 = vpack.c.bf16 %v1765, %v1765
  %v1768 = vsel %vm175, %v1766, 0
  %1770 = vmatpush.bf16.msra.mxu0 0
  %1771 = vmatpush.bf16.msra.mxu0 0
  %1772 = vmatpush.bf16.msra.mxu0 0
  %1773 = vmatpush.bf16.msra.mxu0 0
  %1774 = vmatpush.bf16.msra.mxu0 0
  %1775 = vmatpush.bf16.msra.mxu0 0
  %1776 = vmatpush.bf16.msra.mxu0 0
  %1777 = vmatpush.bf16.msra.mxu0 %v1561
  %1778 = vmatmul.bf16.gmra.mxu0 %v1768
  %v1779 = vpop.f32.mrf.mxu0
  %v1780 = vadd.f32 %v1555, %v1779
  %v1781 = vpop.f32.mrf.mxu0
  %1782 = vdwg.mxu0
  %v1783 = vsel %vm1579, %v1780, -inf
  %1784 = vmax.xlane.f32.xlu0 %v1783
  %v1785 = vpop.xlane.xlu0 %1784
  %v1786 = vsub.f32 %v1780, %v1785
  %v1787 = vmul.f32 %v1786, 1.442695
  %v1788 = vpow.pop %v1787
  %v1789 = vsel %vm1579, %v1788, 0.0
  %1790 = vadd.xlane.f32.xlu0 %v1789
  %v1791 = vpop.xlane.xlu0 %1790
  %v1792 = vrcp.pop %v1791
  %v1793 = vmul.f32 %v1788, %v1792
  %1795 = vrot.lane.b32.xlu0 %v1590, 8
  %v1796 = vpop.permute.xlu0 %1795
  %1799 = vrot.lane.b32.xlu0 %v1606, 16
  %v1800 = vpop.permute.xlu0 %1799
  %1803 = vrot.lane.b32.xlu0 %v1619, 24
  %v1804 = vpop.permute.xlu0 %1803
  %1807 = vrot.lane.b32.xlu0 %v1635, 32
  %v1808 = vpop.permute.xlu0 %1807
  %1811 = vrot.lane.b32.xlu0 %v1648, 40
  %v1812 = vpop.permute.xlu0 %1811
  %1815 = vrot.lane.b32.xlu0 %v1664, 48
  %v1816 = vpop.permute.xlu0 %1815
  %1819 = vrot.lane.b32.xlu0 %v1677, 56
  %v1820 = vpop.permute.xlu0 %1819
  %1823 = vrot.lane.b32.xlu0 %v1693, 64
  %v1824 = vpop.permute.xlu0 %1823
  %1827 = vrot.lane.b32.xlu0 %v1706, 72
  %v1828 = vpop.permute.xlu0 %1827
  %1831 = vrot.lane.b32.xlu0 %v1722, 80
  %v1832 = vpop.permute.xlu0 %1831
  %1835 = vrot.lane.b32.xlu0 %v1735, 88
  %v1836 = vpop.permute.xlu0 %1835
  %1839 = vrot.lane.b32.xlu0 %v1751, 96
  %v1840 = vpop.permute.xlu0 %1839
  %1843 = vrot.lane.b32.xlu0 %v1764, 104
  %v1844 = vpop.permute.xlu0 %1843
  %1847 = vrot.lane.b32.xlu0 %v1780, 112
  %v1848 = vpop.permute.xlu0 %1847
  %1851 = vrot.lane.b32.xlu0 %v1793, 120
  %v1852 = vpop.permute.xlu0 %1851
  %v1854 = vsel %vm1579, %v1576, %v1796
  %v1855 = vsel %vm175, %v1854, %v1800
  %vm1856 = vcmask 195584
  %v1857 = vsel %vm1856, %v1855, %v1804
  %vm1858 = vcmask 261120
  %v1859 = vsel %vm1858, %v1857, %v1808
  %vm1860 = vcmask 326656
  %v1861 = vsel %vm1860, %v1859, %v1812
  %vm1862 = vcmask 392192
  %v1863 = vsel %vm1862, %v1861, %v1816
  %vm1864 = vcmask 457728
  %v1865 = vsel %vm1864, %v1863, %v1820
  %v1866 = vsel %vm153, %v1865, %v1824
  %vm1867 = vcmask 588800
  %v1868 = vsel %vm1867, %v1866, %v1828
  %vm1869 = vcmask 654336
  %v1870 = vsel %vm1869, %v1868, %v1832
  %vm1871 = vcmask 719872
  %v1872 = vsel %vm1871, %v1870, %v1836
  %vm1873 = vcmask 785408
  %v1874 = vsel %vm1873, %v1872, %v1840
  %vm1875 = vcmask 850944
  %v1876 = vsel %vm1875, %v1874, %v1844
  %vm1877 = vcmask 916480
  %v1878 = vsel %vm1877, %v1876, %v1848
  %vm1879 = vcmask 982016
  %v1880 = vsel %vm1879, %v1878, %v1852
  %1881 = vst [vmem:[%s10] sm:$0xff] %v1880
  // Predicated region
  $region42: #{forward_device.1} parent=0 // pred_check
    _
  $region43: #{forward_device.1} parent=0 // pred_check_branch
    %1883 = sbr.rel (0) target = $region45
  $region44: #{forward_device.1} parent=0 // pred_region
    _
  $region45: #{forward_device.1} parent=0 // pred_fallthru
    _
  // Predicated region
  $region46: #{forward_device.1} parent=0 // pred_check
    _
  $region47: #{forward_device.1} parent=0 // pred_check_branch
    %1885 = sbr.rel (0) target = $region49
  $region48: #{forward_device.1} parent=0 // pred_region
    _
  $region49: #{forward_device.1} parent=0 // pred_fallthru
    _

</llo_original>
